<compile_context>
chip_gen: v6e
topology: v6e:2x2x1
jax: 0.10.0
libtpu: 0.0.40
codegen_flags: <defaults>
</compile_context>

<pallas_src>
import math
import functools

import numpy as np
import jax
import jax.numpy as jnp
from jax.experimental import pallas as pl
from jax.experimental.pallas import tpu as pltpu

LN_EPS = 1e-5


# --------------------------------------------------------------------------- #
# Kernel
# --------------------------------------------------------------------------- #
def _encoder_kernel(x_ref, g1_ref, b1_ref, win_t_ref, bin_ref,
                    wo_t_ref, bo_ref, w1_t_ref, bm1_ref, w2_t_ref, bm2_ref,
                    o_ref, *, num_heads, approx_recip, mlp_chunks):
    tb, S, E = x_ref.shape
    H = num_heads
    dh = E // H
    M = tb * S
    cdt = win_t_ref.dtype            # matmul operand dtype (bf16 fast path or f32)

    xb = x_ref[...].astype(jnp.float32).reshape(M, E)

    # ---- LayerNorm1 (f32, VPU) ----------------------------------------------
    mean = jnp.mean(xb, axis=-1, keepdims=True)
    var = jnp.mean((xb - mean) ** 2, axis=-1, keepdims=True)
    xn = ((xb - mean) * jax.lax.rsqrt(var + LN_EPS)) * g1_ref[...] + b1_ref[...]

    # ---- QKV projection: one (M, E) x (E, 3E) GEMM --------------------------
    # 1/sqrt(dh) is folded into the Q columns / Q bias at trace time (free).
    qkv = jnp.dot(xn.astype(cdt), win_t_ref[...],
                  preferred_element_type=jnp.float32) + bin_ref[...]

    # ---- Head-batched self-attention -----------------------------------------
    # TODO(synk): replace the reshape+transpose head split/merge with
    # pltpu.einshape (lane-aware relayout); dh < 128 makes these cross-lane copies.
    def split_heads(t):              # (M, E) -> (tb*H, S, dh)
        return t.reshape(tb, S, H, dh).transpose(0, 2, 1, 3).reshape(tb * H, S, dh)

    q = split_heads(qkv[:, :E].astype(cdt))
    k = split_heads(qkv[:, E:2 * E].astype(cdt))
    v = split_heads(qkv[:, 2 * E:].astype(cdt))

    s = jnp.einsum("bqd,bkd->bqk", q, k,
                   preferred_element_type=jnp.float32)          # (tb*H, S, S)
    s = s - jnp.max(s, axis=-1, keepdims=True)
    p = jnp.exp(s)
    p = p * pl.reciprocal(jnp.sum(p, axis=-1, keepdims=True), approx=approx_recip)
    # attention dropout (p=0.1) is identity in eval mode

    ctx = jnp.einsum("bqk,bkd->bqd", p.astype(cdt), v,
                     preferred_element_type=jnp.float32)        # (tb*H, S, dh)
    ctx = ctx.reshape(tb, H, S, dh).transpose(0, 2, 1, 3).reshape(M, E)

    # out-proj + bias + residual fused in one expression (fewer f32 temporaries)
    x1 = xb + bo_ref[...] + jnp.dot(ctx.astype(cdt), wo_t_ref[...],
                                    preferred_element_type=jnp.float32)

    # LayerNorm2 output is discarded by the reference forward -> skipped.

    # ---- MLP: Linear -> ReLU -> Linear, tiled over the intermediate dim ------
    # Weight chunks live along a leading axis: w1_t (C, E, ck), w2_t (C, ck, E),
    # bm1 (C, 1, ck) -> dynamic indexing only on the leading (untiled) dim.
    x1c = x1.astype(cdt)

    def mlp_chunk(c, acc):
        h1 = jnp.maximum(jnp.dot(x1c, w1_t_ref[c],
                                 preferred_element_type=jnp.float32) + bm1_ref[c],
                         0.0)
        return acc + jnp.dot(h1.astype(cdt), w2_t_ref[c],
                             preferred_element_type=jnp.float32)

    y = jax.lax.fori_loop(0, mlp_chunks, mlp_chunk, x1 + bm2_ref[...])
    # (final dropout is identity in eval mode)

    o_ref[...] = y.reshape(tb, S, E).astype(o_ref.dtype)


# --------------------------------------------------------------------------- #
# Sizing heuristics
# --------------------------------------------------------------------------- #
def _pick_mlp_chunk(I, target):
    """Largest divisor of I that is <= target, preferring multiples of 128."""
    target = max(1, int(target))
    divs = [d for d in range(1, I + 1) if I % d == 0 and d <= target]
    if not divs:
        return I
    lane = [d for d in divs if d % 128 == 0]
    return max(lane) if lane else max(divs)


def _step_vmem_bytes(tb, S, E, I, H, cb, ck, weight_bytes, weight_bufs):
    """Rough per-grid-step VMEM footprint (f32 intermediates + operand copies)."""
    f32 = 4
    M = tb * S
    b = weight_bufs * weight_bytes
    b += 2 * 2 * M * E * f32            # x & out blocks, double-buffered
    b += 3 * M * E * f32                # xb, x1, output accumulator
    b += M * 3 * E * f32 + 3 * M * E * cb   # qkv f32 + q/k/v operand copies
    b += 2 * tb * H * S * S * f32       # scores + exp
    b += tb * H * S * S * cb            # softmax-prob operand copy
    b += M * E * (f32 + cb)             # ctx (+ operand copy)
    b += M * ck * (f32 + cb)            # one MLP hidden chunk
    b += M * E * cb                     # relayout / misc slack
    return b


def _pick_batch_tile(B, S, E, I, H, cb, ck, weight_bytes, weight_bufs,
                     vmem_budget, row_target=512):
    divisors = [d for d in range(1, B + 1) if B % d == 0]
    # Keep >= 2 grid steps when B allows so both v7x TensorCores get work
    # (harmless on single-TC v5e/v6e: per-step overhead is ~0.35 us).
    cap = B if B == 1 else B // 2
    cands = [d for d in divisors if d <= max(1, cap)]
    fits = [d for d in cands
            if _step_vmem_bytes(d, S, E, I, H, cb, ck, weight_bytes, weight_bufs)
            <= vmem_budget]
    if not fits:
        fits = [1]
    pref = [d for d in fits if d * S <= row_target] or [min(fits)]
    aligned = [d for d in pref if (d * S) % 256 == 0]   # 256-row MXU on v6e/v7x
    return max(aligned) if aligned else max(pref)


# --------------------------------------------------------------------------- #
# Wrapper
# --------------------------------------------------------------------------- #
def transformer_encoder_layer(x, params, num_heads, *,
                              compute_dtype=jnp.bfloat16,
                              batch_tile=None, mlp_chunk=512,
                              single_buffer_weights=True):
    B, S, E = x.shape
    I = params["w1"].shape[0]
    H = num_heads
    assert E % H == 0
    dh = E // H
    scale = 1.0 / math.sqrt(dh)
    cdt = jnp.dtype(compute_dtype)
    cb = cdt.itemsize
    approx_recip = (cdt == jnp.dtype(jnp.bfloat16))   # approx reciprocal only on bf16 path

    ck = _pick_mlp_chunk(I, mlp_chunk)
    C = I // ck

    # --- trace-time weight prep (transposed for row x (in, out) GEMMs) -------
    g1 = params["ln1_gamma"].reshape(1, E).astype(jnp.float32)
    b1 = params["ln1_beta"].reshape(1, E).astype(jnp.float32)

    # Fold 1/sqrt(dh) into the Q rows of in_proj_w and the Q bias.
    q_scale = jnp.concatenate([jnp.full((E,), scale, jnp.float32),
                               jnp.ones((2 * E,), jnp.float32)])
    win_t = (params["in_proj_w"].astype(jnp.float32)
             * q_scale[:, None]).T.astype(cdt)                          # (E, 3E)
    bin_ = (params["in_proj_b"].astype(jnp.float32) * q_scale).reshape(1, 3 * E)

    wo_t = params["out_proj_w"].T.astype(cdt)                           # (E, E)
    bo = params["out_proj_b"].reshape(1, E).astype(jnp.float32)
    # MLP weights chunked along a leading axis for the in-kernel fori_loop.
    w1_t = params["w1"].T.reshape(E, C, ck).transpose(1, 0, 2).astype(cdt)  # (C, E, ck)
    bm1 = params["b1"].reshape(C, 1, ck).astype(jnp.float32)                # (C, 1, ck)
    w2_t = params["w2"].T.reshape(C, ck, E).astype(cdt)                     # (C, ck, E)
    bm2 = params["b2"].reshape(1, E).astype(jnp.float32)

    consts = (g1, b1, win_t, bin_, wo_t, bo, w1_t, bm1, w2_t, bm2)
    weight_bytes = sum(int(w.size) * w.dtype.itemsize for w in consts)

    # --- generation-aware VMEM budget (~72% of per-core capacity) ------------
    try:
        vmem_cap = int(pltpu.get_tpu_info().vmem_capacity_bytes)
    except Exception:
        vmem_cap = 64 * 2 ** 20            # conservative (v7x per-TensorCore size)
    vmem_budget = int(0.72 * vmem_cap)

    wbufs = 1 if single_buffer_weights else 2
    if batch_tile is None:
        tb = _pick_batch_tile(B, S, E, I, H, cb, ck, weight_bytes, wbufs, vmem_budget)
    else:
        tb = int(batch_tile)
        assert B % tb == 0, "batch_tile must divide B"
    grid = (B // tb,)

    kernel = functools.partial(_encoder_kernel, num_heads=H,
                               approx_recip=approx_recip, mlp_chunks=C)

    flops = 2 * B * S * E * (4 * E + 2 * I) + 4 * B * S * S * E
    cost = pl.CostEstimate(
        flops=flops,
        transcendentals=B * H * S * S,
        bytes_accessed=2 * B * S * E * x.dtype.itemsize + weight_bytes)

    io_spec = pl.BlockSpec((tb, S, E), lambda b: (b, 0, 0))

    def build_and_run(single_buf):
        wbufs_ = 1 if single_buf else 2
        est = _step_vmem_bytes(tb, S, E, I, H, cb, ck, weight_bytes, wbufs_)
        vmem_limit = int(min(vmem_budget, max(32 * 2 ** 20, est + (8 << 20))))

        def rep_spec(arr):           # whole array, same block every grid step
            n = arr.ndim
            idx = lambda b, _n=n: (0,) * _n
            if single_buf:
                # Constant block index across the grid -> single-buffer the
                # resident weights/biases (halves their VMEM; key on v7x 64 MiB).
                return pl.BlockSpec(arr.shape, idx, pipeline_mode=pl.Buffered(1))
            return pl.BlockSpec(arr.shape, idx)

        fn = pl.pallas_call(
            kernel,
            out_shape=jax.ShapeDtypeStruct((B, S, E), x.dtype),
            grid=grid,
            in_specs=[io_spec] + [rep_spec(a) for a in consts],
            out_specs=pl.BlockSpec((tb, S, E), lambda b: (b, 0, 0)),
            compiler_params=pltpu.CompilerParams(
                dimension_semantics=("parallel",),
                vmem_limit_bytes=vmem_limit),
            cost_estimate=cost,
        )
        return jax.block_until_ready(fn(x, *consts))

    if single_buffer_weights:
        try:
            return build_and_run(True)
        except Exception:
            # Fallback if this JAX build rejects pipeline_mode=pl.Buffered(1):
            # default double-buffered constant blocks (correctness identical).
            return build_and_run(False)
    return build_and_run(False)


# --------------------------------------------------------------------------- #
# Pure-JAX reference (reproduces the PyTorch forward in eval mode, f32)
# --------------------------------------------------------------------------- #
def _reference(x, params, num_heads):
    B, S, E = x.shape
    dh = E // num_heads
    with jax.default_matmul_precision("highest"):
        mean = jnp.mean(x, axis=-1, keepdims=True)
        var = jnp.mean((x - mean) ** 2, axis=-1, keepdims=True)
        xn = (x - mean) / jnp.sqrt(var + LN_EPS)
        xn = xn * params["ln1_gamma"] + params["ln1_beta"]

        qkv = xn @ params["in_proj_w"].T + params["in_proj_b"]
        q, k, v = qkv[..., :E], qkv[..., E:2 * E], qkv[..., 2 * E:]

        def split_heads(t):
            return t.reshape(B, S, num_heads, dh).transpose(0, 2, 1, 3)
        q, k, v = split_heads(q), split_heads(k), split_heads(v)
        s = jnp.einsum("bhqd,bhkd->bhqk", q, k) / math.sqrt(dh)
        p = jax.nn.softmax(s, axis=-1)
        o = jnp.einsum("bhqk,bhkd->bhqd", p, v).transpose(0, 2, 1, 3).reshape(B, S, E)
        o = o @ params["out_proj_w"].T + params["out_proj_b"]
        x1 = o + x
        # layer_norm2 output is dead code in the reference forward -> skipped
        h1 = jnp.maximum(x1 @ params["w1"].T + params["b1"], 0.0)
        h2 = h1 @ params["w2"].T + params["b2"]
        return h2 + x1


if __name__ == "__main__":
    num_heads = 4
    hidden_dim = 32
    intermediate_dim = 64
    B, S = 2, 8            # (batch, num_patch + 1)

    key = jax.random.PRNGKey(0)
    ks = jax.random.split(key, 9)

    params = {
        "ln1_gamma": jnp.ones((hidden_dim,), jnp.float32),
        "ln1_beta": jnp.zeros((hidden_dim,), jnp.float32),
        "in_proj_w": 0.1 * jax.random.normal(ks[0], (3 * hidden_dim, hidden_dim), jnp.float32),
        "in_proj_b": 0.1 * jax.random.normal(ks[1], (3 * hidden_dim,), jnp.float32),
        "out_proj_w": 0.1 * jax.random.normal(ks[2], (hidden_dim, hidden_dim), jnp.float32),
        "out_proj_b": 0.1 * jax.random.normal(ks[3], (hidden_dim,), jnp.float32),
        "w1": 0.1 * jax.random.normal(ks[4], (intermediate_dim, hidden_dim), jnp.float32),
        "b1": 0.1 * jax.random.normal(ks[5], (intermediate_dim,), jnp.float32),
        "w2": 0.1 * jax.random.normal(ks[6], (hidden_dim, intermediate_dim), jnp.float32),
        "b2": 0.1 * jax.random.normal(ks[7], (hidden_dim,), jnp.float32),
    }

    x = jax.random.normal(ks[8], (B, S, hidden_dim), jnp.float32)
    ref = _reference(x, params, num_heads)

    # f32 compute path: tight correctness check (default in-kernel matmul
    # precision; at ViT scale pass a looser bound or Precision.HIGHEST).
    out_f32 = jax.block_until_ready(
        transformer_encoder_layer(x, params, num_heads, compute_dtype=jnp.float32))
    assert out_f32.shape == (B, S, hidden_dim)
    assert np.allclose(np.asarray(out_f32), np.asarray(ref), atol=1e-3, rtol=1e-3)

    # f32 path again, forcing a multi-chunk MLP loop (exercises the fori_loop path).
    out_chunked = jax.block_until_ready(
        transformer_encoder_layer(x, params, num_heads, compute_dtype=jnp.float32,
                                  mlp_chunk=32))
    assert np.allclose(np.asarray(out_chunked), np.asarray(ref), atol=1e-3, rtol=1e-3)

    # bf16 fast path (MXU-native operands, f32 accumulation, approx reciprocal
    # in the softmax -> intentionally loose tolerance).
    out_bf16 = jax.block_until_ready(
        transformer_encoder_layer(x, params, num_heads, compute_dtype=jnp.bfloat16))
    assert out_bf16.shape == (B, S, hidden_dim)
    assert np.allclose(np.asarray(out_bf16), np.asarray(ref), atol=8e-2, rtol=8e-2)

    print("KERNEL_OK")
</pallas_src>

<mosaic_0001>
module attributes {stable_mosaic.version = 11 : i64} {
  func.func @_encoder_kernel(%arg0: i32, %arg1: memref<1x8x32xf32, #tpu.memory_space<vmem>>, %arg2: memref<1x32xf32, #tpu.memory_space<vmem>>, %arg3: memref<1x32xf32, #tpu.memory_space<vmem>>, %arg4: memref<32x96xf32, #tpu.memory_space<vmem>>, %arg5: memref<1x96xf32, #tpu.memory_space<vmem>>, %arg6: memref<32x32xf32, #tpu.memory_space<vmem>>, %arg7: memref<1x32xf32, #tpu.memory_space<vmem>>, %arg8: memref<1x32x64xf32, #tpu.memory_space<vmem>>, %arg9: memref<1x1x64xf32, #tpu.memory_space<vmem>>, %arg10: memref<1x64x32xf32, #tpu.memory_space<vmem>>, %arg11: memref<1x32xf32, #tpu.memory_space<vmem>>, %arg12: memref<1x8x32xf32, #tpu.memory_space<vmem>>) attributes {dimension_semantics = [#tpu.dimension_semantics<parallel>], iteration_bounds = array<i64: 2>, scalar_prefetch = 0 : i64, scratch_operands = 0 : i64, tpu.core_type = #tpu.core_type<tc>, window_params = [{transform_indices = @transform_0, window_bounds = array<i64: 1, 8, 32>}, {pipeline_mode = #tpu.pipeline_mode<synchronous>, transform_indices = @transform_1, window_bounds = array<i64: 1, 32>}, {pipeline_mode = #tpu.pipeline_mode<synchronous>, transform_indices = @transform_2, window_bounds = array<i64: 1, 32>}, {pipeline_mode = #tpu.pipeline_mode<synchronous>, transform_indices = @transform_3, window_bounds = array<i64: 32, 96>}, {pipeline_mode = #tpu.pipeline_mode<synchronous>, transform_indices = @transform_4, window_bounds = array<i64: 1, 96>}, {pipeline_mode = #tpu.pipeline_mode<synchronous>, transform_indices = @transform_5, window_bounds = array<i64: 32, 32>}, {pipeline_mode = #tpu.pipeline_mode<synchronous>, transform_indices = @transform_6, window_bounds = array<i64: 1, 32>}, {pipeline_mode = #tpu.pipeline_mode<synchronous>, transform_indices = @transform_7, window_bounds = array<i64: 1, 32, 64>}, {pipeline_mode = #tpu.pipeline_mode<synchronous>, transform_indices = @transform_8, window_bounds = array<i64: 1, 1, 64>}, {pipeline_mode = #tpu.pipeline_mode<synchronous>, transform_indices = @transform_9, window_bounds = array<i64: 1, 64, 32>}, {pipeline_mode = #tpu.pipeline_mode<synchronous>, transform_indices = @transform_10, window_bounds = array<i64: 1, 32>}, {transform_indices = @transform_11, window_bounds = array<i64: 1, 8, 32>}]} {
    %c0 = arith.constant 0 : index
    %c0_0 = arith.constant 0 : index
    %c0_1 = arith.constant 0 : index
    %0 = vector.load %arg1[%c0, %c0_0, %c0_1] : memref<1x8x32xf32, #tpu.memory_space<vmem>>, vector<1x8x32xf32>
    %1 = vector.shape_cast %0 : vector<1x8x32xf32> to vector<8x32xf32>
    %cst = arith.constant dense<0.000000e+00> : vector<8xf32>
    %2 = vector.multi_reduction <add>, %1, %cst [1] : vector<8x32xf32> to vector<8xf32>
    %3 = vector.shape_cast %2 : vector<8xf32> to vector<8x1xf32>
    %cst_2 = arith.constant 3.200000e+01 : f32
    %4 = vector.broadcast %cst_2 : f32 to vector<8x1xf32>
    %5 = arith.divf %3, %4 : vector<8x1xf32>
    %6 = vector.broadcast %5 : vector<8x1xf32> to vector<8x32xf32>
    %7 = arith.subf %1, %6 : vector<8x32xf32>
    %8 = arith.mulf %7, %7 : vector<8x32xf32>
    %cst_3 = arith.constant dense<0.000000e+00> : vector<8xf32>
    %9 = vector.multi_reduction <add>, %8, %cst_3 [1] : vector<8x32xf32> to vector<8xf32>
    %10 = vector.shape_cast %9 : vector<8xf32> to vector<8x1xf32>
    %cst_4 = arith.constant 3.200000e+01 : f32
    %11 = vector.broadcast %cst_4 : f32 to vector<8x1xf32>
    %12 = arith.divf %10, %11 : vector<8x1xf32>
    %13 = vector.broadcast %5 : vector<8x1xf32> to vector<8x32xf32>
    %14 = arith.subf %1, %13 : vector<8x32xf32>
    %cst_5 = arith.constant 9.99999974E-6 : f32
    %15 = vector.broadcast %cst_5 : f32 to vector<8x1xf32>
    %16 = arith.addf %12, %15 : vector<8x1xf32>
    %17 = math.rsqrt %16 : vector<8x1xf32>
    %18 = vector.broadcast %17 : vector<8x1xf32> to vector<8x32xf32>
    %19 = arith.mulf %14, %18 : vector<8x32xf32>
    %c0_6 = arith.constant 0 : index
    %c0_7 = arith.constant 0 : index
    %20 = vector.load %arg2[%c0_6, %c0_7] : memref<1x32xf32, #tpu.memory_space<vmem>>, vector<1x32xf32>
    %21 = vector.broadcast %20 : vector<1x32xf32> to vector<8x32xf32>
    %22 = arith.mulf %19, %21 : vector<8x32xf32>
    %c0_8 = arith.constant 0 : index
    %c0_9 = arith.constant 0 : index
    %23 = vector.load %arg3[%c0_8, %c0_9] : memref<1x32xf32, #tpu.memory_space<vmem>>, vector<1x32xf32>
    %24 = vector.broadcast %23 : vector<1x32xf32> to vector<8x32xf32>
    %25 = arith.addf %22, %24 : vector<8x32xf32>
    %c0_10 = arith.constant 0 : index
    %c0_11 = arith.constant 0 : index
    %26 = vector.load %arg4[%c0_10, %c0_11] : memref<32x96xf32, #tpu.memory_space<vmem>>, vector<32x96xf32>
    %cst_12 = arith.constant dense<0.000000e+00> : vector<8x96xf32>
    %27 = tpu.matmul %25, %26, %cst_12 {dimension_numbers = #tpu.dot_dimension_numbers<[1], [0], [0], [1], [0, 0, 1, 1], [], []>} : vector<8x32xf32>, vector<32x96xf32>, vector<8x96xf32> -> vector<8x96xf32>
    %c0_13 = arith.constant 0 : index
    %c0_14 = arith.constant 0 : index
    %28 = vector.load %arg5[%c0_13, %c0_14] : memref<1x96xf32, #tpu.memory_space<vmem>>, vector<1x96xf32>
    %29 = vector.broadcast %28 : vector<1x96xf32> to vector<8x96xf32>
    %30 = arith.addf %27, %29 : vector<8x96xf32>
    %31 = vector.extract_strided_slice %30 {offsets = [0, 0], sizes = [8, 32], strides = [1, 1]} : vector<8x96xf32> to vector<8x32xf32>
    %32 = vector.shape_cast %31 : vector<8x32xf32> to vector<1x8x4x8xf32>
    %33 = tpu.transpose %32, [0, 2, 1, 3] : vector<1x8x4x8xf32> -> vector<1x4x8x8xf32>
    %34 = vector.shape_cast %33 : vector<1x4x8x8xf32> to vector<4x8x8xf32>
    %35 = vector.extract_strided_slice %30 {offsets = [0, 32], sizes = [8, 32], strides = [1, 1]} : vector<8x96xf32> to vector<8x32xf32>
    %36 = vector.shape_cast %35 : vector<8x32xf32> to vector<1x8x4x8xf32>
    %37 = tpu.transpose %36, [0, 2, 1, 3] : vector<1x8x4x8xf32> -> vector<1x4x8x8xf32>
    %38 = vector.shape_cast %37 : vector<1x4x8x8xf32> to vector<4x8x8xf32>
    %39 = vector.extract_strided_slice %30 {offsets = [0, 64], sizes = [8, 32], strides = [1, 1]} : vector<8x96xf32> to vector<8x32xf32>
    %40 = vector.shape_cast %39 : vector<8x32xf32> to vector<1x8x4x8xf32>
    %41 = tpu.transpose %40, [0, 2, 1, 3] : vector<1x8x4x8xf32> -> vector<1x4x8x8xf32>
    %42 = vector.shape_cast %41 : vector<1x4x8x8xf32> to vector<4x8x8xf32>
    "tpu.trace_start"() <{level = 10 : i32, message = "bqd,bkd->bqk"}> : () -> ()
    %cst_15 = arith.constant dense<0.000000e+00> : vector<4x8x8xf32>
    %43 = tpu.matmul %34, %38, %cst_15 {dimension_numbers = #tpu.dot_dimension_numbers<[2], [2], [1], [1], [0, 0, 0, 1, 1, 1], [0], [0]>} : vector<4x8x8xf32>, vector<4x8x8xf32>, vector<4x8x8xf32> -> vector<4x8x8xf32>
    "tpu.trace_stop"() : () -> ()
    %cst_16 = arith.constant dense<0xFF800000> : vector<4x8xf32>
    %44 = vector.multi_reduction <maximumf>, %43, %cst_16 [2] : vector<4x8x8xf32> to vector<4x8xf32>
    %45 = vector.shape_cast %44 : vector<4x8xf32> to vector<4x8x1xf32>
    %46 = vector.broadcast %45 : vector<4x8x1xf32> to vector<4x8x8xf32>
    %47 = arith.subf %43, %46 : vector<4x8x8xf32>
    %48 = math.exp %47 : vector<4x8x8xf32>
    %cst_17 = arith.constant dense<0.000000e+00> : vector<4x8xf32>
    %49 = vector.multi_reduction <add>, %48, %cst_17 [2] : vector<4x8x8xf32> to vector<4x8xf32>
    %50 = vector.shape_cast %49 : vector<4x8xf32> to vector<4x8x1xf32>
    %51 = tpu.reciprocal %50 : vector<4x8x1xf32> -> vector<4x8x1xf32>
    %52 = vector.broadcast %51 : vector<4x8x1xf32> to vector<4x8x8xf32>
    %53 = arith.mulf %48, %52 : vector<4x8x8xf32>
    "tpu.trace_start"() <{level = 10 : i32, message = "bqk,bkd->bqd"}> : () -> ()
    %cst_18 = arith.constant dense<0.000000e+00> : vector<4x8x8xf32>
    %54 = tpu.matmul %53, %42, %cst_18 {dimension_numbers = #tpu.dot_dimension_numbers<[2], [1], [1], [2], [0, 0, 0, 1, 1, 2], [0], [0]>} : vector<4x8x8xf32>, vector<4x8x8xf32>, vector<4x8x8xf32> -> vector<4x8x8xf32>
    "tpu.trace_stop"() : () -> ()
    %55 = vector.shape_cast %54 : vector<4x8x8xf32> to vector<1x4x8x8xf32>
    %56 = tpu.transpose %55, [0, 2, 1, 3] : vector<1x4x8x8xf32> -> vector<1x8x4x8xf32>
    %57 = vector.shape_cast %56 : vector<1x8x4x8xf32> to vector<8x32xf32>
    %c0_19 = arith.constant 0 : index
    %c0_20 = arith.constant 0 : index
    %58 = vector.load %arg7[%c0_19, %c0_20] : memref<1x32xf32, #tpu.memory_space<vmem>>, vector<1x32xf32>
    %59 = vector.broadcast %58 : vector<1x32xf32> to vector<8x32xf32>
    %60 = arith.addf %1, %59 : vector<8x32xf32>
    %c0_21 = arith.constant 0 : index
    %c0_22 = arith.constant 0 : index
    %61 = vector.load %arg6[%c0_21, %c0_22] : memref<32x32xf32, #tpu.memory_space<vmem>>, vector<32x32xf32>
    %cst_23 = arith.constant dense<0.000000e+00> : vector<8x32xf32>
    %62 = tpu.matmul %57, %61, %cst_23 {dimension_numbers = #tpu.dot_dimension_numbers<[1], [0], [0], [1], [0, 0, 1, 1], [], []>} : vector<8x32xf32>, vector<32x32xf32>, vector<8x32xf32> -> vector<8x32xf32>
    %63 = arith.addf %60, %62 : vector<8x32xf32>
    %c0_24 = arith.constant 0 : index
    %c0_25 = arith.constant 0 : index
    %64 = vector.load %arg11[%c0_24, %c0_25] : memref<1x32xf32, #tpu.memory_space<vmem>>, vector<1x32xf32>
    %65 = vector.broadcast %64 : vector<1x32xf32> to vector<8x32xf32>
    %66 = arith.addf %63, %65 : vector<8x32xf32>
    %c0_i32 = arith.constant 0 : i32
    %67 = arith.index_cast %c0_i32 : i32 to index
    %c0_26 = arith.constant 0 : index
    %c0_27 = arith.constant 0 : index
    %68 = vector.load %arg8[%67, %c0_26, %c0_27] : memref<1x32x64xf32, #tpu.memory_space<vmem>>, vector<1x32x64xf32>
    %69 = vector.shape_cast %68 : vector<1x32x64xf32> to vector<32x64xf32>
    %cst_28 = arith.constant dense<0.000000e+00> : vector<8x64xf32>
    %70 = tpu.matmul %63, %69, %cst_28 {dimension_numbers = #tpu.dot_dimension_numbers<[1], [0], [0], [1], [0, 0, 1, 1], [], []>} : vector<8x32xf32>, vector<32x64xf32>, vector<8x64xf32> -> vector<8x64xf32>
    %71 = arith.index_cast %c0_i32 : i32 to index
    %c0_29 = arith.constant 0 : index
    %c0_30 = arith.constant 0 : index
    %72 = vector.load %arg9[%71, %c0_29, %c0_30] : memref<1x1x64xf32, #tpu.memory_space<vmem>>, vector<1x1x64xf32>
    %73 = vector.shape_cast %72 : vector<1x1x64xf32> to vector<1x64xf32>
    %74 = vector.broadcast %73 : vector<1x64xf32> to vector<8x64xf32>
    %75 = arith.addf %70, %74 : vector<8x64xf32>
    %cst_31 = arith.constant 0.000000e+00 : f32
    %76 = vector.broadcast %cst_31 : f32 to vector<8x64xf32>
    %77 = arith.maximumf %75, %76 : vector<8x64xf32>
    %78 = arith.index_cast %c0_i32 : i32 to index
    %c0_32 = arith.constant 0 : index
    %c0_33 = arith.constant 0 : index
    %79 = vector.load %arg10[%78, %c0_32, %c0_33] : memref<1x64x32xf32, #tpu.memory_space<vmem>>, vector<1x64x32xf32>
    %80 = vector.shape_cast %79 : vector<1x64x32xf32> to vector<64x32xf32>
    %cst_34 = arith.constant dense<0.000000e+00> : vector<8x32xf32>
    %81 = tpu.matmul %77, %80, %cst_34 {dimension_numbers = #tpu.dot_dimension_numbers<[1], [0], [0], [1], [0, 0, 1, 1], [], []>} : vector<8x64xf32>, vector<64x32xf32>, vector<8x32xf32> -> vector<8x32xf32>
    %82 = arith.addf %66, %81 : vector<8x32xf32>
    %c1_i32 = arith.constant 1 : i32
    %83 = vector.shape_cast %82 : vector<8x32xf32> to vector<1x8x32xf32>
    %c0_35 = arith.constant 0 : index
    %c0_36 = arith.constant 0 : index
    %c0_37 = arith.constant 0 : index
    %84 = vector.load %arg12[%c0_35, %c0_36, %c0_37] : memref<1x8x32xf32, #tpu.memory_space<vmem>>, vector<1x8x32xf32>
    tpu.vector_store %arg12[%c0_35, %c0_36, %c0_37], %83 {strides = array<i32>} : memref<1x8x32xf32, #tpu.memory_space<vmem>>, vector<1x8x32xf32>,
    return
  }
  func.func @transform_0(%arg0: i32) -> (i32, i32, i32) {
    %c0_i32 = arith.constant 0 : i32
    %c0_i32_0 = arith.constant 0 : i32
    %c0_i32_1 = arith.constant 0 : i32
    return %arg0, %c0_i32, %c0_i32_0 : i32, i32, i32
  }
  func.func @transform_1(%arg0: i32) -> (i32, i32) {
    %c0_i32 = arith.constant 0 : i32
    %c0_i32_0 = arith.constant 0 : i32
    %c0_i32_1 = arith.constant 0 : i32
    return %c0_i32, %c0_i32_0 : i32, i32
  }
  func.func @transform_2(%arg0: i32) -> (i32, i32) {
    %c0_i32 = arith.constant 0 : i32
    %c0_i32_0 = arith.constant 0 : i32
    %c0_i32_1 = arith.constant 0 : i32
    return %c0_i32, %c0_i32_0 : i32, i32
  }
  func.func @transform_3(%arg0: i32) -> (i32, i32) {
    %c0_i32 = arith.constant 0 : i32
    %c0_i32_0 = arith.constant 0 : i32
    %c0_i32_1 = arith.constant 0 : i32
    return %c0_i32, %c0_i32_0 : i32, i32
  }
  func.func @transform_4(%arg0: i32) -> (i32, i32) {
    %c0_i32 = arith.constant 0 : i32
    %c0_i32_0 = arith.constant 0 : i32
    %c0_i32_1 = arith.constant 0 : i32
    return %c0_i32, %c0_i32_0 : i32, i32
  }
  func.func @transform_5(%arg0: i32) -> (i32, i32) {
    %c0_i32 = arith.constant 0 : i32
    %c0_i32_0 = arith.constant 0 : i32
    %c0_i32_1 = arith.constant 0 : i32
    return %c0_i32, %c0_i32_0 : i32, i32
  }
  func.func @transform_6(%arg0: i32) -> (i32, i32) {
    %c0_i32 = arith.constant 0 : i32
    %c0_i32_0 = arith.constant 0 : i32
    %c0_i32_1 = arith.constant 0 : i32
    return %c0_i32, %c0_i32_0 : i32, i32
  }
  func.func @transform_7(%arg0: i32) -> (i32, i32, i32) {
    %c0_i32 = arith.constant 0 : i32
    %c0_i32_0 = arith.constant 0 : i32
    %c0_i32_1 = arith.constant 0 : i32
    %c0_i32_2 = arith.constant 0 : i32
    return %c0_i32, %c0_i32_0, %c0_i32_1 : i32, i32, i32
  }
  func.func @transform_8(%arg0: i32) -> (i32, i32, i32) {
    %c0_i32 = arith.constant 0 : i32
    %c0_i32_0 = arith.constant 0 : i32
    %c0_i32_1 = arith.constant 0 : i32
    %c0_i32_2 = arith.constant 0 : i32
    return %c0_i32, %c0_i32_0, %c0_i32_1 : i32, i32, i32
  }
  func.func @transform_9(%arg0: i32) -> (i32, i32, i32) {
    %c0_i32 = arith.constant 0 : i32
    %c0_i32_0 = arith.constant 0 : i32
    %c0_i32_1 = arith.constant 0 : i32
    %c0_i32_2 = arith.constant 0 : i32
    return %c0_i32, %c0_i32_0, %c0_i32_1 : i32, i32, i32
  }
  func.func @transform_10(%arg0: i32) -> (i32, i32) {
    %c0_i32 = arith.constant 0 : i32
    %c0_i32_0 = arith.constant 0 : i32
    %c0_i32_1 = arith.constant 0 : i32
    return %c0_i32, %c0_i32_0 : i32, i32
  }
  func.func @transform_11(%arg0: i32) -> (i32, i32, i32) {
    %c0_i32 = arith.constant 0 : i32
    %c0_i32_0 = arith.constant 0 : i32
    %c0_i32_1 = arith.constant 0 : i32
    return %arg0, %c0_i32, %c0_i32_0 : i32, i32, i32
  }
}

module attributes {stable_mosaic.version = 11 : i64} {
  func.func @_encoder_kernel(%arg0: i32, %arg1: memref<1x8x32xf32, #tpu.memory_space<vmem>>, %arg2: memref<1x32xf32, #tpu.memory_space<vmem>>, %arg3: memref<1x32xf32, #tpu.memory_space<vmem>>, %arg4: memref<32x96xf32, #tpu.memory_space<vmem>>, %arg5: memref<1x96xf32, #tpu.memory_space<vmem>>, %arg6: memref<32x32xf32, #tpu.memory_space<vmem>>, %arg7: memref<1x32xf32, #tpu.memory_space<vmem>>, %arg8: memref<1x32x64xf32, #tpu.memory_space<vmem>>, %arg9: memref<1x1x64xf32, #tpu.memory_space<vmem>>, %arg10: memref<1x64x32xf32, #tpu.memory_space<vmem>>, %arg11: memref<1x32xf32, #tpu.memory_space<vmem>>, %arg12: memref<1x8x32xf32, #tpu.memory_space<vmem>>) attributes {dimension_semantics = [#tpu.dimension_semantics<parallel>], iteration_bounds = array<i64: 2>, scalar_prefetch = 0 : i64, scratch_operands = 0 : i64, tpu.core_type = #tpu.core_type<tc>, window_params = [{transform_indices = @transform_0, window_bounds = array<i64: 1, 8, 32>}, {pipeline_mode = #tpu.pipeline_mode<synchronous>, transform_indices = @transform_1, window_bounds = array<i64: 1, 32>}, {pipeline_mode = #tpu.pipeline_mode<synchronous>, transform_indices = @transform_2, window_bounds = array<i64: 1, 32>}, {pipeline_mode = #tpu.pipeline_mode<synchronous>, transform_indices = @transform_3, window_bounds = array<i64: 32, 96>}, {pipeline_mode = #tpu.pipeline_mode<synchronous>, transform_indices = @transform_4, window_bounds = array<i64: 1, 96>}, {pipeline_mode = #tpu.pipeline_mode<synchronous>, transform_indices = @transform_5, window_bounds = array<i64: 32, 32>}, {pipeline_mode = #tpu.pipeline_mode<synchronous>, transform_indices = @transform_6, window_bounds = array<i64: 1, 32>}, {pipeline_mode = #tpu.pipeline_mode<synchronous>, transform_indices = @transform_7, window_bounds = array<i64: 1, 32, 64>}, {pipeline_mode = #tpu.pipeline_mode<synchronous>, transform_indices = @transform_8, window_bounds = array<i64: 1, 1, 64>}, {pipeline_mode = #tpu.pipeline_mode<synchronous>, transform_indices = @transform_9, window_bounds = array<i64: 1, 64, 32>}, {pipeline_mode = #tpu.pipeline_mode<synchronous>, transform_indices = @transform_10, window_bounds = array<i64: 1, 32>}, {transform_indices = @transform_11, window_bounds = array<i64: 1, 8, 32>}]} {
    %c0 = arith.constant 0 : index
    %c0_0 = arith.constant 0 : index
    %c0_1 = arith.constant 0 : index
    %0 = vector.load %arg1[%c0, %c0_0, %c0_1] : memref<1x8x32xf32, #tpu.memory_space<vmem>>, vector<1x8x32xf32>
    %1 = vector.shape_cast %0 : vector<1x8x32xf32> to vector<8x32xf32>
    %cst = arith.constant dense<0.000000e+00> : vector<8xf32>
    %2 = vector.multi_reduction <add>, %1, %cst [1] : vector<8x32xf32> to vector<8xf32>
    %3 = vector.shape_cast %2 : vector<8xf32> to vector<8x1xf32>
    %cst_2 = arith.constant 3.200000e+01 : f32
    %4 = vector.broadcast %cst_2 : f32 to vector<8x1xf32>
    %5 = arith.divf %3, %4 : vector<8x1xf32>
    %6 = vector.broadcast %5 : vector<8x1xf32> to vector<8x32xf32>
    %7 = arith.subf %1, %6 : vector<8x32xf32>
    %8 = arith.mulf %7, %7 : vector<8x32xf32>
    %cst_3 = arith.constant dense<0.000000e+00> : vector<8xf32>
    %9 = vector.multi_reduction <add>, %8, %cst_3 [1] : vector<8x32xf32> to vector<8xf32>
    %10 = vector.shape_cast %9 : vector<8xf32> to vector<8x1xf32>
    %cst_4 = arith.constant 3.200000e+01 : f32
    %11 = vector.broadcast %cst_4 : f32 to vector<8x1xf32>
    %12 = arith.divf %10, %11 : vector<8x1xf32>
    %13 = vector.broadcast %5 : vector<8x1xf32> to vector<8x32xf32>
    %14 = arith.subf %1, %13 : vector<8x32xf32>
    %cst_5 = arith.constant 9.99999974E-6 : f32
    %15 = vector.broadcast %cst_5 : f32 to vector<8x1xf32>
    %16 = arith.addf %12, %15 : vector<8x1xf32>
    %17 = math.rsqrt %16 : vector<8x1xf32>
    %18 = vector.broadcast %17 : vector<8x1xf32> to vector<8x32xf32>
    %19 = arith.mulf %14, %18 : vector<8x32xf32>
    %c0_6 = arith.constant 0 : index
    %c0_7 = arith.constant 0 : index
    %20 = vector.load %arg2[%c0_6, %c0_7] : memref<1x32xf32, #tpu.memory_space<vmem>>, vector<1x32xf32>
    %21 = vector.broadcast %20 : vector<1x32xf32> to vector<8x32xf32>
    %22 = arith.mulf %19, %21 : vector<8x32xf32>
    %c0_8 = arith.constant 0 : index
    %c0_9 = arith.constant 0 : index
    %23 = vector.load %arg3[%c0_8, %c0_9] : memref<1x32xf32, #tpu.memory_space<vmem>>, vector<1x32xf32>
    %24 = vector.broadcast %23 : vector<1x32xf32> to vector<8x32xf32>
    %25 = arith.addf %22, %24 : vector<8x32xf32>
    %c0_10 = arith.constant 0 : index
    %c0_11 = arith.constant 0 : index
    %26 = vector.load %arg4[%c0_10, %c0_11] : memref<32x96xf32, #tpu.memory_space<vmem>>, vector<32x96xf32>
    %cst_12 = arith.constant dense<0.000000e+00> : vector<8x96xf32>
    %27 = tpu.matmul %25, %26, %cst_12 {dimension_numbers = #tpu.dot_dimension_numbers<[1], [0], [0], [1], [0, 0, 1, 1], [], []>} : vector<8x32xf32>, vector<32x96xf32>, vector<8x96xf32> -> vector<8x96xf32>
    %c0_13 = arith.constant 0 : index
    %c0_14 = arith.constant 0 : index
    %28 = vector.load %arg5[%c0_13, %c0_14] : memref<1x96xf32, #tpu.memory_space<vmem>>, vector<1x96xf32>
    %29 = vector.broadcast %28 : vector<1x96xf32> to vector<8x96xf32>
    %30 = arith.addf %27, %29 : vector<8x96xf32>
    %31 = vector.extract_strided_slice %30 {offsets = [0, 0], sizes = [8, 32], strides = [1, 1]} : vector<8x96xf32> to vector<8x32xf32>
    %32 = vector.shape_cast %31 : vector<8x32xf32> to vector<1x8x4x8xf32>
    %33 = tpu.transpose %32, [0, 2, 1, 3] : vector<1x8x4x8xf32> -> vector<1x4x8x8xf32>
    %34 = vector.shape_cast %33 : vector<1x4x8x8xf32> to vector<4x8x8xf32>
    %35 = vector.extract_strided_slice %30 {offsets = [0, 32], sizes = [8, 32], strides = [1, 1]} : vector<8x96xf32> to vector<8x32xf32>
    %36 = vector.shape_cast %35 : vector<8x32xf32> to vector<1x8x4x8xf32>
    %37 = tpu.transpose %36, [0, 2, 1, 3] : vector<1x8x4x8xf32> -> vector<1x4x8x8xf32>
    %38 = vector.shape_cast %37 : vector<1x4x8x8xf32> to vector<4x8x8xf32>
    %39 = vector.extract_strided_slice %30 {offsets = [0, 64], sizes = [8, 32], strides = [1, 1]} : vector<8x96xf32> to vector<8x32xf32>
    %40 = vector.shape_cast %39 : vector<8x32xf32> to vector<1x8x4x8xf32>
    %41 = tpu.transpose %40, [0, 2, 1, 3] : vector<1x8x4x8xf32> -> vector<1x4x8x8xf32>
    %42 = vector.shape_cast %41 : vector<1x4x8x8xf32> to vector<4x8x8xf32>
    "tpu.trace_start"() <{level = 10 : i32, message = "bqd,bkd->bqk"}> : () -> ()
    %cst_15 = arith.constant dense<0.000000e+00> : vector<4x8x8xf32>
    %43 = tpu.matmul %34, %38, %cst_15 {dimension_numbers = #tpu.dot_dimension_numbers<[2], [2], [1], [1], [0, 0, 0, 1, 1, 1], [0], [0]>} : vector<4x8x8xf32>, vector<4x8x8xf32>, vector<4x8x8xf32> -> vector<4x8x8xf32>
    "tpu.trace_stop"() : () -> ()
    %cst_16 = arith.constant dense<0xFF800000> : vector<4x8xf32>
    %44 = vector.multi_reduction <maximumf>, %43, %cst_16 [2] : vector<4x8x8xf32> to vector<4x8xf32>
    %45 = vector.shape_cast %44 : vector<4x8xf32> to vector<4x8x1xf32>
    %46 = vector.broadcast %45 : vector<4x8x1xf32> to vector<4x8x8xf32>
    %47 = arith.subf %43, %46 : vector<4x8x8xf32>
    %48 = math.exp %47 : vector<4x8x8xf32>
    %cst_17 = arith.constant dense<0.000000e+00> : vector<4x8xf32>
    %49 = vector.multi_reduction <add>, %48, %cst_17 [2] : vector<4x8x8xf32> to vector<4x8xf32>
    %50 = vector.shape_cast %49 : vector<4x8xf32> to vector<4x8x1xf32>
    %51 = tpu.reciprocal %50 : vector<4x8x1xf32> -> vector<4x8x1xf32>
    %52 = vector.broadcast %51 : vector<4x8x1xf32> to vector<4x8x8xf32>
    %53 = arith.mulf %48, %52 : vector<4x8x8xf32>
    "tpu.trace_start"() <{level = 10 : i32, message = "bqk,bkd->bqd"}> : () -> ()
    %cst_18 = arith.constant dense<0.000000e+00> : vector<4x8x8xf32>
    %54 = tpu.matmul %53, %42, %cst_18 {dimension_numbers = #tpu.dot_dimension_numbers<[2], [1], [1], [2], [0, 0, 0, 1, 1, 2], [0], [0]>} : vector<4x8x8xf32>, vector<4x8x8xf32>, vector<4x8x8xf32> -> vector<4x8x8xf32>
    "tpu.trace_stop"() : () -> ()
    %55 = vector.shape_cast %54 : vector<4x8x8xf32> to vector<1x4x8x8xf32>
    %56 = tpu.transpose %55, [0, 2, 1, 3] : vector<1x4x8x8xf32> -> vector<1x8x4x8xf32>
    %57 = vector.shape_cast %56 : vector<1x8x4x8xf32> to vector<8x32xf32>
    %c0_19 = arith.constant 0 : index
    %c0_20 = arith.constant 0 : index
    %58 = vector.load %arg7[%c0_19, %c0_20] : memref<1x32xf32, #tpu.memory_space<vmem>>, vector<1x32xf32>
    %59 = vector.broadcast %58 : vector<1x32xf32> to vector<8x32xf32>
    %60 = arith.addf %1, %59 : vector<8x32xf32>
    %c0_21 = arith.constant 0 : index
    %c0_22 = arith.constant 0 : index
    %61 = vector.load %arg6[%c0_21, %c0_22] : memref<32x32xf32, #tpu.memory_space<vmem>>, vector<32x32xf32>
    %cst_23 = arith.constant dense<0.000000e+00> : vector<8x32xf32>
    %62 = tpu.matmul %57, %61, %cst_23 {dimension_numbers = #tpu.dot_dimension_numbers<[1], [0], [0], [1], [0, 0, 1, 1], [], []>} : vector<8x32xf32>, vector<32x32xf32>, vector<8x32xf32> -> vector<8x32xf32>
    %63 = arith.addf %60, %62 : vector<8x32xf32>
    %c0_24 = arith.constant 0 : index
    %c0_25 = arith.constant 0 : index
    %64 = vector.load %arg11[%c0_24, %c0_25] : memref<1x32xf32, #tpu.memory_space<vmem>>, vector<1x32xf32>
    %65 = vector.broadcast %64 : vector<1x32xf32> to vector<8x32xf32>
    %66 = arith.addf %63, %65 : vector<8x32xf32>
    %c0_i32 = arith.constant 0 : i32
    %67 = arith.index_cast %c0_i32 : i32 to index
    %c0_26 = arith.constant 0 : index
    %c0_27 = arith.constant 0 : index
    %68 = vector.load %arg8[%67, %c0_26, %c0_27] : memref<1x32x64xf32, #tpu.memory_space<vmem>>, vector<1x32x64xf32>
    %69 = vector.shape_cast %68 : vector<1x32x64xf32> to vector<32x64xf32>
    %cst_28 = arith.constant dense<0.000000e+00> : vector<8x64xf32>
    %70 = tpu.matmul %63, %69, %cst_28 {dimension_numbers = #tpu.dot_dimension_numbers<[1], [0], [0], [1], [0, 0, 1, 1], [], []>} : vector<8x32xf32>, vector<32x64xf32>, vector<8x64xf32> -> vector<8x64xf32>
    %71 = arith.index_cast %c0_i32 : i32 to index
    %c0_29 = arith.constant 0 : index
    %c0_30 = arith.constant 0 : index
    %72 = vector.load %arg9[%71, %c0_29, %c0_30] : memref<1x1x64xf32, #tpu.memory_space<vmem>>, vector<1x1x64xf32>
    %73 = vector.shape_cast %72 : vector<1x1x64xf32> to vector<1x64xf32>
    %74 = vector.broadcast %73 : vector<1x64xf32> to vector<8x64xf32>
    %75 = arith.addf %70, %74 : vector<8x64xf32>
    %cst_31 = arith.constant 0.000000e+00 : f32
    %76 = vector.broadcast %cst_31 : f32 to vector<8x64xf32>
    %77 = arith.maximumf %75, %76 : vector<8x64xf32>
    %78 = arith.index_cast %c0_i32 : i32 to index
    %c0_32 = arith.constant 0 : index
    %c0_33 = arith.constant 0 : index
    %79 = vector.load %arg10[%78, %c0_32, %c0_33] : memref<1x64x32xf32, #tpu.memory_space<vmem>>, vector<1x64x32xf32>
    %80 = vector.shape_cast %79 : vector<1x64x32xf32> to vector<64x32xf32>
    %cst_34 = arith.constant dense<0.000000e+00> : vector<8x32xf32>
    %81 = tpu.matmul %77, %80, %cst_34 {dimension_numbers = #tpu.dot_dimension_numbers<[1], [0], [0], [1], [0, 0, 1, 1], [], []>} : vector<8x64xf32>, vector<64x32xf32>, vector<8x32xf32> -> vector<8x32xf32>
    %82 = arith.addf %66, %81 : vector<8x32xf32>
    %c1_i32 = arith.constant 1 : i32
    %83 = vector.shape_cast %82 : vector<8x32xf32> to vector<1x8x32xf32>
    %c0_35 = arith.constant 0 : index
    %c0_36 = arith.constant 0 : index
    %c0_37 = arith.constant 0 : index
    %84 = vector.load %arg12[%c0_35, %c0_36, %c0_37] : memref<1x8x32xf32, #tpu.memory_space<vmem>>, vector<1x8x32xf32>
    tpu.vector_store %arg12[%c0_35, %c0_36, %c0_37], %83 {strides = array<i32>} : memref<1x8x32xf32, #tpu.memory_space<vmem>>, vector<1x8x32xf32>,
    return
  }
  func.func @transform_0(%arg0: i32) -> (i32, i32, i32) {
    %c0_i32 = arith.constant 0 : i32
    %c0_i32_0 = arith.constant 0 : i32
    %c0_i32_1 = arith.constant 0 : i32
    return %arg0, %c0_i32, %c0_i32_0 : i32, i32, i32
  }
  func.func @transform_1(%arg0: i32) -> (i32, i32) {
    %c0_i32 = arith.constant 0 : i32
    %c0_i32_0 = arith.constant 0 : i32
    %c0_i32_1 = arith.constant 0 : i32
    return %c0_i32, %c0_i32_0 : i32, i32
  }
  func.func @transform_2(%arg0: i32) -> (i32, i32) {
    %c0_i32 = arith.constant 0 : i32
    %c0_i32_0 = arith.constant 0 : i32
    %c0_i32_1 = arith.constant 0 : i32
    return %c0_i32, %c0_i32_0 : i32, i32
  }
  func.func @transform_3(%arg0: i32) -> (i32, i32) {
    %c0_i32 = arith.constant 0 : i32
    %c0_i32_0 = arith.constant 0 : i32
    %c0_i32_1 = arith.constant 0 : i32
    return %c0_i32, %c0_i32_0 : i32, i32
  }
  func.func @transform_4(%arg0: i32) -> (i32, i32) {
    %c0_i32 = arith.constant 0 : i32
    %c0_i32_0 = arith.constant 0 : i32
    %c0_i32_1 = arith.constant 0 : i32
    return %c0_i32, %c0_i32_0 : i32, i32
  }
  func.func @transform_5(%arg0: i32) -> (i32, i32) {
    %c0_i32 = arith.constant 0 : i32
    %c0_i32_0 = arith.constant 0 : i32
    %c0_i32_1 = arith.constant 0 : i32
    return %c0_i32, %c0_i32_0 : i32, i32
  }
  func.func @transform_6(%arg0: i32) -> (i32, i32) {
    %c0_i32 = arith.constant 0 : i32
    %c0_i32_0 = arith.constant 0 : i32
    %c0_i32_1 = arith.constant 0 : i32
    return %c0_i32, %c0_i32_0 : i32, i32
  }
  func.func @transform_7(%arg0: i32) -> (i32, i32, i32) {
    %c0_i32 = arith.constant 0 : i32
    %c0_i32_0 = arith.constant 0 : i32
    %c0_i32_1 = arith.constant 0 : i32
    %c0_i32_2 = arith.constant 0 : i32
    return %c0_i32, %c0_i32_0, %c0_i32_1 : i32, i32, i32
  }
  func.func @transform_8(%arg0: i32) -> (i32, i32, i32) {
    %c0_i32 = arith.constant 0 : i32
    %c0_i32_0 = arith.constant 0 : i32
    %c0_i32_1 = arith.constant 0 : i32
    %c0_i32_2 = arith.constant 0 : i32
    return %c0_i32, %c0_i32_0, %c0_i32_1 : i32, i32, i32
  }
  func.func @transform_9(%arg0: i32) -> (i32, i32, i32) {
    %c0_i32 = arith.constant 0 : i32
    %c0_i32_0 = arith.constant 0 : i32
    %c0_i32_1 = arith.constant 0 : i32
    %c0_i32_2 = arith.constant 0 : i32
    return %c0_i32, %c0_i32_0, %c0_i32_1 : i32, i32, i32
  }
  func.func @transform_10(%arg0: i32) -> (i32, i32) {
    %c0_i32 = arith.constant 0 : i32
    %c0_i32_0 = arith.constant 0 : i32
    %c0_i32_1 = arith.constant 0 : i32
    return %c0_i32, %c0_i32_0 : i32, i32
  }
  func.func @transform_11(%arg0: i32) -> (i32, i32, i32) {
    %c0_i32 = arith.constant 0 : i32
    %c0_i32_0 = arith.constant 0 : i32
    %c0_i32_1 = arith.constant 0 : i32
    return %arg0, %c0_i32, %c0_i32_0 : i32, i32, i32
  }
}

</mosaic_0001>

<llo_original>
// kernel: tpu_custom_call.1
$region0: #{tpu_custom_call.1}
  #allocation0 [shape = 'u32[]', space=smem, size = 0x4, offset = 0x4, fixed_abs, tag = 'smem constant byte address 0x4 - core index']
  #allocation1 [shape = 'u32[144,128]{1,0:T(1,128)}', space=vmem, size = 0x12000, scoped, tag = 'internal scratch']
  %s0 = inlined_call_operand.hbm [shape: f32[2,8,32], index: 0, kind: input, shape index: {}]
  %s1 = inlined_call_operand.vmem [shape: f32[1,32], index: 1, kind: input, shape index: {}]
  %s2 = inlined_call_operand.vmem [shape: f32[1,32], index: 2, kind: input, shape index: {}]
  %s3 = inlined_call_operand.vmem [shape: f32[32,96], index: 3, kind: input, shape index: {}]
  %s4 = inlined_call_operand.vmem [shape: f32[1,96], index: 4, kind: input, shape index: {}]
  %s5 = inlined_call_operand.vmem [shape: f32[32,32], index: 5, kind: input, shape index: {}]
  %s6 = inlined_call_operand.vmem [shape: f32[1,32], index: 6, kind: input, shape index: {}]
  %s7 = inlined_call_operand.vmem [shape: f32[1,32,64], index: 7, kind: input, shape index: {}]
  %s8 = inlined_call_operand.vmem [shape: f32[1,1,64], index: 8, kind: input, shape index: {}]
  %s9 = inlined_call_operand.vmem [shape: f32[1,64,32], index: 9, kind: input, shape index: {}]
  %s10 = inlined_call_operand.vmem [shape: f32[1,32], index: 10, kind: input, shape index: {}]
  %s11 = inlined_call_operand.hbm [shape: f32[2,8,32], index: 11, kind: output, shape index: {}]
  %s12 = sld [smem:[#allocation0]]
  $region81: #{tpu_custom_call.1} parent=0
    _
  %s14 = ssub.s32 1, %s12
  %s15 = scalar_select 0, %s14, %s12
  $region1: #{tpu_custom_call.1} parent=0
    #allocation2 [shape = 'u8[8192]{0}', space=vmem, size = 0x2000, scoped, tag = 'input window, operand 0']
    #allocation3 [shape = 's32[2]{0}', space=sflag, size = 0x8, scoped, tag = 'scoped memory for tpu_custom_call.1']
    #allocation4 [shape = 's32[2]{0}', space=sflag, size = 0x8, scoped, tag = 'scoped memory for tpu_custom_call.1']
    #allocation5 [shape = 'u8[8192]{0}', space=vmem, size = 0x2000, scoped, tag = 'output window, operand 0']
    %16 = vsyncpa [#allocation3], 0
    %s17 = scalar_lea.sflag [#allocation3], 1
    %18 = vsyncpa %s17, 0
    %19 = vsyncpa [#allocation4], 0
    %s20 = scalar_lea.sflag [#allocation4], 1
    %21 = vsyncpa %s20, 0
    loop: start=0, step=1, limit=4
    $region2: #{tpu_custom_call.1} parent=1 // loop_pre_header
      _
    $region3: #{tpu_custom_call.1} parent=1 // loop_header
      %s23 = sphi 0, %s27
      %p24 = scmp.ge.s32.totalorder %s23, 4
      %s33 = sphi 0, %s35
      %s36 = sphi 0, %s33
      %s37 = sphi 0, %s36
      %s53 = sphi 0, %s37
      %s57 = sphi 0, %s57
      %s59 = sphi 0, %s57
      %s60 = sphi 0, %s59
      %s74 = sphi 0, %s60
      %s78 = sphi 0, %s78
      %s80 = sphi 0, %s78
      %s81 = sphi 0, %s80
      %s95 = sphi 0, %s81
      %s99 = sphi 0, %s99
      %s101 = sphi 0, %s99
      %s102 = sphi 0, %s101
      %s116 = sphi 0, %s102
      %s120 = sphi 0, %s120
      %s122 = sphi 0, %s120
      %s123 = sphi 0, %s122
      %s137 = sphi 0, %s123
      %s141 = sphi 0, %s141
      %s143 = sphi 0, %s141
      %s144 = sphi 0, %s143
      %s158 = sphi 0, %s144
      %s162 = sphi 0, %s162
      %s164 = sphi 0, %s162
      %s165 = sphi 0, %s164
      %s179 = sphi 0, %s165
      %s183 = sphi 0, %s183
      %s185 = sphi 0, %s183
      %s186 = sphi 0, %s185
      %s200 = sphi 0, %s186
      %s204 = sphi 0, %s204
      %s206 = sphi 0, %s204
      %s207 = sphi 0, %s206
      %s221 = sphi 0, %s207
      %s225 = sphi 0, %s225
      %s227 = sphi 0, %s225
      %s228 = sphi 0, %s227
      %s242 = sphi 0, %s228
      %s246 = sphi 0, %s246
      %s248 = sphi 0, %s246
      %s249 = sphi 0, %s248
      %s263 = sphi 0, %s249
      %s269 = sphi 0, %s271
      %s272 = sphi 0, %s269
      %s273 = sphi 0, %s272
      %s289 = sphi 0, %s273
    $region4: #{tpu_custom_call.1} parent=1 // loop_header_branch
      %26 = sbr.rel (%p24) target = $region8
    $region5: #{tpu_custom_call.1} parent=1 // loop_body
      %s28 = ssub.s32 %s23, 1
      %s29 = ssub.s32 %s23, 2
      %s30 = sadd.s32 %s23, 1
      %s31 = ssub.s32 %s23, %s30
      %p32 = scmp.eq.s32.totalorder %s31, 0
      %s34 = sadd.s32 %s33, 1
      %s35 = scalar_select %p32, %s33, %s34
      %p38 = pneg %p32
      %p39 = scmp.eq.s32.totalorder %s23, 1
      %p40 = por %p38, %p39
      %p41 = scmp.ne.s32.totalorder %s33, %s36
      %p42 = scmp.eq.s32.totalorder %s23, 0
      %p43 = por %p41, %p42
      %p44 = scmp.ne.s32.totalorder %s33, %s36
      %p45 = scmp.eq.s32.totalorder %s28, 1
      %p46 = por %p44, %p45
      %p47 = scmp.ne.s32.totalorder %s36, %s37
      %p48 = scmp.eq.s32.totalorder %s28, 0
      %p49 = por %p47, %p48
      %p50 = scmp.ne.s32.totalorder %s36, %s37
      %p51 = scmp.eq.s32.totalorder %s29, 1
      %p52 = por %p50, %p51
      %p54 = scmp.ne.s32.totalorder %s37, %s53
      %p55 = scmp.eq.s32.totalorder %s29, 0
      %p56 = por %p54, %p55
      %s58 = sadd.s32 %s57, 1
      %p61 = scmp.eq.s32.totalorder %s23, 1
      %p62 = scmp.ne.s32.totalorder %s57, %s59
      %p63 = scmp.eq.s32.totalorder %s23, 0
      %p64 = por %p62, %p63
      %p65 = scmp.ne.s32.totalorder %s57, %s59
      %p66 = scmp.eq.s32.totalorder %s28, 1
      %p67 = por %p65, %p66
      %p68 = scmp.ne.s32.totalorder %s59, %s60
      %p69 = scmp.eq.s32.totalorder %s28, 0
      %p70 = por %p68, %p69
      %p71 = scmp.ne.s32.totalorder %s59, %s60
      %p72 = scmp.eq.s32.totalorder %s29, 1
      %p73 = por %p71, %p72
      %p75 = scmp.ne.s32.totalorder %s60, %s74
      %p76 = scmp.eq.s32.totalorder %s29, 0
      %p77 = por %p75, %p76
      %s79 = sadd.s32 %s78, 1
      %p82 = scmp.eq.s32.totalorder %s23, 1
      %p83 = scmp.ne.s32.totalorder %s78, %s80
      %p84 = scmp.eq.s32.totalorder %s23, 0
      %p85 = por %p83, %p84
      %p86 = scmp.ne.s32.totalorder %s78, %s80
      %p87 = scmp.eq.s32.totalorder %s28, 1
      %p88 = por %p86, %p87
      %p89 = scmp.ne.s32.totalorder %s80, %s81
      %p90 = scmp.eq.s32.totalorder %s28, 0
      %p91 = por %p89, %p90
      %p92 = scmp.ne.s32.totalorder %s80, %s81
      %p93 = scmp.eq.s32.totalorder %s29, 1
      %p94 = por %p92, %p93
      %p96 = scmp.ne.s32.totalorder %s81, %s95
      %p97 = scmp.eq.s32.totalorder %s29, 0
      %p98 = por %p96, %p97
      %s100 = sadd.s32 %s99, 1
      %p103 = scmp.eq.s32.totalorder %s23, 1
      %p104 = scmp.ne.s32.totalorder %s99, %s101
      %p105 = scmp.eq.s32.totalorder %s23, 0
      %p106 = por %p104, %p105
      %p107 = scmp.ne.s32.totalorder %s99, %s101
      %p108 = scmp.eq.s32.totalorder %s28, 1
      %p109 = por %p107, %p108
      %p110 = scmp.ne.s32.totalorder %s101, %s102
      %p111 = scmp.eq.s32.totalorder %s28, 0
      %p112 = por %p110, %p111
      %p113 = scmp.ne.s32.totalorder %s101, %s102
      %p114 = scmp.eq.s32.totalorder %s29, 1
      %p115 = por %p113, %p114
      %p117 = scmp.ne.s32.totalorder %s102, %s116
      %p118 = scmp.eq.s32.totalorder %s29, 0
      %p119 = por %p117, %p118
      %s121 = sadd.s32 %s120, 1
      %p124 = scmp.eq.s32.totalorder %s23, 1
      %p125 = scmp.ne.s32.totalorder %s120, %s122
      %p126 = scmp.eq.s32.totalorder %s23, 0
      %p127 = por %p125, %p126
      %p128 = scmp.ne.s32.totalorder %s120, %s122
      %p129 = scmp.eq.s32.totalorder %s28, 1
      %p130 = por %p128, %p129
      %p131 = scmp.ne.s32.totalorder %s122, %s123
      %p132 = scmp.eq.s32.totalorder %s28, 0
      %p133 = por %p131, %p132
      %p134 = scmp.ne.s32.totalorder %s122, %s123
      %p135 = scmp.eq.s32.totalorder %s29, 1
      %p136 = por %p134, %p135
      %p138 = scmp.ne.s32.totalorder %s123, %s137
      %p139 = scmp.eq.s32.totalorder %s29, 0
      %p140 = por %p138, %p139
      %s142 = sadd.s32 %s141, 1
      %p145 = scmp.eq.s32.totalorder %s23, 1
      %p146 = scmp.ne.s32.totalorder %s141, %s143
      %p147 = scmp.eq.s32.totalorder %s23, 0
      %p148 = por %p146, %p147
      %p149 = scmp.ne.s32.totalorder %s141, %s143
      %p150 = scmp.eq.s32.totalorder %s28, 1
      %p151 = por %p149, %p150
      %p152 = scmp.ne.s32.totalorder %s143, %s144
      %p153 = scmp.eq.s32.totalorder %s28, 0
      %p154 = por %p152, %p153
      %p155 = scmp.ne.s32.totalorder %s143, %s144
      %p156 = scmp.eq.s32.totalorder %s29, 1
      %p157 = por %p155, %p156
      %p159 = scmp.ne.s32.totalorder %s144, %s158
      %p160 = scmp.eq.s32.totalorder %s29, 0
      %p161 = por %p159, %p160
      %s163 = sadd.s32 %s162, 1
      %p166 = scmp.eq.s32.totalorder %s23, 1
      %p167 = scmp.ne.s32.totalorder %s162, %s164
      %p168 = scmp.eq.s32.totalorder %s23, 0
      %p169 = por %p167, %p168
      %p170 = scmp.ne.s32.totalorder %s162, %s164
      %p171 = scmp.eq.s32.totalorder %s28, 1
      %p172 = por %p170, %p171
      %p173 = scmp.ne.s32.totalorder %s164, %s165
      %p174 = scmp.eq.s32.totalorder %s28, 0
      %p175 = por %p173, %p174
      %p176 = scmp.ne.s32.totalorder %s164, %s165
      %p177 = scmp.eq.s32.totalorder %s29, 1
      %p178 = por %p176, %p177
      %p180 = scmp.ne.s32.totalorder %s165, %s179
      %p181 = scmp.eq.s32.totalorder %s29, 0
      %p182 = por %p180, %p181
      %s184 = sadd.s32 %s183, 1
      %p187 = scmp.eq.s32.totalorder %s23, 1
      %p188 = scmp.ne.s32.totalorder %s183, %s185
      %p189 = scmp.eq.s32.totalorder %s23, 0
      %p190 = por %p188, %p189
      %p191 = scmp.ne.s32.totalorder %s183, %s185
      %p192 = scmp.eq.s32.totalorder %s28, 1
      %p193 = por %p191, %p192
      %p194 = scmp.ne.s32.totalorder %s185, %s186
      %p195 = scmp.eq.s32.totalorder %s28, 0
      %p196 = por %p194, %p195
      %p197 = scmp.ne.s32.totalorder %s185, %s186
      %p198 = scmp.eq.s32.totalorder %s29, 1
      %p199 = por %p197, %p198
      %p201 = scmp.ne.s32.totalorder %s186, %s200
      %p202 = scmp.eq.s32.totalorder %s29, 0
      %p203 = por %p201, %p202
      %s205 = sadd.s32 %s204, 1
      %p208 = scmp.eq.s32.totalorder %s23, 1
      %p209 = scmp.ne.s32.totalorder %s204, %s206
      %p210 = scmp.eq.s32.totalorder %s23, 0
      %p211 = por %p209, %p210
      %p212 = scmp.ne.s32.totalorder %s204, %s206
      %p213 = scmp.eq.s32.totalorder %s28, 1
      %p214 = por %p212, %p213
      %p215 = scmp.ne.s32.totalorder %s206, %s207
      %p216 = scmp.eq.s32.totalorder %s28, 0
      %p217 = por %p215, %p216
      %p218 = scmp.ne.s32.totalorder %s206, %s207
      %p219 = scmp.eq.s32.totalorder %s29, 1
      %p220 = por %p218, %p219
      %p222 = scmp.ne.s32.totalorder %s207, %s221
      %p223 = scmp.eq.s32.totalorder %s29, 0
      %p224 = por %p222, %p223
      %s226 = sadd.s32 %s225, 1
      %p229 = scmp.eq.s32.totalorder %s23, 1
      %p230 = scmp.ne.s32.totalorder %s225, %s227
      %p231 = scmp.eq.s32.totalorder %s23, 0
      %p232 = por %p230, %p231
      %p233 = scmp.ne.s32.totalorder %s225, %s227
      %p234 = scmp.eq.s32.totalorder %s28, 1
      %p235 = por %p233, %p234
      %p236 = scmp.ne.s32.totalorder %s227, %s228
      %p237 = scmp.eq.s32.totalorder %s28, 0
      %p238 = por %p236, %p237
      %p239 = scmp.ne.s32.totalorder %s227, %s228
      %p240 = scmp.eq.s32.totalorder %s29, 1
      %p241 = por %p239, %p240
      %p243 = scmp.ne.s32.totalorder %s228, %s242
      %p244 = scmp.eq.s32.totalorder %s29, 0
      %p245 = por %p243, %p244
      %s247 = sadd.s32 %s246, 1
      %p250 = scmp.eq.s32.totalorder %s23, 1
      %p251 = scmp.ne.s32.totalorder %s246, %s248
      %p252 = scmp.eq.s32.totalorder %s23, 0
      %p253 = por %p251, %p252
      %p254 = scmp.ne.s32.totalorder %s246, %s248
      %p255 = scmp.eq.s32.totalorder %s28, 1
      %p256 = por %p254, %p255
      %p257 = scmp.ne.s32.totalorder %s248, %s249
      %p258 = scmp.eq.s32.totalorder %s28, 0
      %p259 = por %p257, %p258
      %p260 = scmp.ne.s32.totalorder %s248, %s249
      %p261 = scmp.eq.s32.totalorder %s29, 1
      %p262 = por %p260, %p261
      %p264 = scmp.ne.s32.totalorder %s249, %s263
      %p265 = scmp.eq.s32.totalorder %s29, 0
      %p266 = por %p264, %p265
      %s267 = ssub.s32 %s23, %s30
      %p268 = scmp.eq.s32.totalorder %s267, 0
      %s270 = sadd.s32 %s269, 1
      %s271 = scalar_select %p268, %s269, %s270
      %p274 = pneg %p268
      %p275 = scmp.eq.s32.totalorder %s23, 1
      %p276 = por %p274, %p275
      %p277 = scmp.ne.s32.totalorder %s269, %s272
      %p278 = scmp.eq.s32.totalorder %s23, 0
      %p279 = por %p277, %p278
      %p280 = scmp.ne.s32.totalorder %s269, %s272
      %p281 = scmp.eq.s32.totalorder %s28, 1
      %p282 = por %p280, %p281
      %p283 = scmp.ne.s32.totalorder %s272, %s273
      %p284 = scmp.eq.s32.totalorder %s28, 0
      %p285 = por %p283, %p284
      %p286 = scmp.ne.s32.totalorder %s272, %s273
      %p287 = scmp.eq.s32.totalorder %s29, 1
      %p288 = por %p286, %p287
      %p290 = scmp.ne.s32.totalorder %s273, %s289
      %p291 = scmp.eq.s32.totalorder %s29, 0
      %p292 = por %p290, %p291
      %p293 = scmp.le.s32.totalorder 1, %s23
      %p294 = scmp.lt.s32.totalorder %s23, 3
      %p295 = pnand %p293, %p294
      %p296 = pneg %p295
      // Predicated region
      $region9: #{tpu_custom_call.1} parent=5 // pred_check
        _
      $region10: #{tpu_custom_call.1} parent=5 // pred_check_branch
        %298 = sbr.rel (%p295) target = $region12
      $region11: #{tpu_custom_call.1} parent=5 // pred_region
        %s299 = ssub.s32 %s23, 1
        // Predicated region
        $region13: #{tpu_custom_call.1} parent=11 // pred_check
          %p300 = pneg %p70
        $region14: #{tpu_custom_call.1} parent=11 // pred_check_branch
          %302 = sbr.rel (%p300) target = $region16
        $region15: #{tpu_custom_call.1} parent=11 // pred_region
          _
        $region16: #{tpu_custom_call.1} parent=11 // pred_fallthru
          _
        // Predicated region
        $region17: #{tpu_custom_call.1} parent=11 // pred_check
          %p303 = pneg %p91
        $region18: #{tpu_custom_call.1} parent=11 // pred_check_branch
          %305 = sbr.rel (%p303) target = $region20
        $region19: #{tpu_custom_call.1} parent=11 // pred_region
          _
        $region20: #{tpu_custom_call.1} parent=11 // pred_fallthru
          _
        // Predicated region
        $region21: #{tpu_custom_call.1} parent=11 // pred_check
          %p306 = pneg %p112
        $region22: #{tpu_custom_call.1} parent=11 // pred_check_branch
          %308 = sbr.rel (%p306) target = $region24
        $region23: #{tpu_custom_call.1} parent=11 // pred_region
          _
        $region24: #{tpu_custom_call.1} parent=11 // pred_fallthru
          _
        // Predicated region
        $region25: #{tpu_custom_call.1} parent=11 // pred_check
          %p309 = pneg %p133
        $region26: #{tpu_custom_call.1} parent=11 // pred_check_branch
          %311 = sbr.rel (%p309) target = $region28
        $region27: #{tpu_custom_call.1} parent=11 // pred_region
          _
        $region28: #{tpu_custom_call.1} parent=11 // pred_fallthru
          _
        // Predicated region
        $region29: #{tpu_custom_call.1} parent=11 // pred_check
          %p312 = pneg %p154
        $region30: #{tpu_custom_call.1} parent=11 // pred_check_branch
          %314 = sbr.rel (%p312) target = $region32
        $region31: #{tpu_custom_call.1} parent=11 // pred_region
          _
        $region32: #{tpu_custom_call.1} parent=11 // pred_fallthru
          _
        // Predicated region
        $region33: #{tpu_custom_call.1} parent=11 // pred_check
          %p315 = pneg %p175
        $region34: #{tpu_custom_call.1} parent=11 // pred_check_branch
          %317 = sbr.rel (%p315) target = $region36
        $region35: #{tpu_custom_call.1} parent=11 // pred_region
          _
        $region36: #{tpu_custom_call.1} parent=11 // pred_fallthru
          _
        // Predicated region
        $region37: #{tpu_custom_call.1} parent=11 // pred_check
          %p318 = pneg %p196
        $region38: #{tpu_custom_call.1} parent=11 // pred_check_branch
          %320 = sbr.rel (%p318) target = $region40
        $region39: #{tpu_custom_call.1} parent=11 // pred_region
          _
        $region40: #{tpu_custom_call.1} parent=11 // pred_fallthru
          _
        // Predicated region
        $region41: #{tpu_custom_call.1} parent=11 // pred_check
          %p321 = pneg %p217
        $region42: #{tpu_custom_call.1} parent=11 // pred_check_branch
          %323 = sbr.rel (%p321) target = $region44
        $region43: #{tpu_custom_call.1} parent=11 // pred_region
          _
        $region44: #{tpu_custom_call.1} parent=11 // pred_fallthru
          _
        // Predicated region
        $region45: #{tpu_custom_call.1} parent=11 // pred_check
          %p324 = pneg %p238
        $region46: #{tpu_custom_call.1} parent=11 // pred_check_branch
          %326 = sbr.rel (%p324) target = $region48
        $region47: #{tpu_custom_call.1} parent=11 // pred_region
          _
        $region48: #{tpu_custom_call.1} parent=11 // pred_fallthru
          _
        // Predicated region
        $region49: #{tpu_custom_call.1} parent=11 // pred_check
          %p327 = pneg %p259
        $region50: #{tpu_custom_call.1} parent=11 // pred_check_branch
          %329 = sbr.rel (%p327) target = $region52
        $region51: #{tpu_custom_call.1} parent=11 // pred_region
          _
        $region52: #{tpu_custom_call.1} parent=11 // pred_fallthru
          _
      $region12: #{tpu_custom_call.1} parent=5 // pred_fallthru
        _
      %p330 = scmp.lt.s32.totalorder %s23, 2
      // Predicated region
      $region53: #{tpu_custom_call.1} parent=5 // pred_check
        %p331 = pneg %p330
      $region54: #{tpu_custom_call.1} parent=5 // pred_check_branch
        %333 = sbr.rel (%p331) target = $region56
      $region55: #{tpu_custom_call.1} parent=5 // pred_region
        // Predicated region
        $region57: #{tpu_custom_call.1} parent=55 // pred_check
          %p334 = pneg %p43
        $region58: #{tpu_custom_call.1} parent=55 // pred_check_branch
          %336 = sbr.rel (%p334) target = $region60
        $region59: #{tpu_custom_call.1} parent=55 // pred_region
          %s337 = sand.u32 %s33, 1
          %s338 = scalar_lea.sflag [#allocation3], %s337
          %s339 = sand.u32 %s33, 1
          %s340 = smul.addr %s339, 8
          %s341 = scalar_lea.vmem [#allocation2], %s340
          %s343 = ssub.s32 128, 128
          %344 = vsyncadd %s338, %s343
          %s345 = smul.addr %s23, 128
          %s346 = scalar_lea.hbm %s0, %s345
          %s348 = sshll.u32 %s341, 4
          %s349 = int_to_ptr.vmem [resolvable:$true] %s348
          %351 = dma.hbm_to_vmem [thread:$0]  %s346, 128, %s349, %s338
        $region60: #{tpu_custom_call.1} parent=55 // pred_fallthru
          _
      $region56: #{tpu_custom_call.1} parent=5 // pred_fallthru
        _
      %p352 = scmp.le.s32.totalorder 1, %s23
      %p353 = scmp.lt.s32.totalorder %s23, 3
      %p354 = pnand %p352, %p353
      %p355 = pneg %p354
      // Predicated region
      $region61: #{tpu_custom_call.1} parent=5 // pred_check
        _
      $region62: #{tpu_custom_call.1} parent=5 // pred_check_branch
        %357 = sbr.rel (%p354) target = $region64
      $region63: #{tpu_custom_call.1} parent=5 // pred_region
        %s358 = ssub.s32 %s23, 1
        %s359 = sand.u32 %s36, 1
        %s360 = scalar_lea.sflag [#allocation3], %s359
        %s361 = sand.u32 %s36, 1
        %s362 = smul.addr %s361, 8
        %s363 = scalar_lea.vmem [#allocation2], %s362
        // Predicated region
        $region65: #{tpu_custom_call.1} parent=63 // pred_check
          %p364 = pneg %p49
        $region66: #{tpu_custom_call.1} parent=63 // pred_check_branch
          %366 = sbr.rel (%p364) target = $region68
        $region67: #{tpu_custom_call.1} parent=63 // pred_region
          %367 = dma.done %s360, 128
        $region68: #{tpu_custom_call.1} parent=63 // pred_fallthru
          _
        %s368 = sand.u32 %s36, 1
        %s369 = scalar_lea.sflag [#allocation3], %s368
        %s370 = sand.u32 %s36, 1
        %s371 = smul.addr %s370, 8
        %s372 = scalar_lea.vmem [#allocation2], %s371
        %p373 = pneg %p49
        %p374 = pneg %p46
        %p375 = pneg %p70
        %p376 = pneg %p67
        %p377 = pneg %p91
        %p378 = pneg %p88
        %p379 = pneg %p112
        %p380 = pneg %p109
        %p381 = pneg %p133
        %p382 = pneg %p130
        %p383 = pneg %p154
        %p384 = pneg %p151
        %p385 = pneg %p175
        %p386 = pneg %p172
        %p387 = pneg %p196
        %p388 = pneg %p193
        %p389 = pneg %p217
        %p390 = pneg %p214
        %p391 = pneg %p238
        %p392 = pneg %p235
        %p393 = pneg %p259
        %p394 = pneg %p256
        %p395 = pneg %p285
        %p396 = pneg %p282
        %s397 = sand.u32 %s272, 1
        %s398 = scalar_lea.sflag [#allocation4], %s397
        %s399 = sand.u32 %s272, 1
        %s400 = smul.addr %s399, 8
        %s401 = scalar_lea.vmem [#allocation5], %s400
        %v402 = vld [vmem:[%s363] sm:$0xff]
        %vm403 = vcmask 261120
        %v404 = vsel %vm403, %v402, 0.0
        %405 = vadd.xlane.f32.xlu0 %v404
        %v406 = vpop.xlane.xlu0 %405
        %v407 = vrcp.pop 32.0
        %v408 = vmul.f32 %v406, %v407
        %v409 = vsub.f32 %v402, %v408
        %v410 = vmul.f32 %v409, %v409
        %v411 = vsel %vm403, %v410, 0.0
        %412 = vadd.xlane.f32.xlu0 %v411
        %v413 = vpop.xlane.xlu0 %412
        %v414 = vmul.f32 %v413, %v407
        %v415 = vadd.f32 %v414, 1e-05
        %v416 = vrsqrt.pop %v415
        %v417 = vmul.f32 %v409, %v416
        %v418 = vld [vmem:[%s1] sm:$0x1]
        %v420 = vlaneseq
        %v421 = vshrl.u32 %v420, 7
        %v422 = vsub.s32 0, %v421
        %v423 = vrot.slane %v418, %v422
        %v425 = vmul.f32 %v417, %v423
        %v426 = vld [vmem:[%s2] sm:$0x1]
        %v428 = vlaneseq
        %v429 = vshrl.u32 %v428, 7
        %v430 = vsub.s32 0, %v429
        %v431 = vrot.slane %v426, %v430
        %v433 = vadd.f32 %v425, %v431
        %v434 = vld [vmem:[%s3] sm:$0xff]
        %v435 = vld [vmem:[%s3 + $0x8] sm:$0xff]
        %v436 = vld [vmem:[%s3 + $0x10] sm:$0xff]
        %v437 = vld [vmem:[%s3 + $0x18] sm:$0xff]
        %v438 = vld [vmem:[%s4] sm:$0x1]
        %v440 = vlaneseq
        %v441 = vshrl.u32 %v440, 7
        %v442 = vsub.s32 0, %v441
        %v443 = vrot.slane %v438, %v442
        %v446 = vsel %vm403, %v433, 0
        %448 = vmatprep.subr.mxu0 0.0
        %449 = vmatpush1.msra.mxu0 0.0
        %450 = vmatprep.subr.mxu0 0.0
        %451 = vmatpush1.msra.mxu0 0.0
        %452 = vmatprep.subr.mxu0 0.0
        %453 = vmatpush1.msra.mxu0 0.0
        %454 = vmatprep.subr.mxu0 0.0
        %455 = vmatpush1.msra.mxu0 0.0
        %456 = vmatprep.subr.mxu0 0.0
        %457 = vmatpush1.msra.mxu0 0.0
        %458 = vmatprep.subr.mxu0 0.0
        %459 = vmatpush1.msra.mxu0 0.0
        %460 = vmatprep.subr.mxu0 0.0
        %461 = vmatpush1.msra.mxu0 0.0
        %462 = vmatprep.subr.mxu0 0.0
        %463 = vmatpush1.msra.mxu0 0.0
        %464 = vmatprep.subr.mxu0 0.0
        %465 = vmatpush1.msra.mxu0 0.0
        %466 = vmatprep.subr.mxu0 0.0
        %467 = vmatpush1.msra.mxu0 0.0
        %468 = vmatprep.subr.mxu0 0.0
        %469 = vmatpush1.msra.mxu0 0.0
        %470 = vmatprep.subr.mxu0 0.0
        %471 = vmatpush1.msra.mxu0 0.0
        %472 = vmatprep.subr.mxu0 0.0
        %473 = vmatpush1.msra.mxu0 %v437
        %474 = vmatprep.subr.mxu0 0.0
        %475 = vmatpush1.msra.mxu0 %v436
        %476 = vmatprep.subr.mxu0 0.0
        %477 = vmatpush1.msra.mxu0 %v435
        %478 = vmatprep.subr.mxu0 0.0
        %479 = vmatpush1.msra.mxu0 %v434
        %480 = vmatprep.subr.mxu0 0.0
        %481 = vmatpush2.msra.mxu0 0.0
        %482 = vmatprep.subr.mxu0 0.0
        %483 = vmatpush2.msra.mxu0 0.0
        %484 = vmatprep.subr.mxu0 0.0
        %485 = vmatpush2.msra.mxu0 0.0
        %486 = vmatprep.subr.mxu0 0.0
        %487 = vmatpush2.msra.mxu0 0.0
        %488 = vmatprep.subr.mxu0 0.0
        %489 = vmatpush2.msra.mxu0 0.0
        %490 = vmatprep.subr.mxu0 0.0
        %491 = vmatpush2.msra.mxu0 0.0
        %492 = vmatprep.subr.mxu0 0.0
        %493 = vmatpush2.msra.mxu0 0.0
        %494 = vmatprep.subr.mxu0 0.0
        %495 = vmatpush2.msra.mxu0 0.0
        %496 = vmatprep.subr.mxu0 0.0
        %497 = vmatpush2.msra.mxu0 0.0
        %498 = vmatprep.subr.mxu0 0.0
        %499 = vmatpush2.msra.mxu0 0.0
        %500 = vmatprep.subr.mxu0 0.0
        %501 = vmatpush2.msra.mxu0 0.0
        %502 = vmatprep.subr.mxu0 0.0
        %503 = vmatpush2.msra.mxu0 0.0
        %504 = vmatprep.subr.mxu0 0.0
        %505 = vmatpush2.msra.mxu0 0.0
        %506 = vmatprep.subr.mxu0 0.0
        %507 = vmatpush2.msra.mxu0 0.0
        %508 = vmatprep.subr.mxu0 0.0
        %509 = vmatpush2.msra.mxu0 0.0
        %510 = vmatprep.subr.mxu0 0.0
        %511 = vmatpush2.msra.mxu0 0.0
        %512 = vmatprep.mubr.f32.mxu0 0.0
        %513 = vmatmul.mubr.f32.gmra.mxu0 %v446
        %v514 = vpop.f32.mrf.mxu0
        %v515 = vadd.f32 %v443, %v514
        %v516 = vpop.f32.mrf.mxu0
        %517 = vdwg.mxu0
        %519 = vrot.lane.b32.xlu0 %v515, 120
        %v520 = vpop.permute.xlu0 %519
        %522 = vrot.lane.b32.xlu0 %v515, 112
        %v523 = vpop.permute.xlu0 %522
        %525 = vrot.lane.b32.xlu0 %v515, 104
        %v526 = vpop.permute.xlu0 %525
        %v528 = vcombine.low %v515, %v523
        %v529 = vcombine.high %v515, %v523
        %v531 = vunpack.c.l.s4 1983009808
        %v532 = vunpack.c.0.s8 %v531
        %v533 = vlaneseq
        %v534 = vshrl.u32 %v533, 7
        %v535 = vsub.s32 %v532, %v534
        %v536 = vrot.slane %v528, %v535
        %v538 = vunpack.c.l.s4 1983009808
        %v539 = vunpack.c.0.s8 %v538
        %v540 = vlaneseq
        %v541 = vshrl.u32 %v540, 7
        %v542 = vsub.s32 %v539, %v541
        %v543 = vrot.slane %v529, %v542
        %v544 = vcombine.low %v520, %v526
        %v545 = vcombine.high %v520, %v526
        %v547 = vunpack.c.l.s4 1983009808
        %v548 = vunpack.c.0.s8 %v547
        %v549 = vlaneseq
        %v550 = vshrl.u32 %v549, 7
        %v551 = vsub.s32 %v548, %v550
        %v552 = vrot.slane %v544, %v551
        %v554 = vunpack.c.l.s4 1983009808
        %v555 = vunpack.c.0.s8 %v554
        %v556 = vlaneseq
        %v557 = vshrl.u32 %v556, 7
        %v558 = vsub.s32 %v555, %v557
        %v559 = vrot.slane %v545, %v558
        %v560 = vcombine.low %v536, %v552
        %v561 = vcombine.high %v536, %v552
        %v563 = vunpack.c.l.s4 1934713408
        %v564 = vunpack.c.0.s8 %v563
        %v565 = vlaneseq
        %v566 = vshrl.u32 %v565, 7
        %v567 = vsub.s32 %v564, %v566
        %v568 = vrot.slane %v560, %v567
        %v570 = vunpack.c.l.s4 1934713408
        %v571 = vunpack.c.0.s8 %v570
        %v572 = vlaneseq
        %v573 = vshrl.u32 %v572, 7
        %v574 = vsub.s32 %v571, %v573
        %v575 = vrot.slane %v561, %v574
        %v576 = vcombine.low %v543, %v559
        %v577 = vcombine.high %v543, %v559
        %v579 = vunpack.c.l.s4 1934713408
        %v580 = vunpack.c.0.s8 %v579
        %v581 = vlaneseq
        %v582 = vshrl.u32 %v581, 7
        %v583 = vsub.s32 %v580, %v582
        %v584 = vrot.slane %v576, %v583
        %v586 = vunpack.c.l.s4 1934713408
        %v587 = vunpack.c.0.s8 %v586
        %v588 = vlaneseq
        %v589 = vshrl.u32 %v588, 7
        %v590 = vsub.s32 %v587, %v589
        %v591 = vrot.slane %v577, %v590
        %v592 = vcombine.high %v568, 0.0
        %v593 = vcombine.high %v575, 0.0
        %v594 = vcombine.high %v584, 0.0
        %v595 = vcombine.high %v591, 0.0
        %v596 = vcombine.low %v568, %v575
        %v598 = vunpack.c.l.s4 1983009808
        %v599 = vunpack.c.0.s8 %v598
        %v600 = vlaneseq
        %v601 = vshrl.u32 %v600, 7
        %v602 = vsub.s32 %v599, %v601
        %v603 = vrot.slane %v596, %v602
        %v604 = vcombine.low %v592, %v593
        %v606 = vunpack.c.l.s4 1983009808
        %v607 = vunpack.c.0.s8 %v606
        %v608 = vlaneseq
        %v609 = vshrl.u32 %v608, 7
        %v610 = vsub.s32 %v607, %v609
        %v611 = vrot.slane %v604, %v610
        %v612 = vcombine.low %v584, %v591
        %v614 = vunpack.c.l.s4 1983009808
        %v615 = vunpack.c.0.s8 %v614
        %v616 = vlaneseq
        %v617 = vshrl.u32 %v616, 7
        %v618 = vsub.s32 %v615, %v617
        %v619 = vrot.slane %v612, %v618
        %v620 = vcombine.low %v594, %v595
        %v622 = vunpack.c.l.s4 1983009808
        %v623 = vunpack.c.0.s8 %v622
        %v624 = vlaneseq
        %v625 = vshrl.u32 %v624, 7
        %v626 = vsub.s32 %v623, %v625
        %v627 = vrot.slane %v620, %v626
        %v628 = vcombine.low %v603, %v611
        %v629 = vcombine.high %v603, %v611
        %v631 = vunpack.c.l.s4 1934713408
        %v632 = vunpack.c.0.s8 %v631
        %v633 = vlaneseq
        %v634 = vshrl.u32 %v633, 7
        %v635 = vsub.s32 %v632, %v634
        %v636 = vrot.slane %v628, %v635
        %v638 = vunpack.c.l.s4 1934713408
        %v639 = vunpack.c.0.s8 %v638
        %v640 = vlaneseq
        %v641 = vshrl.u32 %v640, 7
        %v642 = vsub.s32 %v639, %v641
        %v643 = vrot.slane %v629, %v642
        %v644 = vcombine.low %v619, %v627
        %v645 = vcombine.high %v619, %v627
        %v647 = vunpack.c.l.s4 1934713408
        %v648 = vunpack.c.0.s8 %v647
        %v649 = vlaneseq
        %v650 = vshrl.u32 %v649, 7
        %v651 = vsub.s32 %v648, %v650
        %v652 = vrot.slane %v644, %v651
        %v654 = vunpack.c.l.s4 1934713408
        %v655 = vunpack.c.0.s8 %v654
        %v656 = vlaneseq
        %v657 = vshrl.u32 %v656, 7
        %v658 = vsub.s32 %v655, %v657
        %v659 = vrot.slane %v645, %v658
        %v660 = vcombine.low %v636, %v652
        %v661 = vcombine.high %v636, %v652
        %v662 = vcombine.low %v643, %v659
        %v663 = vcombine.high %v643, %v659
        %664 = vrot.lane.b32.xlu0 %v515, 96
        %v665 = vpop.permute.xlu0 %664
        %666 = vrot.lane.b32.xlu0 %v520, 96
        %v667 = vpop.permute.xlu0 %666
        %668 = vrot.lane.b32.xlu0 %v523, 96
        %v669 = vpop.permute.xlu0 %668
        %670 = vrot.lane.b32.xlu0 %v526, 96
        %v671 = vpop.permute.xlu0 %670
        %v676 = vcombine.low %v665, %v669
        %v677 = vcombine.high %v665, %v669
        %v679 = vunpack.c.l.s4 1983009808
        %v680 = vunpack.c.0.s8 %v679
        %v681 = vlaneseq
        %v682 = vshrl.u32 %v681, 7
        %v683 = vsub.s32 %v680, %v682
        %v684 = vrot.slane %v676, %v683
        %v686 = vunpack.c.l.s4 1983009808
        %v687 = vunpack.c.0.s8 %v686
        %v688 = vlaneseq
        %v689 = vshrl.u32 %v688, 7
        %v690 = vsub.s32 %v687, %v689
        %v691 = vrot.slane %v677, %v690
        %v692 = vcombine.low %v667, %v671
        %v693 = vcombine.high %v667, %v671
        %v695 = vunpack.c.l.s4 1983009808
        %v696 = vunpack.c.0.s8 %v695
        %v697 = vlaneseq
        %v698 = vshrl.u32 %v697, 7
        %v699 = vsub.s32 %v696, %v698
        %v700 = vrot.slane %v692, %v699
        %v702 = vunpack.c.l.s4 1983009808
        %v703 = vunpack.c.0.s8 %v702
        %v704 = vlaneseq
        %v705 = vshrl.u32 %v704, 7
        %v706 = vsub.s32 %v703, %v705
        %v707 = vrot.slane %v693, %v706
        %v708 = vcombine.low %v684, %v700
        %v709 = vcombine.high %v684, %v700
        %v711 = vunpack.c.l.s4 1934713408
        %v712 = vunpack.c.0.s8 %v711
        %v713 = vlaneseq
        %v714 = vshrl.u32 %v713, 7
        %v715 = vsub.s32 %v712, %v714
        %v716 = vrot.slane %v708, %v715
        %v718 = vunpack.c.l.s4 1934713408
        %v719 = vunpack.c.0.s8 %v718
        %v720 = vlaneseq
        %v721 = vshrl.u32 %v720, 7
        %v722 = vsub.s32 %v719, %v721
        %v723 = vrot.slane %v709, %v722
        %v724 = vcombine.low %v691, %v707
        %v725 = vcombine.high %v691, %v707
        %v727 = vunpack.c.l.s4 1934713408
        %v728 = vunpack.c.0.s8 %v727
        %v729 = vlaneseq
        %v730 = vshrl.u32 %v729, 7
        %v731 = vsub.s32 %v728, %v730
        %v732 = vrot.slane %v724, %v731
        %v734 = vunpack.c.l.s4 1934713408
        %v735 = vunpack.c.0.s8 %v734
        %v736 = vlaneseq
        %v737 = vshrl.u32 %v736, 7
        %v738 = vsub.s32 %v735, %v737
        %v739 = vrot.slane %v725, %v738
        %v740 = vcombine.high %v716, 0.0
        %v741 = vcombine.high %v723, 0.0
        %v742 = vcombine.high %v732, 0.0
        %v743 = vcombine.high %v739, 0.0
        %v744 = vcombine.low %v716, %v723
        %v746 = vunpack.c.l.s4 1983009808
        %v747 = vunpack.c.0.s8 %v746
        %v748 = vlaneseq
        %v749 = vshrl.u32 %v748, 7
        %v750 = vsub.s32 %v747, %v749
        %v751 = vrot.slane %v744, %v750
        %v752 = vcombine.low %v740, %v741
        %v754 = vunpack.c.l.s4 1983009808
        %v755 = vunpack.c.0.s8 %v754
        %v756 = vlaneseq
        %v757 = vshrl.u32 %v756, 7
        %v758 = vsub.s32 %v755, %v757
        %v759 = vrot.slane %v752, %v758
        %v760 = vcombine.low %v732, %v739
        %v762 = vunpack.c.l.s4 1983009808
        %v763 = vunpack.c.0.s8 %v762
        %v764 = vlaneseq
        %v765 = vshrl.u32 %v764, 7
        %v766 = vsub.s32 %v763, %v765
        %v767 = vrot.slane %v760, %v766
        %v768 = vcombine.low %v742, %v743
        %v770 = vunpack.c.l.s4 1983009808
        %v771 = vunpack.c.0.s8 %v770
        %v772 = vlaneseq
        %v773 = vshrl.u32 %v772, 7
        %v774 = vsub.s32 %v771, %v773
        %v775 = vrot.slane %v768, %v774
        %v776 = vcombine.low %v751, %v759
        %v777 = vcombine.high %v751, %v759
        %v779 = vunpack.c.l.s4 1934713408
        %v780 = vunpack.c.0.s8 %v779
        %v781 = vlaneseq
        %v782 = vshrl.u32 %v781, 7
        %v783 = vsub.s32 %v780, %v782
        %v784 = vrot.slane %v776, %v783
        %v786 = vunpack.c.l.s4 1934713408
        %v787 = vunpack.c.0.s8 %v786
        %v788 = vlaneseq
        %v789 = vshrl.u32 %v788, 7
        %v790 = vsub.s32 %v787, %v789
        %v791 = vrot.slane %v777, %v790
        %v792 = vcombine.low %v767, %v775
        %v793 = vcombine.high %v767, %v775
        %v795 = vunpack.c.l.s4 1934713408
        %v796 = vunpack.c.0.s8 %v795
        %v797 = vlaneseq
        %v798 = vshrl.u32 %v797, 7
        %v799 = vsub.s32 %v796, %v798
        %v800 = vrot.slane %v792, %v799
        %v802 = vunpack.c.l.s4 1934713408
        %v803 = vunpack.c.0.s8 %v802
        %v804 = vlaneseq
        %v805 = vshrl.u32 %v804, 7
        %v806 = vsub.s32 %v803, %v805
        %v807 = vrot.slane %v793, %v806
        %v808 = vcombine.low %v784, %v800
        %v809 = vcombine.high %v784, %v800
        %v810 = vcombine.low %v791, %v807
        %v811 = vcombine.high %v791, %v807
        %812 = vrot.lane.b32.xlu0 %v515, 64
        %v813 = vpop.permute.xlu0 %812
        %814 = vrot.lane.b32.xlu0 %v520, 64
        %v815 = vpop.permute.xlu0 %814
        %816 = vrot.lane.b32.xlu0 %v523, 64
        %v817 = vpop.permute.xlu0 %816
        %818 = vrot.lane.b32.xlu0 %v526, 64
        %v819 = vpop.permute.xlu0 %818
        %v824 = vcombine.low %v813, %v817
        %v825 = vcombine.high %v813, %v817
        %v827 = vunpack.c.l.s4 1983009808
        %v828 = vunpack.c.0.s8 %v827
        %v829 = vlaneseq
        %v830 = vshrl.u32 %v829, 7
        %v831 = vsub.s32 %v828, %v830
        %v832 = vrot.slane %v824, %v831
        %v834 = vunpack.c.l.s4 1983009808
        %v835 = vunpack.c.0.s8 %v834
        %v836 = vlaneseq
        %v837 = vshrl.u32 %v836, 7
        %v838 = vsub.s32 %v835, %v837
        %v839 = vrot.slane %v825, %v838
        %v840 = vcombine.low %v815, %v819
        %v841 = vcombine.high %v815, %v819
        %v843 = vunpack.c.l.s4 1983009808
        %v844 = vunpack.c.0.s8 %v843
        %v845 = vlaneseq
        %v846 = vshrl.u32 %v845, 7
        %v847 = vsub.s32 %v844, %v846
        %v848 = vrot.slane %v840, %v847
        %v850 = vunpack.c.l.s4 1983009808
        %v851 = vunpack.c.0.s8 %v850
        %v852 = vlaneseq
        %v853 = vshrl.u32 %v852, 7
        %v854 = vsub.s32 %v851, %v853
        %v855 = vrot.slane %v841, %v854
        %v856 = vcombine.low %v832, %v848
        %v857 = vcombine.high %v832, %v848
        %v859 = vunpack.c.l.s4 1934713408
        %v860 = vunpack.c.0.s8 %v859
        %v861 = vlaneseq
        %v862 = vshrl.u32 %v861, 7
        %v863 = vsub.s32 %v860, %v862
        %v864 = vrot.slane %v856, %v863
        %v866 = vunpack.c.l.s4 1934713408
        %v867 = vunpack.c.0.s8 %v866
        %v868 = vlaneseq
        %v869 = vshrl.u32 %v868, 7
        %v870 = vsub.s32 %v867, %v869
        %v871 = vrot.slane %v857, %v870
        %v872 = vcombine.low %v839, %v855
        %v873 = vcombine.high %v839, %v855
        %v875 = vunpack.c.l.s4 1934713408
        %v876 = vunpack.c.0.s8 %v875
        %v877 = vlaneseq
        %v878 = vshrl.u32 %v877, 7
        %v879 = vsub.s32 %v876, %v878
        %v880 = vrot.slane %v872, %v879
        %v882 = vunpack.c.l.s4 1934713408
        %v883 = vunpack.c.0.s8 %v882
        %v884 = vlaneseq
        %v885 = vshrl.u32 %v884, 7
        %v886 = vsub.s32 %v883, %v885
        %v887 = vrot.slane %v873, %v886
        %v888 = vcombine.high %v864, 0.0
        %v889 = vcombine.high %v871, 0.0
        %v890 = vcombine.high %v880, 0.0
        %v891 = vcombine.high %v887, 0.0
        %v892 = vcombine.low %v864, %v871
        %v894 = vunpack.c.l.s4 1983009808
        %v895 = vunpack.c.0.s8 %v894
        %v896 = vlaneseq
        %v897 = vshrl.u32 %v896, 7
        %v898 = vsub.s32 %v895, %v897
        %v899 = vrot.slane %v892, %v898
        %v900 = vcombine.low %v888, %v889
        %v902 = vunpack.c.l.s4 1983009808
        %v903 = vunpack.c.0.s8 %v902
        %v904 = vlaneseq
        %v905 = vshrl.u32 %v904, 7
        %v906 = vsub.s32 %v903, %v905
        %v907 = vrot.slane %v900, %v906
        %v908 = vcombine.low %v880, %v887
        %v910 = vunpack.c.l.s4 1983009808
        %v911 = vunpack.c.0.s8 %v910
        %v912 = vlaneseq
        %v913 = vshrl.u32 %v912, 7
        %v914 = vsub.s32 %v911, %v913
        %v915 = vrot.slane %v908, %v914
        %v916 = vcombine.low %v890, %v891
        %v918 = vunpack.c.l.s4 1983009808
        %v919 = vunpack.c.0.s8 %v918
        %v920 = vlaneseq
        %v921 = vshrl.u32 %v920, 7
        %v922 = vsub.s32 %v919, %v921
        %v923 = vrot.slane %v916, %v922
        %v924 = vcombine.low %v899, %v907
        %v925 = vcombine.high %v899, %v907
        %v927 = vunpack.c.l.s4 1934713408
        %v928 = vunpack.c.0.s8 %v927
        %v929 = vlaneseq
        %v930 = vshrl.u32 %v929, 7
        %v931 = vsub.s32 %v928, %v930
        %v932 = vrot.slane %v924, %v931
        %v934 = vunpack.c.l.s4 1934713408
        %v935 = vunpack.c.0.s8 %v934
        %v936 = vlaneseq
        %v937 = vshrl.u32 %v936, 7
        %v938 = vsub.s32 %v935, %v937
        %v939 = vrot.slane %v925, %v938
        %v940 = vcombine.low %v915, %v923
        %v941 = vcombine.high %v915, %v923
        %v943 = vunpack.c.l.s4 1934713408
        %v944 = vunpack.c.0.s8 %v943
        %v945 = vlaneseq
        %v946 = vshrl.u32 %v945, 7
        %v947 = vsub.s32 %v944, %v946
        %v948 = vrot.slane %v940, %v947
        %v950 = vunpack.c.l.s4 1934713408
        %v951 = vunpack.c.0.s8 %v950
        %v952 = vlaneseq
        %v953 = vshrl.u32 %v952, 7
        %v954 = vsub.s32 %v951, %v953
        %v955 = vrot.slane %v941, %v954
        %v956 = vcombine.low %v932, %v948
        %v957 = vcombine.high %v932, %v948
        %v958 = vcombine.low %v939, %v955
        %v959 = vcombine.high %v939, %v955
        %vm960 = vcmask 64512
        %v962 = vsel %vm960, %v660, 0
        %v965 = vsel %vm960, %v808, 0
        %967 = vmatprep.subr.mxu0 0.0
        %968 = vmatpush1.xpose.msra.mxu0 0.0
        %969 = vmatprep.subr.mxu0 0.0
        %970 = vmatpush1.xpose.msra.mxu0 0.0
        %971 = vmatprep.subr.mxu0 0.0
        %972 = vmatpush1.xpose.msra.mxu0 0.0
        %973 = vmatprep.subr.mxu0 0.0
        %974 = vmatpush1.xpose.msra.mxu0 0.0
        %975 = vmatprep.subr.mxu0 0.0
        %976 = vmatpush1.xpose.msra.mxu0 0.0
        %977 = vmatprep.subr.mxu0 0.0
        %978 = vmatpush1.xpose.msra.mxu0 0.0
        %979 = vmatprep.subr.mxu0 0.0
        %980 = vmatpush1.xpose.msra.mxu0 0.0
        %981 = vmatprep.subr.mxu0 0.0
        %982 = vmatpush1.xpose.msra.mxu0 0.0
        %983 = vmatprep.subr.mxu0 0.0
        %984 = vmatpush1.xpose.msra.mxu0 0.0
        %985 = vmatprep.subr.mxu0 0.0
        %986 = vmatpush1.xpose.msra.mxu0 0.0
        %987 = vmatprep.subr.mxu0 0.0
        %988 = vmatpush1.xpose.msra.mxu0 0.0
        %989 = vmatprep.subr.mxu0 0.0
        %990 = vmatpush1.xpose.msra.mxu0 0.0
        %991 = vmatprep.subr.mxu0 0.0
        %992 = vmatpush1.xpose.msra.mxu0 0.0
        %993 = vmatprep.subr.mxu0 0.0
        %994 = vmatpush1.xpose.msra.mxu0 0.0
        %995 = vmatprep.subr.mxu0 0.0
        %996 = vmatpush1.xpose.msra.mxu0 0.0
        %997 = vmatprep.subr.mxu0 0.0
        %998 = vmatpush1.xpose.msra.mxu0 %v965
        %999 = vmatprep.subr.mxu0 0.0
        %1000 = vmatpush2.xpose.msra.mxu0 0.0
        %1001 = vmatprep.subr.mxu0 0.0
        %1002 = vmatpush2.xpose.msra.mxu0 0.0
        %1003 = vmatprep.subr.mxu0 0.0
        %1004 = vmatpush2.xpose.msra.mxu0 0.0
        %1005 = vmatprep.subr.mxu0 0.0
        %1006 = vmatpush2.xpose.msra.mxu0 0.0
        %1007 = vmatprep.subr.mxu0 0.0
        %1008 = vmatpush2.xpose.msra.mxu0 0.0
        %1009 = vmatprep.subr.mxu0 0.0
        %1010 = vmatpush2.xpose.msra.mxu0 0.0
        %1011 = vmatprep.subr.mxu0 0.0
        %1012 = vmatpush2.xpose.msra.mxu0 0.0
        %1013 = vmatprep.subr.mxu0 0.0
        %1014 = vmatpush2.xpose.msra.mxu0 0.0
        %1015 = vmatprep.subr.mxu0 0.0
        %1016 = vmatpush2.xpose.msra.mxu0 0.0
        %1017 = vmatprep.subr.mxu0 0.0
        %1018 = vmatpush2.xpose.msra.mxu0 0.0
        %1019 = vmatprep.subr.mxu0 0.0
        %1020 = vmatpush2.xpose.msra.mxu0 0.0
        %1021 = vmatprep.subr.mxu0 0.0
        %1022 = vmatpush2.xpose.msra.mxu0 0.0
        %1023 = vmatprep.subr.mxu0 0.0
        %1024 = vmatpush2.xpose.msra.mxu0 0.0
        %1025 = vmatprep.subr.mxu0 0.0
        %1026 = vmatpush2.xpose.msra.mxu0 0.0
        %1027 = vmatprep.subr.mxu0 0.0
        %1028 = vmatpush2.xpose.msra.mxu0 0.0
        %1029 = vmatprep.subr.mxu0 0.0
        %1030 = vmatpush2.xpose.msra.mxu0 0.0
        %1031 = vmatprep.mubr.f32.mxu0 0.0
        %1032 = vmatmul.mubr.f32.gmra.mxu0 %v962
        %v1033 = vpop.f32.mrf.mxu0
        %v1034 = vadd.f32 0.0, %v1033
        %v1035 = vpop.f32.mrf.mxu0
        %1036 = vdwg.mxu0
        %v1038 = vsel %vm960, %v661, 0
        %v1041 = vsel %vm960, %v809, 0
        %1043 = vmatprep.subr.mxu0 0.0
        %1044 = vmatpush1.xpose.msra.mxu0 0.0
        %1045 = vmatprep.subr.mxu0 0.0
        %1046 = vmatpush1.xpose.msra.mxu0 0.0
        %1047 = vmatprep.subr.mxu0 0.0
        %1048 = vmatpush1.xpose.msra.mxu0 0.0
        %1049 = vmatprep.subr.mxu0 0.0
        %1050 = vmatpush1.xpose.msra.mxu0 0.0
        %1051 = vmatprep.subr.mxu0 0.0
        %1052 = vmatpush1.xpose.msra.mxu0 0.0
        %1053 = vmatprep.subr.mxu0 0.0
        %1054 = vmatpush1.xpose.msra.mxu0 0.0
        %1055 = vmatprep.subr.mxu0 0.0
        %1056 = vmatpush1.xpose.msra.mxu0 0.0
        %1057 = vmatprep.subr.mxu0 0.0
        %1058 = vmatpush1.xpose.msra.mxu0 0.0
        %1059 = vmatprep.subr.mxu0 0.0
        %1060 = vmatpush1.xpose.msra.mxu0 0.0
        %1061 = vmatprep.subr.mxu0 0.0
        %1062 = vmatpush1.xpose.msra.mxu0 0.0
        %1063 = vmatprep.subr.mxu0 0.0
        %1064 = vmatpush1.xpose.msra.mxu0 0.0
        %1065 = vmatprep.subr.mxu0 0.0
        %1066 = vmatpush1.xpose.msra.mxu0 0.0
        %1067 = vmatprep.subr.mxu0 0.0
        %1068 = vmatpush1.xpose.msra.mxu0 0.0
        %1069 = vmatprep.subr.mxu0 0.0
        %1070 = vmatpush1.xpose.msra.mxu0 0.0
        %1071 = vmatprep.subr.mxu0 0.0
        %1072 = vmatpush1.xpose.msra.mxu0 0.0
        %1073 = vmatprep.subr.mxu0 0.0
        %1074 = vmatpush1.xpose.msra.mxu0 %v1041
        %1075 = vmatprep.subr.mxu0 0.0
        %1076 = vmatpush2.xpose.msra.mxu0 0.0
        %1077 = vmatprep.subr.mxu0 0.0
        %1078 = vmatpush2.xpose.msra.mxu0 0.0
        %1079 = vmatprep.subr.mxu0 0.0
        %1080 = vmatpush2.xpose.msra.mxu0 0.0
        %1081 = vmatprep.subr.mxu0 0.0
        %1082 = vmatpush2.xpose.msra.mxu0 0.0
        %1083 = vmatprep.subr.mxu0 0.0
        %1084 = vmatpush2.xpose.msra.mxu0 0.0
        %1085 = vmatprep.subr.mxu0 0.0
        %1086 = vmatpush2.xpose.msra.mxu0 0.0
        %1087 = vmatprep.subr.mxu0 0.0
        %1088 = vmatpush2.xpose.msra.mxu0 0.0
        %1089 = vmatprep.subr.mxu0 0.0
        %1090 = vmatpush2.xpose.msra.mxu0 0.0
        %1091 = vmatprep.subr.mxu0 0.0
        %1092 = vmatpush2.xpose.msra.mxu0 0.0
        %1093 = vmatprep.subr.mxu0 0.0
        %1094 = vmatpush2.xpose.msra.mxu0 0.0
        %1095 = vmatprep.subr.mxu0 0.0
        %1096 = vmatpush2.xpose.msra.mxu0 0.0
        %1097 = vmatprep.subr.mxu0 0.0
        %1098 = vmatpush2.xpose.msra.mxu0 0.0
        %1099 = vmatprep.subr.mxu0 0.0
        %1100 = vmatpush2.xpose.msra.mxu0 0.0
        %1101 = vmatprep.subr.mxu0 0.0
        %1102 = vmatpush2.xpose.msra.mxu0 0.0
        %1103 = vmatprep.subr.mxu0 0.0
        %1104 = vmatpush2.xpose.msra.mxu0 0.0
        %1105 = vmatprep.subr.mxu0 0.0
        %1106 = vmatpush2.xpose.msra.mxu0 0.0
        %1107 = vmatprep.mubr.f32.mxu0 0.0
        %1108 = vmatmul.mubr.f32.gmra.mxu0 %v1038
        %v1109 = vpop.f32.mrf.mxu0
        %v1110 = vadd.f32 0.0, %v1109
        %v1111 = vpop.f32.mrf.mxu0
        %1112 = vdwg.mxu0
        %v1114 = vsel %vm960, %v662, 0
        %v1117 = vsel %vm960, %v810, 0
        %1119 = vmatprep.subr.mxu0 0.0
        %1120 = vmatpush1.xpose.msra.mxu0 0.0
        %1121 = vmatprep.subr.mxu0 0.0
        %1122 = vmatpush1.xpose.msra.mxu0 0.0
        %1123 = vmatprep.subr.mxu0 0.0
        %1124 = vmatpush1.xpose.msra.mxu0 0.0
        %1125 = vmatprep.subr.mxu0 0.0
        %1126 = vmatpush1.xpose.msra.mxu0 0.0
        %1127 = vmatprep.subr.mxu0 0.0
        %1128 = vmatpush1.xpose.msra.mxu0 0.0
        %1129 = vmatprep.subr.mxu0 0.0
        %1130 = vmatpush1.xpose.msra.mxu0 0.0
        %1131 = vmatprep.subr.mxu0 0.0
        %1132 = vmatpush1.xpose.msra.mxu0 0.0
        %1133 = vmatprep.subr.mxu0 0.0
        %1134 = vmatpush1.xpose.msra.mxu0 0.0
        %1135 = vmatprep.subr.mxu0 0.0
        %1136 = vmatpush1.xpose.msra.mxu0 0.0
        %1137 = vmatprep.subr.mxu0 0.0
        %1138 = vmatpush1.xpose.msra.mxu0 0.0
        %1139 = vmatprep.subr.mxu0 0.0
        %1140 = vmatpush1.xpose.msra.mxu0 0.0
        %1141 = vmatprep.subr.mxu0 0.0
        %1142 = vmatpush1.xpose.msra.mxu0 0.0
        %1143 = vmatprep.subr.mxu0 0.0
        %1144 = vmatpush1.xpose.msra.mxu0 0.0
        %1145 = vmatprep.subr.mxu0 0.0
        %1146 = vmatpush1.xpose.msra.mxu0 0.0
        %1147 = vmatprep.subr.mxu0 0.0
        %1148 = vmatpush1.xpose.msra.mxu0 0.0
        %1149 = vmatprep.subr.mxu0 0.0
        %1150 = vmatpush1.xpose.msra.mxu0 %v1117
        %1151 = vmatprep.subr.mxu0 0.0
        %1152 = vmatpush2.xpose.msra.mxu0 0.0
        %1153 = vmatprep.subr.mxu0 0.0
        %1154 = vmatpush2.xpose.msra.mxu0 0.0
        %1155 = vmatprep.subr.mxu0 0.0
        %1156 = vmatpush2.xpose.msra.mxu0 0.0
        %1157 = vmatprep.subr.mxu0 0.0
        %1158 = vmatpush2.xpose.msra.mxu0 0.0
        %1159 = vmatprep.subr.mxu0 0.0
        %1160 = vmatpush2.xpose.msra.mxu0 0.0
        %1161 = vmatprep.subr.mxu0 0.0
        %1162 = vmatpush2.xpose.msra.mxu0 0.0
        %1163 = vmatprep.subr.mxu0 0.0
        %1164 = vmatpush2.xpose.msra.mxu0 0.0
        %1165 = vmatprep.subr.mxu0 0.0
        %1166 = vmatpush2.xpose.msra.mxu0 0.0
        %1167 = vmatprep.subr.mxu0 0.0
        %1168 = vmatpush2.xpose.msra.mxu0 0.0
        %1169 = vmatprep.subr.mxu0 0.0
        %1170 = vmatpush2.xpose.msra.mxu0 0.0
        %1171 = vmatprep.subr.mxu0 0.0
        %1172 = vmatpush2.xpose.msra.mxu0 0.0
        %1173 = vmatprep.subr.mxu0 0.0
        %1174 = vmatpush2.xpose.msra.mxu0 0.0
        %1175 = vmatprep.subr.mxu0 0.0
        %1176 = vmatpush2.xpose.msra.mxu0 0.0
        %1177 = vmatprep.subr.mxu0 0.0
        %1178 = vmatpush2.xpose.msra.mxu0 0.0
        %1179 = vmatprep.subr.mxu0 0.0
        %1180 = vmatpush2.xpose.msra.mxu0 0.0
        %1181 = vmatprep.subr.mxu0 0.0
        %1182 = vmatpush2.xpose.msra.mxu0 0.0
        %1183 = vmatprep.mubr.f32.mxu0 0.0
        %1184 = vmatmul.mubr.f32.gmra.mxu0 %v1114
        %v1185 = vpop.f32.mrf.mxu0
        %v1186 = vadd.f32 0.0, %v1185
        %v1187 = vpop.f32.mrf.mxu0
        %1188 = vdwg.mxu0
        %v1190 = vsel %vm960, %v663, 0
        %v1193 = vsel %vm960, %v811, 0
        %1195 = vmatprep.subr.mxu0 0.0
        %1196 = vmatpush1.xpose.msra.mxu0 0.0
        %1197 = vmatprep.subr.mxu0 0.0
        %1198 = vmatpush1.xpose.msra.mxu0 0.0
        %1199 = vmatprep.subr.mxu0 0.0
        %1200 = vmatpush1.xpose.msra.mxu0 0.0
        %1201 = vmatprep.subr.mxu0 0.0
        %1202 = vmatpush1.xpose.msra.mxu0 0.0
        %1203 = vmatprep.subr.mxu0 0.0
        %1204 = vmatpush1.xpose.msra.mxu0 0.0
        %1205 = vmatprep.subr.mxu0 0.0
        %1206 = vmatpush1.xpose.msra.mxu0 0.0
        %1207 = vmatprep.subr.mxu0 0.0
        %1208 = vmatpush1.xpose.msra.mxu0 0.0
        %1209 = vmatprep.subr.mxu0 0.0
        %1210 = vmatpush1.xpose.msra.mxu0 0.0
        %1211 = vmatprep.subr.mxu0 0.0
        %1212 = vmatpush1.xpose.msra.mxu0 0.0
        %1213 = vmatprep.subr.mxu0 0.0
        %1214 = vmatpush1.xpose.msra.mxu0 0.0
        %1215 = vmatprep.subr.mxu0 0.0
        %1216 = vmatpush1.xpose.msra.mxu0 0.0
        %1217 = vmatprep.subr.mxu0 0.0
        %1218 = vmatpush1.xpose.msra.mxu0 0.0
        %1219 = vmatprep.subr.mxu0 0.0
        %1220 = vmatpush1.xpose.msra.mxu0 0.0
        %1221 = vmatprep.subr.mxu0 0.0
        %1222 = vmatpush1.xpose.msra.mxu0 0.0
        %1223 = vmatprep.subr.mxu0 0.0
        %1224 = vmatpush1.xpose.msra.mxu0 0.0
        %1225 = vmatprep.subr.mxu0 0.0
        %1226 = vmatpush1.xpose.msra.mxu0 %v1193
        %1227 = vmatprep.subr.mxu0 0.0
        %1228 = vmatpush2.xpose.msra.mxu0 0.0
        %1229 = vmatprep.subr.mxu0 0.0
        %1230 = vmatpush2.xpose.msra.mxu0 0.0
        %1231 = vmatprep.subr.mxu0 0.0
        %1232 = vmatpush2.xpose.msra.mxu0 0.0
        %1233 = vmatprep.subr.mxu0 0.0
        %1234 = vmatpush2.xpose.msra.mxu0 0.0
        %1235 = vmatprep.subr.mxu0 0.0
        %1236 = vmatpush2.xpose.msra.mxu0 0.0
        %1237 = vmatprep.subr.mxu0 0.0
        %1238 = vmatpush2.xpose.msra.mxu0 0.0
        %1239 = vmatprep.subr.mxu0 0.0
        %1240 = vmatpush2.xpose.msra.mxu0 0.0
        %1241 = vmatprep.subr.mxu0 0.0
        %1242 = vmatpush2.xpose.msra.mxu0 0.0
        %1243 = vmatprep.subr.mxu0 0.0
        %1244 = vmatpush2.xpose.msra.mxu0 0.0
        %1245 = vmatprep.subr.mxu0 0.0
        %1246 = vmatpush2.xpose.msra.mxu0 0.0
        %1247 = vmatprep.subr.mxu0 0.0
        %1248 = vmatpush2.xpose.msra.mxu0 0.0
        %1249 = vmatprep.subr.mxu0 0.0
        %1250 = vmatpush2.xpose.msra.mxu0 0.0
        %1251 = vmatprep.subr.mxu0 0.0
        %1252 = vmatpush2.xpose.msra.mxu0 0.0
        %1253 = vmatprep.subr.mxu0 0.0
        %1254 = vmatpush2.xpose.msra.mxu0 0.0
        %1255 = vmatprep.subr.mxu0 0.0
        %1256 = vmatpush2.xpose.msra.mxu0 0.0
        %1257 = vmatprep.subr.mxu0 0.0
        %1258 = vmatpush2.xpose.msra.mxu0 0.0
        %1259 = vmatprep.mubr.f32.mxu0 0.0
        %1260 = vmatmul.mubr.f32.gmra.mxu0 %v1190
        %v1261 = vpop.f32.mrf.mxu0
        %v1262 = vadd.f32 0.0, %v1261
        %v1263 = vpop.f32.mrf.mxu0
        %1264 = vdwg.mxu0
        %v1265 = vsel %vm960, %v1034, -inf
        %1266 = vmax.xlane.f32.xlu0 %v1265
        %v1267 = vpop.xlane.xlu0 %1266
        %v1268 = vsel %vm960, %v1110, -inf
        %1269 = vmax.xlane.f32.xlu0 %v1268
        %v1270 = vpop.xlane.xlu0 %1269
        %v1271 = vsel %vm960, %v1186, -inf
        %1272 = vmax.xlane.f32.xlu0 %v1271
        %v1273 = vpop.xlane.xlu0 %1272
        %v1274 = vsel %vm960, %v1262, -inf
        %1275 = vmax.xlane.f32.xlu0 %v1274
        %v1276 = vpop.xlane.xlu0 %1275
        %v1277 = vsub.f32 %v1034, %v1267
        %v1278 = vsub.f32 %v1110, %v1270
        %v1279 = vsub.f32 %v1186, %v1273
        %v1280 = vsub.f32 %v1262, %v1276
        %v1281 = vmul.f32 %v1277, 1.442695
        %v1282 = vpow.pop %v1281
        %v1283 = vmul.f32 %v1278, 1.442695
        %v1284 = vpow.pop %v1283
        %v1285 = vmul.f32 %v1279, 1.442695
        %v1286 = vpow.pop %v1285
        %v1287 = vmul.f32 %v1280, 1.442695
        %v1288 = vpow.pop %v1287
        %v1289 = vsel %vm960, %v1282, 0.0
        %1290 = vadd.xlane.f32.xlu0 %v1289
        %v1291 = vpop.xlane.xlu0 %1290
        %v1292 = vsel %vm960, %v1284, 0.0
        %1293 = vadd.xlane.f32.xlu0 %v1292
        %v1294 = vpop.xlane.xlu0 %1293
        %v1295 = vsel %vm960, %v1286, 0.0
        %1296 = vadd.xlane.f32.xlu0 %v1295
        %v1297 = vpop.xlane.xlu0 %1296
        %v1298 = vsel %vm960, %v1288, 0.0
        %1299 = vadd.xlane.f32.xlu0 %v1298
        %v1300 = vpop.xlane.xlu0 %1299
        %v1301 = vrcp.pop %v1291
        %v1302 = vrcp.pop %v1294
        %v1303 = vrcp.pop %v1297
        %v1304 = vrcp.pop %v1300
        %v1305 = vmul.f32 %v1282, %v1301
        %v1306 = vmul.f32 %v1284, %v1302
        %v1307 = vmul.f32 %v1286, %v1303
        %v1308 = vmul.f32 %v1288, %v1304
        %v1310 = vsel %vm960, %v1305, 0
        %1312 = vmatprep.subr.mxu0 0.0
        %1313 = vmatpush1.msra.mxu0 0.0
        %1314 = vmatprep.subr.mxu0 0.0
        %1315 = vmatpush1.msra.mxu0 0.0
        %1316 = vmatprep.subr.mxu0 0.0
        %1317 = vmatpush1.msra.mxu0 0.0
        %1318 = vmatprep.subr.mxu0 0.0
        %1319 = vmatpush1.msra.mxu0 0.0
        %1320 = vmatprep.subr.mxu0 0.0
        %1321 = vmatpush1.msra.mxu0 0.0
        %1322 = vmatprep.subr.mxu0 0.0
        %1323 = vmatpush1.msra.mxu0 0.0
        %1324 = vmatprep.subr.mxu0 0.0
        %1325 = vmatpush1.msra.mxu0 0.0
        %1326 = vmatprep.subr.mxu0 0.0
        %1327 = vmatpush1.msra.mxu0 0.0
        %1328 = vmatprep.subr.mxu0 0.0
        %1329 = vmatpush1.msra.mxu0 0.0
        %1330 = vmatprep.subr.mxu0 0.0
        %1331 = vmatpush1.msra.mxu0 0.0
        %1332 = vmatprep.subr.mxu0 0.0
        %1333 = vmatpush1.msra.mxu0 0.0
        %1334 = vmatprep.subr.mxu0 0.0
        %1335 = vmatpush1.msra.mxu0 0.0
        %1336 = vmatprep.subr.mxu0 0.0
        %1337 = vmatpush1.msra.mxu0 0.0
        %1338 = vmatprep.subr.mxu0 0.0
        %1339 = vmatpush1.msra.mxu0 0.0
        %1340 = vmatprep.subr.mxu0 0.0
        %1341 = vmatpush1.msra.mxu0 0.0
        %1342 = vmatprep.subr.mxu0 0.0
        %1343 = vmatpush1.msra.mxu0 %v956
        %1344 = vmatprep.subr.mxu0 0.0
        %1345 = vmatpush2.msra.mxu0 0.0
        %1346 = vmatprep.subr.mxu0 0.0
        %1347 = vmatpush2.msra.mxu0 0.0
        %1348 = vmatprep.subr.mxu0 0.0
        %1349 = vmatpush2.msra.mxu0 0.0
        %1350 = vmatprep.subr.mxu0 0.0
        %1351 = vmatpush2.msra.mxu0 0.0
        %1352 = vmatprep.subr.mxu0 0.0
        %1353 = vmatpush2.msra.mxu0 0.0
        %1354 = vmatprep.subr.mxu0 0.0
        %1355 = vmatpush2.msra.mxu0 0.0
        %1356 = vmatprep.subr.mxu0 0.0
        %1357 = vmatpush2.msra.mxu0 0.0
        %1358 = vmatprep.subr.mxu0 0.0
        %1359 = vmatpush2.msra.mxu0 0.0
        %1360 = vmatprep.subr.mxu0 0.0
        %1361 = vmatpush2.msra.mxu0 0.0
        %1362 = vmatprep.subr.mxu0 0.0
        %1363 = vmatpush2.msra.mxu0 0.0
        %1364 = vmatprep.subr.mxu0 0.0
        %1365 = vmatpush2.msra.mxu0 0.0
        %1366 = vmatprep.subr.mxu0 0.0
        %1367 = vmatpush2.msra.mxu0 0.0
        %1368 = vmatprep.subr.mxu0 0.0
        %1369 = vmatpush2.msra.mxu0 0.0
        %1370 = vmatprep.subr.mxu0 0.0
        %1371 = vmatpush2.msra.mxu0 0.0
        %1372 = vmatprep.subr.mxu0 0.0
        %1373 = vmatpush2.msra.mxu0 0.0
        %1374 = vmatprep.subr.mxu0 0.0
        %1375 = vmatpush2.msra.mxu0 0.0
        %1376 = vmatprep.mubr.f32.mxu0 0.0
        %1377 = vmatmul.mubr.f32.gmra.mxu0 %v1310
        %v1378 = vpop.f32.mrf.mxu0
        %v1379 = vadd.f32 0.0, %v1378
        %v1380 = vpop.f32.mrf.mxu0
        %1381 = vdwg.mxu0
        %v1383 = vsel %vm960, %v1306, 0
        %1385 = vmatprep.subr.mxu0 0.0
        %1386 = vmatpush1.msra.mxu0 0.0
        %1387 = vmatprep.subr.mxu0 0.0
        %1388 = vmatpush1.msra.mxu0 0.0
        %1389 = vmatprep.subr.mxu0 0.0
        %1390 = vmatpush1.msra.mxu0 0.0
        %1391 = vmatprep.subr.mxu0 0.0
        %1392 = vmatpush1.msra.mxu0 0.0
        %1393 = vmatprep.subr.mxu0 0.0
        %1394 = vmatpush1.msra.mxu0 0.0
        %1395 = vmatprep.subr.mxu0 0.0
        %1396 = vmatpush1.msra.mxu0 0.0
        %1397 = vmatprep.subr.mxu0 0.0
        %1398 = vmatpush1.msra.mxu0 0.0
        %1399 = vmatprep.subr.mxu0 0.0
        %1400 = vmatpush1.msra.mxu0 0.0
        %1401 = vmatprep.subr.mxu0 0.0
        %1402 = vmatpush1.msra.mxu0 0.0
        %1403 = vmatprep.subr.mxu0 0.0
        %1404 = vmatpush1.msra.mxu0 0.0
        %1405 = vmatprep.subr.mxu0 0.0
        %1406 = vmatpush1.msra.mxu0 0.0
        %1407 = vmatprep.subr.mxu0 0.0
        %1408 = vmatpush1.msra.mxu0 0.0
        %1409 = vmatprep.subr.mxu0 0.0
        %1410 = vmatpush1.msra.mxu0 0.0
        %1411 = vmatprep.subr.mxu0 0.0
        %1412 = vmatpush1.msra.mxu0 0.0
        %1413 = vmatprep.subr.mxu0 0.0
        %1414 = vmatpush1.msra.mxu0 0.0
        %1415 = vmatprep.subr.mxu0 0.0
        %1416 = vmatpush1.msra.mxu0 %v957
        %1417 = vmatprep.subr.mxu0 0.0
        %1418 = vmatpush2.msra.mxu0 0.0
        %1419 = vmatprep.subr.mxu0 0.0
        %1420 = vmatpush2.msra.mxu0 0.0
        %1421 = vmatprep.subr.mxu0 0.0
        %1422 = vmatpush2.msra.mxu0 0.0
        %1423 = vmatprep.subr.mxu0 0.0
        %1424 = vmatpush2.msra.mxu0 0.0
        %1425 = vmatprep.subr.mxu0 0.0
        %1426 = vmatpush2.msra.mxu0 0.0
        %1427 = vmatprep.subr.mxu0 0.0
        %1428 = vmatpush2.msra.mxu0 0.0
        %1429 = vmatprep.subr.mxu0 0.0
        %1430 = vmatpush2.msra.mxu0 0.0
        %1431 = vmatprep.subr.mxu0 0.0
        %1432 = vmatpush2.msra.mxu0 0.0
        %1433 = vmatprep.subr.mxu0 0.0
        %1434 = vmatpush2.msra.mxu0 0.0
        %1435 = vmatprep.subr.mxu0 0.0
        %1436 = vmatpush2.msra.mxu0 0.0
        %1437 = vmatprep.subr.mxu0 0.0
        %1438 = vmatpush2.msra.mxu0 0.0
        %1439 = vmatprep.subr.mxu0 0.0
        %1440 = vmatpush2.msra.mxu0 0.0
        %1441 = vmatprep.subr.mxu0 0.0
        %1442 = vmatpush2.msra.mxu0 0.0
        %1443 = vmatprep.subr.mxu0 0.0
        %1444 = vmatpush2.msra.mxu0 0.0
        %1445 = vmatprep.subr.mxu0 0.0
        %1446 = vmatpush2.msra.mxu0 0.0
        %1447 = vmatprep.subr.mxu0 0.0
        %1448 = vmatpush2.msra.mxu0 0.0
        %1449 = vmatprep.mubr.f32.mxu0 0.0
        %1450 = vmatmul.mubr.f32.gmra.mxu0 %v1383
        %v1451 = vpop.f32.mrf.mxu0
        %v1452 = vadd.f32 0.0, %v1451
        %v1453 = vpop.f32.mrf.mxu0
        %1454 = vdwg.mxu0
        %v1456 = vsel %vm960, %v1307, 0
        %1458 = vmatprep.subr.mxu0 0.0
        %1459 = vmatpush1.msra.mxu0 0.0
        %1460 = vmatprep.subr.mxu0 0.0
        %1461 = vmatpush1.msra.mxu0 0.0
        %1462 = vmatprep.subr.mxu0 0.0
        %1463 = vmatpush1.msra.mxu0 0.0
        %1464 = vmatprep.subr.mxu0 0.0
        %1465 = vmatpush1.msra.mxu0 0.0
        %1466 = vmatprep.subr.mxu0 0.0
        %1467 = vmatpush1.msra.mxu0 0.0
        %1468 = vmatprep.subr.mxu0 0.0
        %1469 = vmatpush1.msra.mxu0 0.0
        %1470 = vmatprep.subr.mxu0 0.0
        %1471 = vmatpush1.msra.mxu0 0.0
        %1472 = vmatprep.subr.mxu0 0.0
        %1473 = vmatpush1.msra.mxu0 0.0
        %1474 = vmatprep.subr.mxu0 0.0
        %1475 = vmatpush1.msra.mxu0 0.0
        %1476 = vmatprep.subr.mxu0 0.0
        %1477 = vmatpush1.msra.mxu0 0.0
        %1478 = vmatprep.subr.mxu0 0.0
        %1479 = vmatpush1.msra.mxu0 0.0
        %1480 = vmatprep.subr.mxu0 0.0
        %1481 = vmatpush1.msra.mxu0 0.0
        %1482 = vmatprep.subr.mxu0 0.0
        %1483 = vmatpush1.msra.mxu0 0.0
        %1484 = vmatprep.subr.mxu0 0.0
        %1485 = vmatpush1.msra.mxu0 0.0
        %1486 = vmatprep.subr.mxu0 0.0
        %1487 = vmatpush1.msra.mxu0 0.0
        %1488 = vmatprep.subr.mxu0 0.0
        %1489 = vmatpush1.msra.mxu0 %v958
        %1490 = vmatprep.subr.mxu0 0.0
        %1491 = vmatpush2.msra.mxu0 0.0
        %1492 = vmatprep.subr.mxu0 0.0
        %1493 = vmatpush2.msra.mxu0 0.0
        %1494 = vmatprep.subr.mxu0 0.0
        %1495 = vmatpush2.msra.mxu0 0.0
        %1496 = vmatprep.subr.mxu0 0.0
        %1497 = vmatpush2.msra.mxu0 0.0
        %1498 = vmatprep.subr.mxu0 0.0
        %1499 = vmatpush2.msra.mxu0 0.0
        %1500 = vmatprep.subr.mxu0 0.0
        %1501 = vmatpush2.msra.mxu0 0.0
        %1502 = vmatprep.subr.mxu0 0.0
        %1503 = vmatpush2.msra.mxu0 0.0
        %1504 = vmatprep.subr.mxu0 0.0
        %1505 = vmatpush2.msra.mxu0 0.0
        %1506 = vmatprep.subr.mxu0 0.0
        %1507 = vmatpush2.msra.mxu0 0.0
        %1508 = vmatprep.subr.mxu0 0.0
        %1509 = vmatpush2.msra.mxu0 0.0
        %1510 = vmatprep.subr.mxu0 0.0
        %1511 = vmatpush2.msra.mxu0 0.0
        %1512 = vmatprep.subr.mxu0 0.0
        %1513 = vmatpush2.msra.mxu0 0.0
        %1514 = vmatprep.subr.mxu0 0.0
        %1515 = vmatpush2.msra.mxu0 0.0
        %1516 = vmatprep.subr.mxu0 0.0
        %1517 = vmatpush2.msra.mxu0 0.0
        %1518 = vmatprep.subr.mxu0 0.0
        %1519 = vmatpush2.msra.mxu0 0.0
        %1520 = vmatprep.subr.mxu0 0.0
        %1521 = vmatpush2.msra.mxu0 0.0
        %1522 = vmatprep.mubr.f32.mxu0 0.0
        %1523 = vmatmul.mubr.f32.gmra.mxu0 %v1456
        %v1524 = vpop.f32.mrf.mxu0
        %v1525 = vadd.f32 0.0, %v1524
        %v1526 = vpop.f32.mrf.mxu0
        %1527 = vdwg.mxu0
        %v1529 = vsel %vm960, %v1308, 0
        %1531 = vmatprep.subr.mxu0 0.0
        %1532 = vmatpush1.msra.mxu0 0.0
        %1533 = vmatprep.subr.mxu0 0.0
        %1534 = vmatpush1.msra.mxu0 0.0
        %1535 = vmatprep.subr.mxu0 0.0
        %1536 = vmatpush1.msra.mxu0 0.0
        %1537 = vmatprep.subr.mxu0 0.0
        %1538 = vmatpush1.msra.mxu0 0.0
        %1539 = vmatprep.subr.mxu0 0.0
        %1540 = vmatpush1.msra.mxu0 0.0
        %1541 = vmatprep.subr.mxu0 0.0
        %1542 = vmatpush1.msra.mxu0 0.0
        %1543 = vmatprep.subr.mxu0 0.0
        %1544 = vmatpush1.msra.mxu0 0.0
        %1545 = vmatprep.subr.mxu0 0.0
        %1546 = vmatpush1.msra.mxu0 0.0
        %1547 = vmatprep.subr.mxu0 0.0
        %1548 = vmatpush1.msra.mxu0 0.0
        %1549 = vmatprep.subr.mxu0 0.0
        %1550 = vmatpush1.msra.mxu0 0.0
        %1551 = vmatprep.subr.mxu0 0.0
        %1552 = vmatpush1.msra.mxu0 0.0
        %1553 = vmatprep.subr.mxu0 0.0
        %1554 = vmatpush1.msra.mxu0 0.0
        %1555 = vmatprep.subr.mxu0 0.0
        %1556 = vmatpush1.msra.mxu0 0.0
        %1557 = vmatprep.subr.mxu0 0.0
        %1558 = vmatpush1.msra.mxu0 0.0
        %1559 = vmatprep.subr.mxu0 0.0
        %1560 = vmatpush1.msra.mxu0 0.0
        %1561 = vmatprep.subr.mxu0 0.0
        %1562 = vmatpush1.msra.mxu0 %v959
        %1563 = vmatprep.subr.mxu0 0.0
        %1564 = vmatpush2.msra.mxu0 0.0
        %1565 = vmatprep.subr.mxu0 0.0
        %1566 = vmatpush2.msra.mxu0 0.0
        %1567 = vmatprep.subr.mxu0 0.0
        %1568 = vmatpush2.msra.mxu0 0.0
        %1569 = vmatprep.subr.mxu0 0.0
        %1570 = vmatpush2.msra.mxu0 0.0
        %1571 = vmatprep.subr.mxu0 0.0
        %1572 = vmatpush2.msra.mxu0 0.0
        %1573 = vmatprep.subr.mxu0 0.0
        %1574 = vmatpush2.msra.mxu0 0.0
        %1575 = vmatprep.subr.mxu0 0.0
        %1576 = vmatpush2.msra.mxu0 0.0
        %1577 = vmatprep.subr.mxu0 0.0
        %1578 = vmatpush2.msra.mxu0 0.0
        %1579 = vmatprep.subr.mxu0 0.0
        %1580 = vmatpush2.msra.mxu0 0.0
        %1581 = vmatprep.subr.mxu0 0.0
        %1582 = vmatpush2.msra.mxu0 0.0
        %1583 = vmatprep.subr.mxu0 0.0
        %1584 = vmatpush2.msra.mxu0 0.0
        %1585 = vmatprep.subr.mxu0 0.0
        %1586 = vmatpush2.msra.mxu0 0.0
        %1587 = vmatprep.subr.mxu0 0.0
        %1588 = vmatpush2.msra.mxu0 0.0
        %1589 = vmatprep.subr.mxu0 0.0
        %1590 = vmatpush2.msra.mxu0 0.0
        %1591 = vmatprep.subr.mxu0 0.0
        %1592 = vmatpush2.msra.mxu0 0.0
        %1593 = vmatprep.subr.mxu0 0.0
        %1594 = vmatpush2.msra.mxu0 0.0
        %1595 = vmatprep.mubr.f32.mxu0 0.0
        %1596 = vmatmul.mubr.f32.gmra.mxu0 %v1529
        %v1597 = vpop.f32.mrf.mxu0
        %v1598 = vadd.f32 0.0, %v1597
        %v1599 = vpop.f32.mrf.mxu0
        %1600 = vdwg.mxu0
        %v1601 = vcombine.low %v1379, %v1525
        %v1602 = vcombine.high %v1379, %v1525
        %v1604 = vunpack.c.l.s4 1983009808
        %v1605 = vunpack.c.0.s8 %v1604
        %v1606 = vlaneseq
        %v1607 = vshrl.u32 %v1606, 7
        %v1608 = vsub.s32 %v1605, %v1607
        %v1609 = vrot.slane %v1601, %v1608
        %v1611 = vunpack.c.l.s4 1983009808
        %v1612 = vunpack.c.0.s8 %v1611
        %v1613 = vlaneseq
        %v1614 = vshrl.u32 %v1613, 7
        %v1615 = vsub.s32 %v1612, %v1614
        %v1616 = vrot.slane %v1602, %v1615
        %v1617 = vcombine.low %v1452, %v1598
        %v1618 = vcombine.high %v1452, %v1598
        %v1620 = vunpack.c.l.s4 1983009808
        %v1621 = vunpack.c.0.s8 %v1620
        %v1622 = vlaneseq
        %v1623 = vshrl.u32 %v1622, 7
        %v1624 = vsub.s32 %v1621, %v1623
        %v1625 = vrot.slane %v1617, %v1624
        %v1627 = vunpack.c.l.s4 1983009808
        %v1628 = vunpack.c.0.s8 %v1627
        %v1629 = vlaneseq
        %v1630 = vshrl.u32 %v1629, 7
        %v1631 = vsub.s32 %v1628, %v1630
        %v1632 = vrot.slane %v1618, %v1631
        %v1633 = vcombine.low %v1609, %v1625
        %v1634 = vcombine.high %v1609, %v1625
        %v1636 = vunpack.c.l.s4 1934713408
        %v1637 = vunpack.c.0.s8 %v1636
        %v1638 = vlaneseq
        %v1639 = vshrl.u32 %v1638, 7
        %v1640 = vsub.s32 %v1637, %v1639
        %v1641 = vrot.slane %v1633, %v1640
        %v1643 = vunpack.c.l.s4 1934713408
        %v1644 = vunpack.c.0.s8 %v1643
        %v1645 = vlaneseq
        %v1646 = vshrl.u32 %v1645, 7
        %v1647 = vsub.s32 %v1644, %v1646
        %v1648 = vrot.slane %v1634, %v1647
        %v1649 = vcombine.low %v1616, %v1632
        %v1650 = vcombine.high %v1616, %v1632
        %v1652 = vunpack.c.l.s4 1934713408
        %v1653 = vunpack.c.0.s8 %v1652
        %v1654 = vlaneseq
        %v1655 = vshrl.u32 %v1654, 7
        %v1656 = vsub.s32 %v1653, %v1655
        %v1657 = vrot.slane %v1649, %v1656
        %v1659 = vunpack.c.l.s4 1934713408
        %v1660 = vunpack.c.0.s8 %v1659
        %v1661 = vlaneseq
        %v1662 = vshrl.u32 %v1661, 7
        %v1663 = vsub.s32 %v1660, %v1662
        %v1664 = vrot.slane %v1650, %v1663
        %v1665 = vcombine.high %v1641, 0.0
        %v1666 = vcombine.high %v1648, 0.0
        %v1667 = vcombine.high %v1657, 0.0
        %v1668 = vcombine.high %v1664, 0.0
        %v1669 = vcombine.low %v1641, %v1648
        %v1671 = vunpack.c.l.s4 1983009808
        %v1672 = vunpack.c.0.s8 %v1671
        %v1673 = vlaneseq
        %v1674 = vshrl.u32 %v1673, 7
        %v1675 = vsub.s32 %v1672, %v1674
        %v1676 = vrot.slane %v1669, %v1675
        %v1677 = vcombine.low %v1665, %v1666
        %v1679 = vunpack.c.l.s4 1983009808
        %v1680 = vunpack.c.0.s8 %v1679
        %v1681 = vlaneseq
        %v1682 = vshrl.u32 %v1681, 7
        %v1683 = vsub.s32 %v1680, %v1682
        %v1684 = vrot.slane %v1677, %v1683
        %v1685 = vcombine.low %v1657, %v1664
        %v1687 = vunpack.c.l.s4 1983009808
        %v1688 = vunpack.c.0.s8 %v1687
        %v1689 = vlaneseq
        %v1690 = vshrl.u32 %v1689, 7
        %v1691 = vsub.s32 %v1688, %v1690
        %v1692 = vrot.slane %v1685, %v1691
        %v1693 = vcombine.low %v1667, %v1668
        %v1695 = vunpack.c.l.s4 1983009808
        %v1696 = vunpack.c.0.s8 %v1695
        %v1697 = vlaneseq
        %v1698 = vshrl.u32 %v1697, 7
        %v1699 = vsub.s32 %v1696, %v1698
        %v1700 = vrot.slane %v1693, %v1699
        %v1701 = vcombine.low %v1676, %v1684
        %v1702 = vcombine.high %v1676, %v1684
        %v1704 = vunpack.c.l.s4 1934713408
        %v1705 = vunpack.c.0.s8 %v1704
        %v1706 = vlaneseq
        %v1707 = vshrl.u32 %v1706, 7
        %v1708 = vsub.s32 %v1705, %v1707
        %v1709 = vrot.slane %v1701, %v1708
        %v1711 = vunpack.c.l.s4 1934713408
        %v1712 = vunpack.c.0.s8 %v1711
        %v1713 = vlaneseq
        %v1714 = vshrl.u32 %v1713, 7
        %v1715 = vsub.s32 %v1712, %v1714
        %v1716 = vrot.slane %v1702, %v1715
        %v1717 = vcombine.low %v1692, %v1700
        %v1718 = vcombine.high %v1692, %v1700
        %v1720 = vunpack.c.l.s4 1934713408
        %v1721 = vunpack.c.0.s8 %v1720
        %v1722 = vlaneseq
        %v1723 = vshrl.u32 %v1722, 7
        %v1724 = vsub.s32 %v1721, %v1723
        %v1725 = vrot.slane %v1717, %v1724
        %v1727 = vunpack.c.l.s4 1934713408
        %v1728 = vunpack.c.0.s8 %v1727
        %v1729 = vlaneseq
        %v1730 = vshrl.u32 %v1729, 7
        %v1731 = vsub.s32 %v1728, %v1730
        %v1732 = vrot.slane %v1718, %v1731
        %v1733 = vcombine.low %v1709, %v1725
        %v1734 = vcombine.high %v1709, %v1725
        %v1735 = vcombine.low %v1716, %v1732
        %v1736 = vcombine.high %v1716, %v1732
        %1738 = vrot.lane.b32.xlu0 %v1734, 8
        %v1739 = vpop.permute.xlu0 %1738
        %1742 = vrot.lane.b32.xlu0 %v1735, 16
        %v1743 = vpop.permute.xlu0 %1742
        %1746 = vrot.lane.b32.xlu0 %v1736, 24
        %v1747 = vpop.permute.xlu0 %1746
        %v1749 = vsel %vm960, %v1733, %v1739
        %vm1750 = vcmask 130048
        %v1751 = vsel %vm1750, %v1749, %v1743
        %vm1752 = vcmask 195584
        %v1753 = vsel %vm1752, %v1751, %v1747
        %v1754 = vld [vmem:[%s6] sm:$0x1]
        %v1756 = vlaneseq
        %v1757 = vshrl.u32 %v1756, 7
        %v1758 = vsub.s32 0, %v1757
        %v1759 = vrot.slane %v1754, %v1758
        %v1761 = vadd.f32 %v402, %v1759
        %v1762 = vld [vmem:[%s5] sm:$0xff]
        %v1763 = vld [vmem:[%s5 + $0x8] sm:$0xff]
        %v1764 = vld [vmem:[%s5 + $0x10] sm:$0xff]
        %v1765 = vld [vmem:[%s5 + $0x18] sm:$0xff]
        %v1767 = vsel %vm403, %v1753, 0
        %1769 = vmatprep.subr.mxu0 0.0
        %1770 = vmatpush1.msra.mxu0 0.0
        %1771 = vmatprep.subr.mxu0 0.0
        %1772 = vmatpush1.msra.mxu0 0.0
        %1773 = vmatprep.subr.mxu0 0.0
        %1774 = vmatpush1.msra.mxu0 0.0
        %1775 = vmatprep.subr.mxu0 0.0
        %1776 = vmatpush1.msra.mxu0 0.0
        %1777 = vmatprep.subr.mxu0 0.0
        %1778 = vmatpush1.msra.mxu0 0.0
        %1779 = vmatprep.subr.mxu0 0.0
        %1780 = vmatpush1.msra.mxu0 0.0
        %1781 = vmatprep.subr.mxu0 0.0
        %1782 = vmatpush1.msra.mxu0 0.0
        %1783 = vmatprep.subr.mxu0 0.0
        %1784 = vmatpush1.msra.mxu0 0.0
        %1785 = vmatprep.subr.mxu0 0.0
        %1786 = vmatpush1.msra.mxu0 0.0
        %1787 = vmatprep.subr.mxu0 0.0
        %1788 = vmatpush1.msra.mxu0 0.0
        %1789 = vmatprep.subr.mxu0 0.0
        %1790 = vmatpush1.msra.mxu0 0.0
        %1791 = vmatprep.subr.mxu0 0.0
        %1792 = vmatpush1.msra.mxu0 0.0
        %1793 = vmatprep.subr.mxu0 0.0
        %1794 = vmatpush1.msra.mxu0 %v1765
        %1795 = vmatprep.subr.mxu0 0.0
        %1796 = vmatpush1.msra.mxu0 %v1764
        %1797 = vmatprep.subr.mxu0 0.0
        %1798 = vmatpush1.msra.mxu0 %v1763
        %1799 = vmatprep.subr.mxu0 0.0
        %1800 = vmatpush1.msra.mxu0 %v1762
        %1801 = vmatprep.subr.mxu0 0.0
        %1802 = vmatpush2.msra.mxu0 0.0
        %1803 = vmatprep.subr.mxu0 0.0
        %1804 = vmatpush2.msra.mxu0 0.0
        %1805 = vmatprep.subr.mxu0 0.0
        %1806 = vmatpush2.msra.mxu0 0.0
        %1807 = vmatprep.subr.mxu0 0.0
        %1808 = vmatpush2.msra.mxu0 0.0
        %1809 = vmatprep.subr.mxu0 0.0
        %1810 = vmatpush2.msra.mxu0 0.0
        %1811 = vmatprep.subr.mxu0 0.0
        %1812 = vmatpush2.msra.mxu0 0.0
        %1813 = vmatprep.subr.mxu0 0.0
        %1814 = vmatpush2.msra.mxu0 0.0
        %1815 = vmatprep.subr.mxu0 0.0
        %1816 = vmatpush2.msra.mxu0 0.0
        %1817 = vmatprep.subr.mxu0 0.0
        %1818 = vmatpush2.msra.mxu0 0.0
        %1819 = vmatprep.subr.mxu0 0.0
        %1820 = vmatpush2.msra.mxu0 0.0
        %1821 = vmatprep.subr.mxu0 0.0
        %1822 = vmatpush2.msra.mxu0 0.0
        %1823 = vmatprep.subr.mxu0 0.0
        %1824 = vmatpush2.msra.mxu0 0.0
        %1825 = vmatprep.subr.mxu0 0.0
        %1826 = vmatpush2.msra.mxu0 0.0
        %1827 = vmatprep.subr.mxu0 0.0
        %1828 = vmatpush2.msra.mxu0 0.0
        %1829 = vmatprep.subr.mxu0 0.0
        %1830 = vmatpush2.msra.mxu0 0.0
        %1831 = vmatprep.subr.mxu0 0.0
        %1832 = vmatpush2.msra.mxu0 0.0
        %1833 = vmatprep.mubr.f32.mxu0 0.0
        %1834 = vmatmul.mubr.f32.gmra.mxu0 %v1767
        %v1835 = vpop.f32.mrf.mxu0
        %v1836 = vadd.f32 0.0, %v1835
        %v1837 = vpop.f32.mrf.mxu0
        %1838 = vdwg.mxu0
        %v1839 = vadd.f32 %v1761, %v1836
        %v1840 = vld [vmem:[%s10] sm:$0x1]
        %v1842 = vlaneseq
        %v1843 = vshrl.u32 %v1842, 7
        %v1844 = vsub.s32 0, %v1843
        %v1845 = vrot.slane %v1840, %v1844
        %v1847 = vadd.f32 %v1839, %v1845
        %v1848 = vld [vmem:[%s7] sm:$0xff]
        %v1849 = vld [vmem:[%s7 + $0x8] sm:$0xff]
        %v1850 = vld [vmem:[%s7 + $0x10] sm:$0xff]
        %v1851 = vld [vmem:[%s7 + $0x18] sm:$0xff]
        %v1852 = vld [vmem:[%s8] sm:$0x1]
        %v1854 = vlaneseq
        %v1855 = vshrl.u32 %v1854, 7
        %v1856 = vsub.s32 0, %v1855
        %v1857 = vrot.slane %v1852, %v1856
        %v1860 = vsel %vm403, %v1839, 0
        %1862 = vmatprep.subr.mxu0 0.0
        %1863 = vmatpush1.msra.mxu0 0.0
        %1864 = vmatprep.subr.mxu0 0.0
        %1865 = vmatpush1.msra.mxu0 0.0
        %1866 = vmatprep.subr.mxu0 0.0
        %1867 = vmatpush1.msra.mxu0 0.0
        %1868 = vmatprep.subr.mxu0 0.0
        %1869 = vmatpush1.msra.mxu0 0.0
        %1870 = vmatprep.subr.mxu0 0.0
        %1871 = vmatpush1.msra.mxu0 0.0
        %1872 = vmatprep.subr.mxu0 0.0
        %1873 = vmatpush1.msra.mxu0 0.0
        %1874 = vmatprep.subr.mxu0 0.0
        %1875 = vmatpush1.msra.mxu0 0.0
        %1876 = vmatprep.subr.mxu0 0.0
        %1877 = vmatpush1.msra.mxu0 0.0
        %1878 = vmatprep.subr.mxu0 0.0
        %1879 = vmatpush1.msra.mxu0 0.0
        %1880 = vmatprep.subr.mxu0 0.0
        %1881 = vmatpush1.msra.mxu0 0.0
        %1882 = vmatprep.subr.mxu0 0.0
        %1883 = vmatpush1.msra.mxu0 0.0
        %1884 = vmatprep.subr.mxu0 0.0
        %1885 = vmatpush1.msra.mxu0 0.0
        %1886 = vmatprep.subr.mxu0 0.0
        %1887 = vmatpush1.msra.mxu0 %v1851
        %1888 = vmatprep.subr.mxu0 0.0
        %1889 = vmatpush1.msra.mxu0 %v1850
        %1890 = vmatprep.subr.mxu0 0.0
        %1891 = vmatpush1.msra.mxu0 %v1849
        %1892 = vmatprep.subr.mxu0 0.0
        %1893 = vmatpush1.msra.mxu0 %v1848
        %1894 = vmatprep.subr.mxu0 0.0
        %1895 = vmatpush2.msra.mxu0 0.0
        %1896 = vmatprep.subr.mxu0 0.0
        %1897 = vmatpush2.msra.mxu0 0.0
        %1898 = vmatprep.subr.mxu0 0.0
        %1899 = vmatpush2.msra.mxu0 0.0
        %1900 = vmatprep.subr.mxu0 0.0
        %1901 = vmatpush2.msra.mxu0 0.0
        %1902 = vmatprep.subr.mxu0 0.0
        %1903 = vmatpush2.msra.mxu0 0.0
        %1904 = vmatprep.subr.mxu0 0.0
        %1905 = vmatpush2.msra.mxu0 0.0
        %1906 = vmatprep.subr.mxu0 0.0
        %1907 = vmatpush2.msra.mxu0 0.0
        %1908 = vmatprep.subr.mxu0 0.0
        %1909 = vmatpush2.msra.mxu0 0.0
        %1910 = vmatprep.subr.mxu0 0.0
        %1911 = vmatpush2.msra.mxu0 0.0
        %1912 = vmatprep.subr.mxu0 0.0
        %1913 = vmatpush2.msra.mxu0 0.0
        %1914 = vmatprep.subr.mxu0 0.0
        %1915 = vmatpush2.msra.mxu0 0.0
        %1916 = vmatprep.subr.mxu0 0.0
        %1917 = vmatpush2.msra.mxu0 0.0
        %1918 = vmatprep.subr.mxu0 0.0
        %1919 = vmatpush2.msra.mxu0 0.0
        %1920 = vmatprep.subr.mxu0 0.0
        %1921 = vmatpush2.msra.mxu0 0.0
        %1922 = vmatprep.subr.mxu0 0.0
        %1923 = vmatpush2.msra.mxu0 0.0
        %1924 = vmatprep.subr.mxu0 0.0
        %1925 = vmatpush2.msra.mxu0 0.0
        %1926 = vmatprep.mubr.f32.mxu0 0.0
        %1927 = vmatmul.mubr.f32.gmra.mxu0 %v1860
        %v1928 = vpop.f32.mrf.mxu0
        %v1929 = vadd.f32 %v1857, %v1928
        %v1930 = vpop.f32.mrf.mxu0
        %1931 = vdwg.mxu0
        %v1932 = vmax.f32 %v1929, 0.0
        %v1933 = vld [vmem:[%s9] sm:$0xff]
        %v1934 = vld [vmem:[%s9 + $0x8] sm:$0xff]
        %v1935 = vld [vmem:[%s9 + $0x10] sm:$0xff]
        %v1936 = vld [vmem:[%s9 + $0x18] sm:$0xff]
        %v1937 = vld [vmem:[%s9 + $0x20] sm:$0xff]
        %v1938 = vld [vmem:[%s9 + $0x28] sm:$0xff]
        %v1939 = vld [vmem:[%s9 + $0x30] sm:$0xff]
        %v1940 = vld [vmem:[%s9 + $0x38] sm:$0xff]
        %vm1941 = vcmask 523264
        %v1943 = vsel %vm1941, %v1932, 0
        %1945 = vmatprep.subr.mxu0 0.0
        %1946 = vmatpush1.msra.mxu0 0.0
        %1947 = vmatprep.subr.mxu0 0.0
        %1948 = vmatpush1.msra.mxu0 0.0
        %1949 = vmatprep.subr.mxu0 0.0
        %1950 = vmatpush1.msra.mxu0 0.0
        %1951 = vmatprep.subr.mxu0 0.0
        %1952 = vmatpush1.msra.mxu0 0.0
        %1953 = vmatprep.subr.mxu0 0.0
        %1954 = vmatpush1.msra.mxu0 0.0
        %1955 = vmatprep.subr.mxu0 0.0
        %1956 = vmatpush1.msra.mxu0 0.0
        %1957 = vmatprep.subr.mxu0 0.0
        %1958 = vmatpush1.msra.mxu0 0.0
        %1959 = vmatprep.subr.mxu0 0.0
        %1960 = vmatpush1.msra.mxu0 0.0
        %1961 = vmatprep.subr.mxu0 0.0
        %1962 = vmatpush1.msra.mxu0 %v1940
        %1963 = vmatprep.subr.mxu0 0.0
        %1964 = vmatpush1.msra.mxu0 %v1939
        %1965 = vmatprep.subr.mxu0 0.0
        %1966 = vmatpush1.msra.mxu0 %v1938
        %1967 = vmatprep.subr.mxu0 0.0
        %1968 = vmatpush1.msra.mxu0 %v1937
        %1969 = vmatprep.subr.mxu0 0.0
        %1970 = vmatpush1.msra.mxu0 %v1936
        %1971 = vmatprep.subr.mxu0 0.0
        %1972 = vmatpush1.msra.mxu0 %v1935
        %1973 = vmatprep.subr.mxu0 0.0
        %1974 = vmatpush1.msra.mxu0 %v1934
        %1975 = vmatprep.subr.mxu0 0.0
        %1976 = vmatpush1.msra.mxu0 %v1933
        %1977 = vmatprep.subr.mxu0 0.0
        %1978 = vmatpush2.msra.mxu0 0.0
        %1979 = vmatprep.subr.mxu0 0.0
        %1980 = vmatpush2.msra.mxu0 0.0
        %1981 = vmatprep.subr.mxu0 0.0
        %1982 = vmatpush2.msra.mxu0 0.0
        %1983 = vmatprep.subr.mxu0 0.0
        %1984 = vmatpush2.msra.mxu0 0.0
        %1985 = vmatprep.subr.mxu0 0.0
        %1986 = vmatpush2.msra.mxu0 0.0
        %1987 = vmatprep.subr.mxu0 0.0
        %1988 = vmatpush2.msra.mxu0 0.0
        %1989 = vmatprep.subr.mxu0 0.0
        %1990 = vmatpush2.msra.mxu0 0.0
        %1991 = vmatprep.subr.mxu0 0.0
        %1992 = vmatpush2.msra.mxu0 0.0
        %1993 = vmatprep.subr.mxu0 0.0
        %1994 = vmatpush2.msra.mxu0 0.0
        %1995 = vmatprep.subr.mxu0 0.0
        %1996 = vmatpush2.msra.mxu0 0.0
        %1997 = vmatprep.subr.mxu0 0.0
        %1998 = vmatpush2.msra.mxu0 0.0
        %1999 = vmatprep.subr.mxu0 0.0
        %2000 = vmatpush2.msra.mxu0 0.0
        %2001 = vmatprep.subr.mxu0 0.0
        %2002 = vmatpush2.msra.mxu0 0.0
        %2003 = vmatprep.subr.mxu0 0.0
        %2004 = vmatpush2.msra.mxu0 0.0
        %2005 = vmatprep.subr.mxu0 0.0
        %2006 = vmatpush2.msra.mxu0 0.0
        %2007 = vmatprep.subr.mxu0 0.0
        %2008 = vmatpush2.msra.mxu0 0.0
        %2009 = vmatprep.mubr.f32.mxu0 0.0
        %2010 = vmatmul.mubr.f32.gmra.mxu0 %v1943
        %v2011 = vpop.f32.mrf.mxu0
        %v2012 = vadd.f32 0.0, %v2011
        %v2013 = vpop.f32.mrf.mxu0
        %2014 = vdwg.mxu0
        %v2015 = vadd.f32 %v1847, %v2012
        %2016 = vst.msk [vmem:[%s401] sm:$0xff] %vm403, %v2015
        %s2017 = sand.u32 %s272, 1
        %s2018 = scalar_lea.sflag [#allocation4], %s2017
        %s2019 = sand.u32 %s272, 1
        %s2020 = smul.addr %s2019, 8
        %s2021 = scalar_lea.vmem [#allocation5], %s2020
        // Predicated region
        $region69: #{tpu_custom_call.1} parent=63 // pred_check
          %p2022 = pneg %p282
        $region70: #{tpu_custom_call.1} parent=63 // pred_check_branch
          %2024 = sbr.rel (%p2022) target = $region72
        $region71: #{tpu_custom_call.1} parent=63 // pred_region
          %s2026 = ssub.s32 128, 128
          %2027 = vsyncadd %s2018, %s2026
          %s2028 = smul.addr %s28, 128
          %s2029 = scalar_lea.hbm %s11, %s2028
          %s2031 = sshll.u32 %s2021, 4
          %s2032 = int_to_ptr.vmem [resolvable:$true] %s2031
          %2034 = dma.vmem_to_hbm [thread:$0]  %s2032, 128, %s2029, %s2018
        $region72: #{tpu_custom_call.1} parent=63 // pred_fallthru
          _
      $region64: #{tpu_custom_call.1} parent=5 // pred_fallthru
        _
      %p2035 = scmp.le.s32.totalorder 2, %s23
      // Predicated region
      $region73: #{tpu_custom_call.1} parent=5 // pred_check
        %p2036 = pneg %p2035
      $region74: #{tpu_custom_call.1} parent=5 // pred_check_branch
        %2038 = sbr.rel (%p2036) target = $region76
      $region75: #{tpu_custom_call.1} parent=5 // pred_region
        %s2039 = ssub.s32 %s23, 2
        // Predicated region
        $region77: #{tpu_custom_call.1} parent=75 // pred_check
          %p2040 = pneg %p288
        $region78: #{tpu_custom_call.1} parent=75 // pred_check_branch
          %2042 = sbr.rel (%p2040) target = $region80
        $region79: #{tpu_custom_call.1} parent=75 // pred_region
          %s2043 = sand.u32 %s273, 1
          %s2044 = scalar_lea.sflag [#allocation4], %s2043
          %s2045 = sand.u32 %s273, 1
          %s2046 = smul.addr %s2045, 8
          %s2047 = scalar_lea.vmem [#allocation5], %s2046
          %2048 = dma.done %s2044, 128
        $region80: #{tpu_custom_call.1} parent=75 // pred_fallthru
          _
      $region76: #{tpu_custom_call.1} parent=5 // pred_fallthru
        _
    $region6: #{tpu_custom_call.1} parent=1 // loop_footer
      %s27 = sadd.s32 1, %s23
    $region7: #{tpu_custom_call.1} parent=1 // loop_footer_branch
      %22 = sbr.rel target = $region3
    $region8: #{tpu_custom_call.1} parent=1 // loop_exit
      _
    %2049 = vsyncpa [#allocation3], 1
    %s2050 = scalar_lea.sflag [#allocation3], 1
    %2051 = vsyncpa %s2050, 1
    %2052 = vsyncpa [#allocation4], 1
    %s2053 = scalar_lea.sflag [#allocation4], 1
    %2054 = vsyncpa %s2053, 1

// kernel: tpu_custom_call.1
$region0: #{tpu_custom_call.1}
  #allocation0 [shape = 'u32[]', space=smem, size = 0x4, offset = 0x4, fixed_abs, tag = 'smem constant byte address 0x4 - core index']
  #allocation1 [shape = 'u32[144,128]{1,0:T(1,128)}', space=vmem, size = 0x12000, scoped, tag = 'internal scratch']
  %s0 = inlined_call_operand.hbm [shape: f32[2,8,32], index: 0, kind: input, shape index: {}]
  %s1 = inlined_call_operand.vmem [shape: f32[1,32], index: 1, kind: input, shape index: {}]
  %s2 = inlined_call_operand.vmem [shape: f32[1,32], index: 2, kind: input, shape index: {}]
  %s3 = inlined_call_operand.vmem [shape: f32[32,96], index: 3, kind: input, shape index: {}]
  %s4 = inlined_call_operand.vmem [shape: f32[1,96], index: 4, kind: input, shape index: {}]
  %s5 = inlined_call_operand.vmem [shape: f32[32,32], index: 5, kind: input, shape index: {}]
  %s6 = inlined_call_operand.vmem [shape: f32[1,32], index: 6, kind: input, shape index: {}]
  %s7 = inlined_call_operand.vmem [shape: f32[1,32,64], index: 7, kind: input, shape index: {}]
  %s8 = inlined_call_operand.vmem [shape: f32[1,1,64], index: 8, kind: input, shape index: {}]
  %s9 = inlined_call_operand.vmem [shape: f32[1,64,32], index: 9, kind: input, shape index: {}]
  %s10 = inlined_call_operand.vmem [shape: f32[1,32], index: 10, kind: input, shape index: {}]
  %s11 = inlined_call_operand.hbm [shape: f32[2,8,32], index: 11, kind: output, shape index: {}]
  %s12 = sld [smem:[#allocation0]]
  $region81: #{tpu_custom_call.1} parent=0
    _
  %s14 = ssub.s32 1, %s12
  %s15 = scalar_select 0, %s14, %s12
  $region1: #{tpu_custom_call.1} parent=0
    #allocation2 [shape = 'u8[8192]{0}', space=vmem, size = 0x2000, scoped, tag = 'input window, operand 0']
    #allocation3 [shape = 's32[2]{0}', space=sflag, size = 0x8, scoped, tag = 'scoped memory for tpu_custom_call.1']
    #allocation4 [shape = 's32[2]{0}', space=sflag, size = 0x8, scoped, tag = 'scoped memory for tpu_custom_call.1']
    #allocation5 [shape = 'u8[8192]{0}', space=vmem, size = 0x2000, scoped, tag = 'output window, operand 0']
    %16 = vsyncpa [#allocation3], 0
    %s17 = scalar_lea.sflag [#allocation3], 1
    %18 = vsyncpa %s17, 0
    %19 = vsyncpa [#allocation4], 0
    %s20 = scalar_lea.sflag [#allocation4], 1
    %21 = vsyncpa %s20, 0
    loop: start=0, step=1, limit=4
    $region2: #{tpu_custom_call.1} parent=1 // loop_pre_header
      _
    $region3: #{tpu_custom_call.1} parent=1 // loop_header
      %s23 = sphi 0, %s27
      %p24 = scmp.ge.s32.totalorder %s23, 4
      %s33 = sphi 0, %s35
      %s36 = sphi 0, %s33
      %s37 = sphi 0, %s36
      %s53 = sphi 0, %s37
      %s57 = sphi 0, %s57
      %s59 = sphi 0, %s57
      %s60 = sphi 0, %s59
      %s74 = sphi 0, %s60
      %s78 = sphi 0, %s78
      %s80 = sphi 0, %s78
      %s81 = sphi 0, %s80
      %s95 = sphi 0, %s81
      %s99 = sphi 0, %s99
      %s101 = sphi 0, %s99
      %s102 = sphi 0, %s101
      %s116 = sphi 0, %s102
      %s120 = sphi 0, %s120
      %s122 = sphi 0, %s120
      %s123 = sphi 0, %s122
      %s137 = sphi 0, %s123
      %s141 = sphi 0, %s141
      %s143 = sphi 0, %s141
      %s144 = sphi 0, %s143
      %s158 = sphi 0, %s144
      %s162 = sphi 0, %s162
      %s164 = sphi 0, %s162
      %s165 = sphi 0, %s164
      %s179 = sphi 0, %s165
      %s183 = sphi 0, %s183
      %s185 = sphi 0, %s183
      %s186 = sphi 0, %s185
      %s200 = sphi 0, %s186
      %s204 = sphi 0, %s204
      %s206 = sphi 0, %s204
      %s207 = sphi 0, %s206
      %s221 = sphi 0, %s207
      %s225 = sphi 0, %s225
      %s227 = sphi 0, %s225
      %s228 = sphi 0, %s227
      %s242 = sphi 0, %s228
      %s246 = sphi 0, %s246
      %s248 = sphi 0, %s246
      %s249 = sphi 0, %s248
      %s263 = sphi 0, %s249
      %s269 = sphi 0, %s271
      %s272 = sphi 0, %s269
      %s273 = sphi 0, %s272
      %s289 = sphi 0, %s273
    $region4: #{tpu_custom_call.1} parent=1 // loop_header_branch
      %26 = sbr.rel (%p24) target = $region8
    $region5: #{tpu_custom_call.1} parent=1 // loop_body
      %s28 = ssub.s32 %s23, 1
      %s29 = ssub.s32 %s23, 2
      %s30 = sadd.s32 %s23, 1
      %s31 = ssub.s32 %s23, %s30
      %p32 = scmp.eq.s32.totalorder %s31, 0
      %s34 = sadd.s32 %s33, 1
      %s35 = scalar_select %p32, %s33, %s34
      %p38 = pneg %p32
      %p39 = scmp.eq.s32.totalorder %s23, 1
      %p40 = por %p38, %p39
      %p41 = scmp.ne.s32.totalorder %s33, %s36
      %p42 = scmp.eq.s32.totalorder %s23, 0
      %p43 = por %p41, %p42
      %p44 = scmp.ne.s32.totalorder %s33, %s36
      %p45 = scmp.eq.s32.totalorder %s28, 1
      %p46 = por %p44, %p45
      %p47 = scmp.ne.s32.totalorder %s36, %s37
      %p48 = scmp.eq.s32.totalorder %s28, 0
      %p49 = por %p47, %p48
      %p50 = scmp.ne.s32.totalorder %s36, %s37
      %p51 = scmp.eq.s32.totalorder %s29, 1
      %p52 = por %p50, %p51
      %p54 = scmp.ne.s32.totalorder %s37, %s53
      %p55 = scmp.eq.s32.totalorder %s29, 0
      %p56 = por %p54, %p55
      %s58 = sadd.s32 %s57, 1
      %p61 = scmp.eq.s32.totalorder %s23, 1
      %p62 = scmp.ne.s32.totalorder %s57, %s59
      %p63 = scmp.eq.s32.totalorder %s23, 0
      %p64 = por %p62, %p63
      %p65 = scmp.ne.s32.totalorder %s57, %s59
      %p66 = scmp.eq.s32.totalorder %s28, 1
      %p67 = por %p65, %p66
      %p68 = scmp.ne.s32.totalorder %s59, %s60
      %p69 = scmp.eq.s32.totalorder %s28, 0
      %p70 = por %p68, %p69
      %p71 = scmp.ne.s32.totalorder %s59, %s60
      %p72 = scmp.eq.s32.totalorder %s29, 1
      %p73 = por %p71, %p72
      %p75 = scmp.ne.s32.totalorder %s60, %s74
      %p76 = scmp.eq.s32.totalorder %s29, 0
      %p77 = por %p75, %p76
      %s79 = sadd.s32 %s78, 1
      %p82 = scmp.eq.s32.totalorder %s23, 1
      %p83 = scmp.ne.s32.totalorder %s78, %s80
      %p84 = scmp.eq.s32.totalorder %s23, 0
      %p85 = por %p83, %p84
      %p86 = scmp.ne.s32.totalorder %s78, %s80
      %p87 = scmp.eq.s32.totalorder %s28, 1
      %p88 = por %p86, %p87
      %p89 = scmp.ne.s32.totalorder %s80, %s81
      %p90 = scmp.eq.s32.totalorder %s28, 0
      %p91 = por %p89, %p90
      %p92 = scmp.ne.s32.totalorder %s80, %s81
      %p93 = scmp.eq.s32.totalorder %s29, 1
      %p94 = por %p92, %p93
      %p96 = scmp.ne.s32.totalorder %s81, %s95
      %p97 = scmp.eq.s32.totalorder %s29, 0
      %p98 = por %p96, %p97
      %s100 = sadd.s32 %s99, 1
      %p103 = scmp.eq.s32.totalorder %s23, 1
      %p104 = scmp.ne.s32.totalorder %s99, %s101
      %p105 = scmp.eq.s32.totalorder %s23, 0
      %p106 = por %p104, %p105
      %p107 = scmp.ne.s32.totalorder %s99, %s101
      %p108 = scmp.eq.s32.totalorder %s28, 1
      %p109 = por %p107, %p108
      %p110 = scmp.ne.s32.totalorder %s101, %s102
      %p111 = scmp.eq.s32.totalorder %s28, 0
      %p112 = por %p110, %p111
      %p113 = scmp.ne.s32.totalorder %s101, %s102
      %p114 = scmp.eq.s32.totalorder %s29, 1
      %p115 = por %p113, %p114
      %p117 = scmp.ne.s32.totalorder %s102, %s116
      %p118 = scmp.eq.s32.totalorder %s29, 0
      %p119 = por %p117, %p118
      %s121 = sadd.s32 %s120, 1
      %p124 = scmp.eq.s32.totalorder %s23, 1
      %p125 = scmp.ne.s32.totalorder %s120, %s122
      %p126 = scmp.eq.s32.totalorder %s23, 0
      %p127 = por %p125, %p126
      %p128 = scmp.ne.s32.totalorder %s120, %s122
      %p129 = scmp.eq.s32.totalorder %s28, 1
      %p130 = por %p128, %p129
      %p131 = scmp.ne.s32.totalorder %s122, %s123
      %p132 = scmp.eq.s32.totalorder %s28, 0
      %p133 = por %p131, %p132
      %p134 = scmp.ne.s32.totalorder %s122, %s123
      %p135 = scmp.eq.s32.totalorder %s29, 1
      %p136 = por %p134, %p135
      %p138 = scmp.ne.s32.totalorder %s123, %s137
      %p139 = scmp.eq.s32.totalorder %s29, 0
      %p140 = por %p138, %p139
      %s142 = sadd.s32 %s141, 1
      %p145 = scmp.eq.s32.totalorder %s23, 1
      %p146 = scmp.ne.s32.totalorder %s141, %s143
      %p147 = scmp.eq.s32.totalorder %s23, 0
      %p148 = por %p146, %p147
      %p149 = scmp.ne.s32.totalorder %s141, %s143
      %p150 = scmp.eq.s32.totalorder %s28, 1
      %p151 = por %p149, %p150
      %p152 = scmp.ne.s32.totalorder %s143, %s144
      %p153 = scmp.eq.s32.totalorder %s28, 0
      %p154 = por %p152, %p153
      %p155 = scmp.ne.s32.totalorder %s143, %s144
      %p156 = scmp.eq.s32.totalorder %s29, 1
      %p157 = por %p155, %p156
      %p159 = scmp.ne.s32.totalorder %s144, %s158
      %p160 = scmp.eq.s32.totalorder %s29, 0
      %p161 = por %p159, %p160
      %s163 = sadd.s32 %s162, 1
      %p166 = scmp.eq.s32.totalorder %s23, 1
      %p167 = scmp.ne.s32.totalorder %s162, %s164
      %p168 = scmp.eq.s32.totalorder %s23, 0
      %p169 = por %p167, %p168
      %p170 = scmp.ne.s32.totalorder %s162, %s164
      %p171 = scmp.eq.s32.totalorder %s28, 1
      %p172 = por %p170, %p171
      %p173 = scmp.ne.s32.totalorder %s164, %s165
      %p174 = scmp.eq.s32.totalorder %s28, 0
      %p175 = por %p173, %p174
      %p176 = scmp.ne.s32.totalorder %s164, %s165
      %p177 = scmp.eq.s32.totalorder %s29, 1
      %p178 = por %p176, %p177
      %p180 = scmp.ne.s32.totalorder %s165, %s179
      %p181 = scmp.eq.s32.totalorder %s29, 0
      %p182 = por %p180, %p181
      %s184 = sadd.s32 %s183, 1
      %p187 = scmp.eq.s32.totalorder %s23, 1
      %p188 = scmp.ne.s32.totalorder %s183, %s185
      %p189 = scmp.eq.s32.totalorder %s23, 0
      %p190 = por %p188, %p189
      %p191 = scmp.ne.s32.totalorder %s183, %s185
      %p192 = scmp.eq.s32.totalorder %s28, 1
      %p193 = por %p191, %p192
      %p194 = scmp.ne.s32.totalorder %s185, %s186
      %p195 = scmp.eq.s32.totalorder %s28, 0
      %p196 = por %p194, %p195
      %p197 = scmp.ne.s32.totalorder %s185, %s186
      %p198 = scmp.eq.s32.totalorder %s29, 1
      %p199 = por %p197, %p198
      %p201 = scmp.ne.s32.totalorder %s186, %s200
      %p202 = scmp.eq.s32.totalorder %s29, 0
      %p203 = por %p201, %p202
      %s205 = sadd.s32 %s204, 1
      %p208 = scmp.eq.s32.totalorder %s23, 1
      %p209 = scmp.ne.s32.totalorder %s204, %s206
      %p210 = scmp.eq.s32.totalorder %s23, 0
      %p211 = por %p209, %p210
      %p212 = scmp.ne.s32.totalorder %s204, %s206
      %p213 = scmp.eq.s32.totalorder %s28, 1
      %p214 = por %p212, %p213
      %p215 = scmp.ne.s32.totalorder %s206, %s207
      %p216 = scmp.eq.s32.totalorder %s28, 0
      %p217 = por %p215, %p216
      %p218 = scmp.ne.s32.totalorder %s206, %s207
      %p219 = scmp.eq.s32.totalorder %s29, 1
      %p220 = por %p218, %p219
      %p222 = scmp.ne.s32.totalorder %s207, %s221
      %p223 = scmp.eq.s32.totalorder %s29, 0
      %p224 = por %p222, %p223
      %s226 = sadd.s32 %s225, 1
      %p229 = scmp.eq.s32.totalorder %s23, 1
      %p230 = scmp.ne.s32.totalorder %s225, %s227
      %p231 = scmp.eq.s32.totalorder %s23, 0
      %p232 = por %p230, %p231
      %p233 = scmp.ne.s32.totalorder %s225, %s227
      %p234 = scmp.eq.s32.totalorder %s28, 1
      %p235 = por %p233, %p234
      %p236 = scmp.ne.s32.totalorder %s227, %s228
      %p237 = scmp.eq.s32.totalorder %s28, 0
      %p238 = por %p236, %p237
      %p239 = scmp.ne.s32.totalorder %s227, %s228
      %p240 = scmp.eq.s32.totalorder %s29, 1
      %p241 = por %p239, %p240
      %p243 = scmp.ne.s32.totalorder %s228, %s242
      %p244 = scmp.eq.s32.totalorder %s29, 0
      %p245 = por %p243, %p244
      %s247 = sadd.s32 %s246, 1
      %p250 = scmp.eq.s32.totalorder %s23, 1
      %p251 = scmp.ne.s32.totalorder %s246, %s248
      %p252 = scmp.eq.s32.totalorder %s23, 0
      %p253 = por %p251, %p252
      %p254 = scmp.ne.s32.totalorder %s246, %s248
      %p255 = scmp.eq.s32.totalorder %s28, 1
      %p256 = por %p254, %p255
      %p257 = scmp.ne.s32.totalorder %s248, %s249
      %p258 = scmp.eq.s32.totalorder %s28, 0
      %p259 = por %p257, %p258
      %p260 = scmp.ne.s32.totalorder %s248, %s249
      %p261 = scmp.eq.s32.totalorder %s29, 1
      %p262 = por %p260, %p261
      %p264 = scmp.ne.s32.totalorder %s249, %s263
      %p265 = scmp.eq.s32.totalorder %s29, 0
      %p266 = por %p264, %p265
      %s267 = ssub.s32 %s23, %s30
      %p268 = scmp.eq.s32.totalorder %s267, 0
      %s270 = sadd.s32 %s269, 1
      %s271 = scalar_select %p268, %s269, %s270
      %p274 = pneg %p268
      %p275 = scmp.eq.s32.totalorder %s23, 1
      %p276 = por %p274, %p275
      %p277 = scmp.ne.s32.totalorder %s269, %s272
      %p278 = scmp.eq.s32.totalorder %s23, 0
      %p279 = por %p277, %p278
      %p280 = scmp.ne.s32.totalorder %s269, %s272
      %p281 = scmp.eq.s32.totalorder %s28, 1
      %p282 = por %p280, %p281
      %p283 = scmp.ne.s32.totalorder %s272, %s273
      %p284 = scmp.eq.s32.totalorder %s28, 0
      %p285 = por %p283, %p284
      %p286 = scmp.ne.s32.totalorder %s272, %s273
      %p287 = scmp.eq.s32.totalorder %s29, 1
      %p288 = por %p286, %p287
      %p290 = scmp.ne.s32.totalorder %s273, %s289
      %p291 = scmp.eq.s32.totalorder %s29, 0
      %p292 = por %p290, %p291
      %p293 = scmp.le.s32.totalorder 1, %s23
      %p294 = scmp.lt.s32.totalorder %s23, 3
      %p295 = pnand %p293, %p294
      %p296 = pneg %p295
      // Predicated region
      $region9: #{tpu_custom_call.1} parent=5 // pred_check
        _
      $region10: #{tpu_custom_call.1} parent=5 // pred_check_branch
        %298 = sbr.rel (%p295) target = $region12
      $region11: #{tpu_custom_call.1} parent=5 // pred_region
        %s299 = ssub.s32 %s23, 1
        // Predicated region
        $region13: #{tpu_custom_call.1} parent=11 // pred_check
          %p300 = pneg %p70
        $region14: #{tpu_custom_call.1} parent=11 // pred_check_branch
          %302 = sbr.rel (%p300) target = $region16
        $region15: #{tpu_custom_call.1} parent=11 // pred_region
          _
        $region16: #{tpu_custom_call.1} parent=11 // pred_fallthru
          _
        // Predicated region
        $region17: #{tpu_custom_call.1} parent=11 // pred_check
          %p303 = pneg %p91
        $region18: #{tpu_custom_call.1} parent=11 // pred_check_branch
          %305 = sbr.rel (%p303) target = $region20
        $region19: #{tpu_custom_call.1} parent=11 // pred_region
          _
        $region20: #{tpu_custom_call.1} parent=11 // pred_fallthru
          _
        // Predicated region
        $region21: #{tpu_custom_call.1} parent=11 // pred_check
          %p306 = pneg %p112
        $region22: #{tpu_custom_call.1} parent=11 // pred_check_branch
          %308 = sbr.rel (%p306) target = $region24
        $region23: #{tpu_custom_call.1} parent=11 // pred_region
          _
        $region24: #{tpu_custom_call.1} parent=11 // pred_fallthru
          _
        // Predicated region
        $region25: #{tpu_custom_call.1} parent=11 // pred_check
          %p309 = pneg %p133
        $region26: #{tpu_custom_call.1} parent=11 // pred_check_branch
          %311 = sbr.rel (%p309) target = $region28
        $region27: #{tpu_custom_call.1} parent=11 // pred_region
          _
        $region28: #{tpu_custom_call.1} parent=11 // pred_fallthru
          _
        // Predicated region
        $region29: #{tpu_custom_call.1} parent=11 // pred_check
          %p312 = pneg %p154
        $region30: #{tpu_custom_call.1} parent=11 // pred_check_branch
          %314 = sbr.rel (%p312) target = $region32
        $region31: #{tpu_custom_call.1} parent=11 // pred_region
          _
        $region32: #{tpu_custom_call.1} parent=11 // pred_fallthru
          _
        // Predicated region
        $region33: #{tpu_custom_call.1} parent=11 // pred_check
          %p315 = pneg %p175
        $region34: #{tpu_custom_call.1} parent=11 // pred_check_branch
          %317 = sbr.rel (%p315) target = $region36
        $region35: #{tpu_custom_call.1} parent=11 // pred_region
          _
        $region36: #{tpu_custom_call.1} parent=11 // pred_fallthru
          _
        // Predicated region
        $region37: #{tpu_custom_call.1} parent=11 // pred_check
          %p318 = pneg %p196
        $region38: #{tpu_custom_call.1} parent=11 // pred_check_branch
          %320 = sbr.rel (%p318) target = $region40
        $region39: #{tpu_custom_call.1} parent=11 // pred_region
          _
        $region40: #{tpu_custom_call.1} parent=11 // pred_fallthru
          _
        // Predicated region
        $region41: #{tpu_custom_call.1} parent=11 // pred_check
          %p321 = pneg %p217
        $region42: #{tpu_custom_call.1} parent=11 // pred_check_branch
          %323 = sbr.rel (%p321) target = $region44
        $region43: #{tpu_custom_call.1} parent=11 // pred_region
          _
        $region44: #{tpu_custom_call.1} parent=11 // pred_fallthru
          _
        // Predicated region
        $region45: #{tpu_custom_call.1} parent=11 // pred_check
          %p324 = pneg %p238
        $region46: #{tpu_custom_call.1} parent=11 // pred_check_branch
          %326 = sbr.rel (%p324) target = $region48
        $region47: #{tpu_custom_call.1} parent=11 // pred_region
          _
        $region48: #{tpu_custom_call.1} parent=11 // pred_fallthru
          _
        // Predicated region
        $region49: #{tpu_custom_call.1} parent=11 // pred_check
          %p327 = pneg %p259
        $region50: #{tpu_custom_call.1} parent=11 // pred_check_branch
          %329 = sbr.rel (%p327) target = $region52
        $region51: #{tpu_custom_call.1} parent=11 // pred_region
          _
        $region52: #{tpu_custom_call.1} parent=11 // pred_fallthru
          _
      $region12: #{tpu_custom_call.1} parent=5 // pred_fallthru
        _
      %p330 = scmp.lt.s32.totalorder %s23, 2
      // Predicated region
      $region53: #{tpu_custom_call.1} parent=5 // pred_check
        %p331 = pneg %p330
      $region54: #{tpu_custom_call.1} parent=5 // pred_check_branch
        %333 = sbr.rel (%p331) target = $region56
      $region55: #{tpu_custom_call.1} parent=5 // pred_region
        // Predicated region
        $region57: #{tpu_custom_call.1} parent=55 // pred_check
          %p334 = pneg %p43
        $region58: #{tpu_custom_call.1} parent=55 // pred_check_branch
          %336 = sbr.rel (%p334) target = $region60
        $region59: #{tpu_custom_call.1} parent=55 // pred_region
          %s337 = sand.u32 %s33, 1
          %s338 = scalar_lea.sflag [#allocation3], %s337
          %s339 = sand.u32 %s33, 1
          %s340 = smul.addr %s339, 8
          %s341 = scalar_lea.vmem [#allocation2], %s340
          %s343 = ssub.s32 128, 128
          %344 = vsyncadd %s338, %s343
          %s345 = smul.addr %s23, 128
          %s346 = scalar_lea.hbm %s0, %s345
          %s348 = sshll.u32 %s341, 4
          %s349 = int_to_ptr.vmem [resolvable:$true] %s348
          %351 = dma.hbm_to_vmem [thread:$0]  %s346, 128, %s349, %s338
        $region60: #{tpu_custom_call.1} parent=55 // pred_fallthru
          _
      $region56: #{tpu_custom_call.1} parent=5 // pred_fallthru
        _
      %p352 = scmp.le.s32.totalorder 1, %s23
      %p353 = scmp.lt.s32.totalorder %s23, 3
      %p354 = pnand %p352, %p353
      %p355 = pneg %p354
      // Predicated region
      $region61: #{tpu_custom_call.1} parent=5 // pred_check
        _
      $region62: #{tpu_custom_call.1} parent=5 // pred_check_branch
        %357 = sbr.rel (%p354) target = $region64
      $region63: #{tpu_custom_call.1} parent=5 // pred_region
        %s358 = ssub.s32 %s23, 1
        %s359 = sand.u32 %s36, 1
        %s360 = scalar_lea.sflag [#allocation3], %s359
        %s361 = sand.u32 %s36, 1
        %s362 = smul.addr %s361, 8
        %s363 = scalar_lea.vmem [#allocation2], %s362
        // Predicated region
        $region65: #{tpu_custom_call.1} parent=63 // pred_check
          %p364 = pneg %p49
        $region66: #{tpu_custom_call.1} parent=63 // pred_check_branch
          %366 = sbr.rel (%p364) target = $region68
        $region67: #{tpu_custom_call.1} parent=63 // pred_region
          %367 = dma.done %s360, 128
        $region68: #{tpu_custom_call.1} parent=63 // pred_fallthru
          _
        %s368 = sand.u32 %s36, 1
        %s369 = scalar_lea.sflag [#allocation3], %s368
        %s370 = sand.u32 %s36, 1
        %s371 = smul.addr %s370, 8
        %s372 = scalar_lea.vmem [#allocation2], %s371
        %p373 = pneg %p49
        %p374 = pneg %p46
        %p375 = pneg %p70
        %p376 = pneg %p67
        %p377 = pneg %p91
        %p378 = pneg %p88
        %p379 = pneg %p112
        %p380 = pneg %p109
        %p381 = pneg %p133
        %p382 = pneg %p130
        %p383 = pneg %p154
        %p384 = pneg %p151
        %p385 = pneg %p175
        %p386 = pneg %p172
        %p387 = pneg %p196
        %p388 = pneg %p193
        %p389 = pneg %p217
        %p390 = pneg %p214
        %p391 = pneg %p238
        %p392 = pneg %p235
        %p393 = pneg %p259
        %p394 = pneg %p256
        %p395 = pneg %p285
        %p396 = pneg %p282
        %s397 = sand.u32 %s272, 1
        %s398 = scalar_lea.sflag [#allocation4], %s397
        %s399 = sand.u32 %s272, 1
        %s400 = smul.addr %s399, 8
        %s401 = scalar_lea.vmem [#allocation5], %s400
        %v402 = vld [vmem:[%s363] sm:$0xff]
        %vm403 = vcmask 261120
        %v404 = vsel %vm403, %v402, 0.0
        %405 = vadd.xlane.f32.xlu0 %v404
        %v406 = vpop.xlane.xlu0 %405
        %v407 = vrcp.pop 32.0
        %v408 = vmul.f32 %v406, %v407
        %v409 = vsub.f32 %v402, %v408
        %v410 = vmul.f32 %v409, %v409
        %v411 = vsel %vm403, %v410, 0.0
        %412 = vadd.xlane.f32.xlu0 %v411
        %v413 = vpop.xlane.xlu0 %412
        %v414 = vmul.f32 %v413, %v407
        %v415 = vadd.f32 %v414, 1e-05
        %v416 = vrsqrt.pop %v415
        %v417 = vmul.f32 %v409, %v416
        %v418 = vld [vmem:[%s1] sm:$0x1]
        %v420 = vlaneseq
        %v421 = vshrl.u32 %v420, 7
        %v422 = vsub.s32 0, %v421
        %v423 = vrot.slane %v418, %v422
        %v425 = vmul.f32 %v417, %v423
        %v426 = vld [vmem:[%s2] sm:$0x1]
        %v428 = vlaneseq
        %v429 = vshrl.u32 %v428, 7
        %v430 = vsub.s32 0, %v429
        %v431 = vrot.slane %v426, %v430
        %v433 = vadd.f32 %v425, %v431
        %v434 = vld [vmem:[%s3] sm:$0xff]
        %v435 = vld [vmem:[%s3 + $0x8] sm:$0xff]
        %v436 = vld [vmem:[%s3 + $0x10] sm:$0xff]
        %v437 = vld [vmem:[%s3 + $0x18] sm:$0xff]
        %v438 = vld [vmem:[%s4] sm:$0x1]
        %v440 = vlaneseq
        %v441 = vshrl.u32 %v440, 7
        %v442 = vsub.s32 0, %v441
        %v443 = vrot.slane %v438, %v442
        %v446 = vsel %vm403, %v433, 0
        %448 = vmatprep.subr.mxu0 0.0
        %449 = vmatpush1.msra.mxu0 0.0
        %450 = vmatprep.subr.mxu0 0.0
        %451 = vmatpush1.msra.mxu0 0.0
        %452 = vmatprep.subr.mxu0 0.0
        %453 = vmatpush1.msra.mxu0 0.0
        %454 = vmatprep.subr.mxu0 0.0
        %455 = vmatpush1.msra.mxu0 0.0
        %456 = vmatprep.subr.mxu0 0.0
        %457 = vmatpush1.msra.mxu0 0.0
        %458 = vmatprep.subr.mxu0 0.0
        %459 = vmatpush1.msra.mxu0 0.0
        %460 = vmatprep.subr.mxu0 0.0
        %461 = vmatpush1.msra.mxu0 0.0
        %462 = vmatprep.subr.mxu0 0.0
        %463 = vmatpush1.msra.mxu0 0.0
        %464 = vmatprep.subr.mxu0 0.0
        %465 = vmatpush1.msra.mxu0 0.0
        %466 = vmatprep.subr.mxu0 0.0
        %467 = vmatpush1.msra.mxu0 0.0
        %468 = vmatprep.subr.mxu0 0.0
        %469 = vmatpush1.msra.mxu0 0.0
        %470 = vmatprep.subr.mxu0 0.0
        %471 = vmatpush1.msra.mxu0 0.0
        %472 = vmatprep.subr.mxu0 0.0
        %473 = vmatpush1.msra.mxu0 %v437
        %474 = vmatprep.subr.mxu0 0.0
        %475 = vmatpush1.msra.mxu0 %v436
        %476 = vmatprep.subr.mxu0 0.0
        %477 = vmatpush1.msra.mxu0 %v435
        %478 = vmatprep.subr.mxu0 0.0
        %479 = vmatpush1.msra.mxu0 %v434
        %480 = vmatprep.subr.mxu0 0.0
        %481 = vmatpush2.msra.mxu0 0.0
        %482 = vmatprep.subr.mxu0 0.0
        %483 = vmatpush2.msra.mxu0 0.0
        %484 = vmatprep.subr.mxu0 0.0
        %485 = vmatpush2.msra.mxu0 0.0
        %486 = vmatprep.subr.mxu0 0.0
        %487 = vmatpush2.msra.mxu0 0.0
        %488 = vmatprep.subr.mxu0 0.0
        %489 = vmatpush2.msra.mxu0 0.0
        %490 = vmatprep.subr.mxu0 0.0
        %491 = vmatpush2.msra.mxu0 0.0
        %492 = vmatprep.subr.mxu0 0.0
        %493 = vmatpush2.msra.mxu0 0.0
        %494 = vmatprep.subr.mxu0 0.0
        %495 = vmatpush2.msra.mxu0 0.0
        %496 = vmatprep.subr.mxu0 0.0
        %497 = vmatpush2.msra.mxu0 0.0
        %498 = vmatprep.subr.mxu0 0.0
        %499 = vmatpush2.msra.mxu0 0.0
        %500 = vmatprep.subr.mxu0 0.0
        %501 = vmatpush2.msra.mxu0 0.0
        %502 = vmatprep.subr.mxu0 0.0
        %503 = vmatpush2.msra.mxu0 0.0
        %504 = vmatprep.subr.mxu0 0.0
        %505 = vmatpush2.msra.mxu0 0.0
        %506 = vmatprep.subr.mxu0 0.0
        %507 = vmatpush2.msra.mxu0 0.0
        %508 = vmatprep.subr.mxu0 0.0
        %509 = vmatpush2.msra.mxu0 0.0
        %510 = vmatprep.subr.mxu0 0.0
        %511 = vmatpush2.msra.mxu0 0.0
        %512 = vmatprep.mubr.f32.mxu0 0.0
        %513 = vmatmul.mubr.f32.gmra.mxu0 %v446
        %v514 = vpop.f32.mrf.mxu0
        %v515 = vadd.f32 %v443, %v514
        %v516 = vpop.f32.mrf.mxu0
        %517 = vdwg.mxu0
        %519 = vrot.lane.b32.xlu0 %v515, 120
        %v520 = vpop.permute.xlu0 %519
        %522 = vrot.lane.b32.xlu0 %v515, 112
        %v523 = vpop.permute.xlu0 %522
        %525 = vrot.lane.b32.xlu0 %v515, 104
        %v526 = vpop.permute.xlu0 %525
        %v528 = vcombine.low %v515, %v523
        %v529 = vcombine.high %v515, %v523
        %v531 = vunpack.c.l.s4 1983009808
        %v532 = vunpack.c.0.s8 %v531
        %v533 = vlaneseq
        %v534 = vshrl.u32 %v533, 7
        %v535 = vsub.s32 %v532, %v534
        %v536 = vrot.slane %v528, %v535
        %v538 = vunpack.c.l.s4 1983009808
        %v539 = vunpack.c.0.s8 %v538
        %v540 = vlaneseq
        %v541 = vshrl.u32 %v540, 7
        %v542 = vsub.s32 %v539, %v541
        %v543 = vrot.slane %v529, %v542
        %v544 = vcombine.low %v520, %v526
        %v545 = vcombine.high %v520, %v526
        %v547 = vunpack.c.l.s4 1983009808
        %v548 = vunpack.c.0.s8 %v547
        %v549 = vlaneseq
        %v550 = vshrl.u32 %v549, 7
        %v551 = vsub.s32 %v548, %v550
        %v552 = vrot.slane %v544, %v551
        %v554 = vunpack.c.l.s4 1983009808
        %v555 = vunpack.c.0.s8 %v554
        %v556 = vlaneseq
        %v557 = vshrl.u32 %v556, 7
        %v558 = vsub.s32 %v555, %v557
        %v559 = vrot.slane %v545, %v558
        %v560 = vcombine.low %v536, %v552
        %v561 = vcombine.high %v536, %v552
        %v563 = vunpack.c.l.s4 1934713408
        %v564 = vunpack.c.0.s8 %v563
        %v565 = vlaneseq
        %v566 = vshrl.u32 %v565, 7
        %v567 = vsub.s32 %v564, %v566
        %v568 = vrot.slane %v560, %v567
        %v570 = vunpack.c.l.s4 1934713408
        %v571 = vunpack.c.0.s8 %v570
        %v572 = vlaneseq
        %v573 = vshrl.u32 %v572, 7
        %v574 = vsub.s32 %v571, %v573
        %v575 = vrot.slane %v561, %v574
        %v576 = vcombine.low %v543, %v559
        %v577 = vcombine.high %v543, %v559
        %v579 = vunpack.c.l.s4 1934713408
        %v580 = vunpack.c.0.s8 %v579
        %v581 = vlaneseq
        %v582 = vshrl.u32 %v581, 7
        %v583 = vsub.s32 %v580, %v582
        %v584 = vrot.slane %v576, %v583
        %v586 = vunpack.c.l.s4 1934713408
        %v587 = vunpack.c.0.s8 %v586
        %v588 = vlaneseq
        %v589 = vshrl.u32 %v588, 7
        %v590 = vsub.s32 %v587, %v589
        %v591 = vrot.slane %v577, %v590
        %v592 = vcombine.high %v568, 0.0
        %v593 = vcombine.high %v575, 0.0
        %v594 = vcombine.high %v584, 0.0
        %v595 = vcombine.high %v591, 0.0
        %v596 = vcombine.low %v568, %v575
        %v598 = vunpack.c.l.s4 1983009808
        %v599 = vunpack.c.0.s8 %v598
        %v600 = vlaneseq
        %v601 = vshrl.u32 %v600, 7
        %v602 = vsub.s32 %v599, %v601
        %v603 = vrot.slane %v596, %v602
        %v604 = vcombine.low %v592, %v593
        %v606 = vunpack.c.l.s4 1983009808
        %v607 = vunpack.c.0.s8 %v606
        %v608 = vlaneseq
        %v609 = vshrl.u32 %v608, 7
        %v610 = vsub.s32 %v607, %v609
        %v611 = vrot.slane %v604, %v610
        %v612 = vcombine.low %v584, %v591
        %v614 = vunpack.c.l.s4 1983009808
        %v615 = vunpack.c.0.s8 %v614
        %v616 = vlaneseq
        %v617 = vshrl.u32 %v616, 7
        %v618 = vsub.s32 %v615, %v617
        %v619 = vrot.slane %v612, %v618
        %v620 = vcombine.low %v594, %v595
        %v622 = vunpack.c.l.s4 1983009808
        %v623 = vunpack.c.0.s8 %v622
        %v624 = vlaneseq
        %v625 = vshrl.u32 %v624, 7
        %v626 = vsub.s32 %v623, %v625
        %v627 = vrot.slane %v620, %v626
        %v628 = vcombine.low %v603, %v611
        %v629 = vcombine.high %v603, %v611
        %v631 = vunpack.c.l.s4 1934713408
        %v632 = vunpack.c.0.s8 %v631
        %v633 = vlaneseq
        %v634 = vshrl.u32 %v633, 7
        %v635 = vsub.s32 %v632, %v634
        %v636 = vrot.slane %v628, %v635
        %v638 = vunpack.c.l.s4 1934713408
        %v639 = vunpack.c.0.s8 %v638
        %v640 = vlaneseq
        %v641 = vshrl.u32 %v640, 7
        %v642 = vsub.s32 %v639, %v641
        %v643 = vrot.slane %v629, %v642
        %v644 = vcombine.low %v619, %v627
        %v645 = vcombine.high %v619, %v627
        %v647 = vunpack.c.l.s4 1934713408
        %v648 = vunpack.c.0.s8 %v647
        %v649 = vlaneseq
        %v650 = vshrl.u32 %v649, 7
        %v651 = vsub.s32 %v648, %v650
        %v652 = vrot.slane %v644, %v651
        %v654 = vunpack.c.l.s4 1934713408
        %v655 = vunpack.c.0.s8 %v654
        %v656 = vlaneseq
        %v657 = vshrl.u32 %v656, 7
        %v658 = vsub.s32 %v655, %v657
        %v659 = vrot.slane %v645, %v658
        %v660 = vcombine.low %v636, %v652
        %v661 = vcombine.high %v636, %v652
        %v662 = vcombine.low %v643, %v659
        %v663 = vcombine.high %v643, %v659
        %664 = vrot.lane.b32.xlu0 %v515, 96
        %v665 = vpop.permute.xlu0 %664
        %666 = vrot.lane.b32.xlu0 %v520, 96
        %v667 = vpop.permute.xlu0 %666
        %668 = vrot.lane.b32.xlu0 %v523, 96
        %v669 = vpop.permute.xlu0 %668
        %670 = vrot.lane.b32.xlu0 %v526, 96
        %v671 = vpop.permute.xlu0 %670
        %v676 = vcombine.low %v665, %v669
        %v677 = vcombine.high %v665, %v669
        %v679 = vunpack.c.l.s4 1983009808
        %v680 = vunpack.c.0.s8 %v679
        %v681 = vlaneseq
        %v682 = vshrl.u32 %v681, 7
        %v683 = vsub.s32 %v680, %v682
        %v684 = vrot.slane %v676, %v683
        %v686 = vunpack.c.l.s4 1983009808
        %v687 = vunpack.c.0.s8 %v686
        %v688 = vlaneseq
        %v689 = vshrl.u32 %v688, 7
        %v690 = vsub.s32 %v687, %v689
        %v691 = vrot.slane %v677, %v690
        %v692 = vcombine.low %v667, %v671
        %v693 = vcombine.high %v667, %v671
        %v695 = vunpack.c.l.s4 1983009808
        %v696 = vunpack.c.0.s8 %v695
        %v697 = vlaneseq
        %v698 = vshrl.u32 %v697, 7
        %v699 = vsub.s32 %v696, %v698
        %v700 = vrot.slane %v692, %v699
        %v702 = vunpack.c.l.s4 1983009808
        %v703 = vunpack.c.0.s8 %v702
        %v704 = vlaneseq
        %v705 = vshrl.u32 %v704, 7
        %v706 = vsub.s32 %v703, %v705
        %v707 = vrot.slane %v693, %v706
        %v708 = vcombine.low %v684, %v700
        %v709 = vcombine.high %v684, %v700
        %v711 = vunpack.c.l.s4 1934713408
        %v712 = vunpack.c.0.s8 %v711
        %v713 = vlaneseq
        %v714 = vshrl.u32 %v713, 7
        %v715 = vsub.s32 %v712, %v714
        %v716 = vrot.slane %v708, %v715
        %v718 = vunpack.c.l.s4 1934713408
        %v719 = vunpack.c.0.s8 %v718
        %v720 = vlaneseq
        %v721 = vshrl.u32 %v720, 7
        %v722 = vsub.s32 %v719, %v721
        %v723 = vrot.slane %v709, %v722
        %v724 = vcombine.low %v691, %v707
        %v725 = vcombine.high %v691, %v707
        %v727 = vunpack.c.l.s4 1934713408
        %v728 = vunpack.c.0.s8 %v727
        %v729 = vlaneseq
        %v730 = vshrl.u32 %v729, 7
        %v731 = vsub.s32 %v728, %v730
        %v732 = vrot.slane %v724, %v731
        %v734 = vunpack.c.l.s4 1934713408
        %v735 = vunpack.c.0.s8 %v734
        %v736 = vlaneseq
        %v737 = vshrl.u32 %v736, 7
        %v738 = vsub.s32 %v735, %v737
        %v739 = vrot.slane %v725, %v738
        %v740 = vcombine.high %v716, 0.0
        %v741 = vcombine.high %v723, 0.0
        %v742 = vcombine.high %v732, 0.0
        %v743 = vcombine.high %v739, 0.0
        %v744 = vcombine.low %v716, %v723
        %v746 = vunpack.c.l.s4 1983009808
        %v747 = vunpack.c.0.s8 %v746
        %v748 = vlaneseq
        %v749 = vshrl.u32 %v748, 7
        %v750 = vsub.s32 %v747, %v749
        %v751 = vrot.slane %v744, %v750
        %v752 = vcombine.low %v740, %v741
        %v754 = vunpack.c.l.s4 1983009808
        %v755 = vunpack.c.0.s8 %v754
        %v756 = vlaneseq
        %v757 = vshrl.u32 %v756, 7
        %v758 = vsub.s32 %v755, %v757
        %v759 = vrot.slane %v752, %v758
        %v760 = vcombine.low %v732, %v739
        %v762 = vunpack.c.l.s4 1983009808
        %v763 = vunpack.c.0.s8 %v762
        %v764 = vlaneseq
        %v765 = vshrl.u32 %v764, 7
        %v766 = vsub.s32 %v763, %v765
        %v767 = vrot.slane %v760, %v766
        %v768 = vcombine.low %v742, %v743
        %v770 = vunpack.c.l.s4 1983009808
        %v771 = vunpack.c.0.s8 %v770
        %v772 = vlaneseq
        %v773 = vshrl.u32 %v772, 7
        %v774 = vsub.s32 %v771, %v773
        %v775 = vrot.slane %v768, %v774
        %v776 = vcombine.low %v751, %v759
        %v777 = vcombine.high %v751, %v759
        %v779 = vunpack.c.l.s4 1934713408
        %v780 = vunpack.c.0.s8 %v779
        %v781 = vlaneseq
        %v782 = vshrl.u32 %v781, 7
        %v783 = vsub.s32 %v780, %v782
        %v784 = vrot.slane %v776, %v783
        %v786 = vunpack.c.l.s4 1934713408
        %v787 = vunpack.c.0.s8 %v786
        %v788 = vlaneseq
        %v789 = vshrl.u32 %v788, 7
        %v790 = vsub.s32 %v787, %v789
        %v791 = vrot.slane %v777, %v790
        %v792 = vcombine.low %v767, %v775
        %v793 = vcombine.high %v767, %v775
        %v795 = vunpack.c.l.s4 1934713408
        %v796 = vunpack.c.0.s8 %v795
        %v797 = vlaneseq
        %v798 = vshrl.u32 %v797, 7
        %v799 = vsub.s32 %v796, %v798
        %v800 = vrot.slane %v792, %v799
        %v802 = vunpack.c.l.s4 1934713408
        %v803 = vunpack.c.0.s8 %v802
        %v804 = vlaneseq
        %v805 = vshrl.u32 %v804, 7
        %v806 = vsub.s32 %v803, %v805
        %v807 = vrot.slane %v793, %v806
        %v808 = vcombine.low %v784, %v800
        %v809 = vcombine.high %v784, %v800
        %v810 = vcombine.low %v791, %v807
        %v811 = vcombine.high %v791, %v807
        %812 = vrot.lane.b32.xlu0 %v515, 64
        %v813 = vpop.permute.xlu0 %812
        %814 = vrot.lane.b32.xlu0 %v520, 64
        %v815 = vpop.permute.xlu0 %814
        %816 = vrot.lane.b32.xlu0 %v523, 64
        %v817 = vpop.permute.xlu0 %816
        %818 = vrot.lane.b32.xlu0 %v526, 64
        %v819 = vpop.permute.xlu0 %818
        %v824 = vcombine.low %v813, %v817
        %v825 = vcombine.high %v813, %v817
        %v827 = vunpack.c.l.s4 1983009808
        %v828 = vunpack.c.0.s8 %v827
        %v829 = vlaneseq
        %v830 = vshrl.u32 %v829, 7
        %v831 = vsub.s32 %v828, %v830
        %v832 = vrot.slane %v824, %v831
        %v834 = vunpack.c.l.s4 1983009808
        %v835 = vunpack.c.0.s8 %v834
        %v836 = vlaneseq
        %v837 = vshrl.u32 %v836, 7
        %v838 = vsub.s32 %v835, %v837
        %v839 = vrot.slane %v825, %v838
        %v840 = vcombine.low %v815, %v819
        %v841 = vcombine.high %v815, %v819
        %v843 = vunpack.c.l.s4 1983009808
        %v844 = vunpack.c.0.s8 %v843
        %v845 = vlaneseq
        %v846 = vshrl.u32 %v845, 7
        %v847 = vsub.s32 %v844, %v846
        %v848 = vrot.slane %v840, %v847
        %v850 = vunpack.c.l.s4 1983009808
        %v851 = vunpack.c.0.s8 %v850
        %v852 = vlaneseq
        %v853 = vshrl.u32 %v852, 7
        %v854 = vsub.s32 %v851, %v853
        %v855 = vrot.slane %v841, %v854
        %v856 = vcombine.low %v832, %v848
        %v857 = vcombine.high %v832, %v848
        %v859 = vunpack.c.l.s4 1934713408
        %v860 = vunpack.c.0.s8 %v859
        %v861 = vlaneseq
        %v862 = vshrl.u32 %v861, 7
        %v863 = vsub.s32 %v860, %v862
        %v864 = vrot.slane %v856, %v863
        %v866 = vunpack.c.l.s4 1934713408
        %v867 = vunpack.c.0.s8 %v866
        %v868 = vlaneseq
        %v869 = vshrl.u32 %v868, 7
        %v870 = vsub.s32 %v867, %v869
        %v871 = vrot.slane %v857, %v870
        %v872 = vcombine.low %v839, %v855
        %v873 = vcombine.high %v839, %v855
        %v875 = vunpack.c.l.s4 1934713408
        %v876 = vunpack.c.0.s8 %v875
        %v877 = vlaneseq
        %v878 = vshrl.u32 %v877, 7
        %v879 = vsub.s32 %v876, %v878
        %v880 = vrot.slane %v872, %v879
        %v882 = vunpack.c.l.s4 1934713408
        %v883 = vunpack.c.0.s8 %v882
        %v884 = vlaneseq
        %v885 = vshrl.u32 %v884, 7
        %v886 = vsub.s32 %v883, %v885
        %v887 = vrot.slane %v873, %v886
        %v888 = vcombine.high %v864, 0.0
        %v889 = vcombine.high %v871, 0.0
        %v890 = vcombine.high %v880, 0.0
        %v891 = vcombine.high %v887, 0.0
        %v892 = vcombine.low %v864, %v871
        %v894 = vunpack.c.l.s4 1983009808
        %v895 = vunpack.c.0.s8 %v894
        %v896 = vlaneseq
        %v897 = vshrl.u32 %v896, 7
        %v898 = vsub.s32 %v895, %v897
        %v899 = vrot.slane %v892, %v898
        %v900 = vcombine.low %v888, %v889
        %v902 = vunpack.c.l.s4 1983009808
        %v903 = vunpack.c.0.s8 %v902
        %v904 = vlaneseq
        %v905 = vshrl.u32 %v904, 7
        %v906 = vsub.s32 %v903, %v905
        %v907 = vrot.slane %v900, %v906
        %v908 = vcombine.low %v880, %v887
        %v910 = vunpack.c.l.s4 1983009808
        %v911 = vunpack.c.0.s8 %v910
        %v912 = vlaneseq
        %v913 = vshrl.u32 %v912, 7
        %v914 = vsub.s32 %v911, %v913
        %v915 = vrot.slane %v908, %v914
        %v916 = vcombine.low %v890, %v891
        %v918 = vunpack.c.l.s4 1983009808
        %v919 = vunpack.c.0.s8 %v918
        %v920 = vlaneseq
        %v921 = vshrl.u32 %v920, 7
        %v922 = vsub.s32 %v919, %v921
        %v923 = vrot.slane %v916, %v922
        %v924 = vcombine.low %v899, %v907
        %v925 = vcombine.high %v899, %v907
        %v927 = vunpack.c.l.s4 1934713408
        %v928 = vunpack.c.0.s8 %v927
        %v929 = vlaneseq
        %v930 = vshrl.u32 %v929, 7
        %v931 = vsub.s32 %v928, %v930
        %v932 = vrot.slane %v924, %v931
        %v934 = vunpack.c.l.s4 1934713408
        %v935 = vunpack.c.0.s8 %v934
        %v936 = vlaneseq
        %v937 = vshrl.u32 %v936, 7
        %v938 = vsub.s32 %v935, %v937
        %v939 = vrot.slane %v925, %v938
        %v940 = vcombine.low %v915, %v923
        %v941 = vcombine.high %v915, %v923
        %v943 = vunpack.c.l.s4 1934713408
        %v944 = vunpack.c.0.s8 %v943
        %v945 = vlaneseq
        %v946 = vshrl.u32 %v945, 7
        %v947 = vsub.s32 %v944, %v946
        %v948 = vrot.slane %v940, %v947
        %v950 = vunpack.c.l.s4 1934713408
        %v951 = vunpack.c.0.s8 %v950
        %v952 = vlaneseq
        %v953 = vshrl.u32 %v952, 7
        %v954 = vsub.s32 %v951, %v953
        %v955 = vrot.slane %v941, %v954
        %v956 = vcombine.low %v932, %v948
        %v957 = vcombine.high %v932, %v948
        %v958 = vcombine.low %v939, %v955
        %v959 = vcombine.high %v939, %v955
        %vm960 = vcmask 64512
        %v962 = vsel %vm960, %v660, 0
        %v965 = vsel %vm960, %v808, 0
        %967 = vmatprep.subr.mxu0 0.0
        %968 = vmatpush1.xpose.msra.mxu0 0.0
        %969 = vmatprep.subr.mxu0 0.0
        %970 = vmatpush1.xpose.msra.mxu0 0.0
        %971 = vmatprep.subr.mxu0 0.0
        %972 = vmatpush1.xpose.msra.mxu0 0.0
        %973 = vmatprep.subr.mxu0 0.0
        %974 = vmatpush1.xpose.msra.mxu0 0.0
        %975 = vmatprep.subr.mxu0 0.0
        %976 = vmatpush1.xpose.msra.mxu0 0.0
        %977 = vmatprep.subr.mxu0 0.0
        %978 = vmatpush1.xpose.msra.mxu0 0.0
        %979 = vmatprep.subr.mxu0 0.0
        %980 = vmatpush1.xpose.msra.mxu0 0.0
        %981 = vmatprep.subr.mxu0 0.0
        %982 = vmatpush1.xpose.msra.mxu0 0.0
        %983 = vmatprep.subr.mxu0 0.0
        %984 = vmatpush1.xpose.msra.mxu0 0.0
        %985 = vmatprep.subr.mxu0 0.0
        %986 = vmatpush1.xpose.msra.mxu0 0.0
        %987 = vmatprep.subr.mxu0 0.0
        %988 = vmatpush1.xpose.msra.mxu0 0.0
        %989 = vmatprep.subr.mxu0 0.0
        %990 = vmatpush1.xpose.msra.mxu0 0.0
        %991 = vmatprep.subr.mxu0 0.0
        %992 = vmatpush1.xpose.msra.mxu0 0.0
        %993 = vmatprep.subr.mxu0 0.0
        %994 = vmatpush1.xpose.msra.mxu0 0.0
        %995 = vmatprep.subr.mxu0 0.0
        %996 = vmatpush1.xpose.msra.mxu0 0.0
        %997 = vmatprep.subr.mxu0 0.0
        %998 = vmatpush1.xpose.msra.mxu0 %v965
        %999 = vmatprep.subr.mxu0 0.0
        %1000 = vmatpush2.xpose.msra.mxu0 0.0
        %1001 = vmatprep.subr.mxu0 0.0
        %1002 = vmatpush2.xpose.msra.mxu0 0.0
        %1003 = vmatprep.subr.mxu0 0.0
        %1004 = vmatpush2.xpose.msra.mxu0 0.0
        %1005 = vmatprep.subr.mxu0 0.0
        %1006 = vmatpush2.xpose.msra.mxu0 0.0
        %1007 = vmatprep.subr.mxu0 0.0
        %1008 = vmatpush2.xpose.msra.mxu0 0.0
        %1009 = vmatprep.subr.mxu0 0.0
        %1010 = vmatpush2.xpose.msra.mxu0 0.0
        %1011 = vmatprep.subr.mxu0 0.0
        %1012 = vmatpush2.xpose.msra.mxu0 0.0
        %1013 = vmatprep.subr.mxu0 0.0
        %1014 = vmatpush2.xpose.msra.mxu0 0.0
        %1015 = vmatprep.subr.mxu0 0.0
        %1016 = vmatpush2.xpose.msra.mxu0 0.0
        %1017 = vmatprep.subr.mxu0 0.0
        %1018 = vmatpush2.xpose.msra.mxu0 0.0
        %1019 = vmatprep.subr.mxu0 0.0
        %1020 = vmatpush2.xpose.msra.mxu0 0.0
        %1021 = vmatprep.subr.mxu0 0.0
        %1022 = vmatpush2.xpose.msra.mxu0 0.0
        %1023 = vmatprep.subr.mxu0 0.0
        %1024 = vmatpush2.xpose.msra.mxu0 0.0
        %1025 = vmatprep.subr.mxu0 0.0
        %1026 = vmatpush2.xpose.msra.mxu0 0.0
        %1027 = vmatprep.subr.mxu0 0.0
        %1028 = vmatpush2.xpose.msra.mxu0 0.0
        %1029 = vmatprep.subr.mxu0 0.0
        %1030 = vmatpush2.xpose.msra.mxu0 0.0
        %1031 = vmatprep.mubr.f32.mxu0 0.0
        %1032 = vmatmul.mubr.f32.gmra.mxu0 %v962
        %v1033 = vpop.f32.mrf.mxu0
        %v1034 = vadd.f32 0.0, %v1033
        %v1035 = vpop.f32.mrf.mxu0
        %1036 = vdwg.mxu0
        %v1038 = vsel %vm960, %v661, 0
        %v1041 = vsel %vm960, %v809, 0
        %1043 = vmatprep.subr.mxu0 0.0
        %1044 = vmatpush1.xpose.msra.mxu0 0.0
        %1045 = vmatprep.subr.mxu0 0.0
        %1046 = vmatpush1.xpose.msra.mxu0 0.0
        %1047 = vmatprep.subr.mxu0 0.0
        %1048 = vmatpush1.xpose.msra.mxu0 0.0
        %1049 = vmatprep.subr.mxu0 0.0
        %1050 = vmatpush1.xpose.msra.mxu0 0.0
        %1051 = vmatprep.subr.mxu0 0.0
        %1052 = vmatpush1.xpose.msra.mxu0 0.0
        %1053 = vmatprep.subr.mxu0 0.0
        %1054 = vmatpush1.xpose.msra.mxu0 0.0
        %1055 = vmatprep.subr.mxu0 0.0
        %1056 = vmatpush1.xpose.msra.mxu0 0.0
        %1057 = vmatprep.subr.mxu0 0.0
        %1058 = vmatpush1.xpose.msra.mxu0 0.0
        %1059 = vmatprep.subr.mxu0 0.0
        %1060 = vmatpush1.xpose.msra.mxu0 0.0
        %1061 = vmatprep.subr.mxu0 0.0
        %1062 = vmatpush1.xpose.msra.mxu0 0.0
        %1063 = vmatprep.subr.mxu0 0.0
        %1064 = vmatpush1.xpose.msra.mxu0 0.0
        %1065 = vmatprep.subr.mxu0 0.0
        %1066 = vmatpush1.xpose.msra.mxu0 0.0
        %1067 = vmatprep.subr.mxu0 0.0
        %1068 = vmatpush1.xpose.msra.mxu0 0.0
        %1069 = vmatprep.subr.mxu0 0.0
        %1070 = vmatpush1.xpose.msra.mxu0 0.0
        %1071 = vmatprep.subr.mxu0 0.0
        %1072 = vmatpush1.xpose.msra.mxu0 0.0
        %1073 = vmatprep.subr.mxu0 0.0
        %1074 = vmatpush1.xpose.msra.mxu0 %v1041
        %1075 = vmatprep.subr.mxu0 0.0
        %1076 = vmatpush2.xpose.msra.mxu0 0.0
        %1077 = vmatprep.subr.mxu0 0.0
        %1078 = vmatpush2.xpose.msra.mxu0 0.0
        %1079 = vmatprep.subr.mxu0 0.0
        %1080 = vmatpush2.xpose.msra.mxu0 0.0
        %1081 = vmatprep.subr.mxu0 0.0
        %1082 = vmatpush2.xpose.msra.mxu0 0.0
        %1083 = vmatprep.subr.mxu0 0.0
        %1084 = vmatpush2.xpose.msra.mxu0 0.0
        %1085 = vmatprep.subr.mxu0 0.0
        %1086 = vmatpush2.xpose.msra.mxu0 0.0
        %1087 = vmatprep.subr.mxu0 0.0
        %1088 = vmatpush2.xpose.msra.mxu0 0.0
        %1089 = vmatprep.subr.mxu0 0.0
        %1090 = vmatpush2.xpose.msra.mxu0 0.0
        %1091 = vmatprep.subr.mxu0 0.0
        %1092 = vmatpush2.xpose.msra.mxu0 0.0
        %1093 = vmatprep.subr.mxu0 0.0
        %1094 = vmatpush2.xpose.msra.mxu0 0.0
        %1095 = vmatprep.subr.mxu0 0.0
        %1096 = vmatpush2.xpose.msra.mxu0 0.0
        %1097 = vmatprep.subr.mxu0 0.0
        %1098 = vmatpush2.xpose.msra.mxu0 0.0
        %1099 = vmatprep.subr.mxu0 0.0
        %1100 = vmatpush2.xpose.msra.mxu0 0.0
        %1101 = vmatprep.subr.mxu0 0.0
        %1102 = vmatpush2.xpose.msra.mxu0 0.0
        %1103 = vmatprep.subr.mxu0 0.0
        %1104 = vmatpush2.xpose.msra.mxu0 0.0
        %1105 = vmatprep.subr.mxu0 0.0
        %1106 = vmatpush2.xpose.msra.mxu0 0.0
        %1107 = vmatprep.mubr.f32.mxu0 0.0
        %1108 = vmatmul.mubr.f32.gmra.mxu0 %v1038
        %v1109 = vpop.f32.mrf.mxu0
        %v1110 = vadd.f32 0.0, %v1109
        %v1111 = vpop.f32.mrf.mxu0
        %1112 = vdwg.mxu0
        %v1114 = vsel %vm960, %v662, 0
        %v1117 = vsel %vm960, %v810, 0
        %1119 = vmatprep.subr.mxu0 0.0
        %1120 = vmatpush1.xpose.msra.mxu0 0.0
        %1121 = vmatprep.subr.mxu0 0.0
        %1122 = vmatpush1.xpose.msra.mxu0 0.0
        %1123 = vmatprep.subr.mxu0 0.0
        %1124 = vmatpush1.xpose.msra.mxu0 0.0
        %1125 = vmatprep.subr.mxu0 0.0
        %1126 = vmatpush1.xpose.msra.mxu0 0.0
        %1127 = vmatprep.subr.mxu0 0.0
        %1128 = vmatpush1.xpose.msra.mxu0 0.0
        %1129 = vmatprep.subr.mxu0 0.0
        %1130 = vmatpush1.xpose.msra.mxu0 0.0
        %1131 = vmatprep.subr.mxu0 0.0
        %1132 = vmatpush1.xpose.msra.mxu0 0.0
        %1133 = vmatprep.subr.mxu0 0.0
        %1134 = vmatpush1.xpose.msra.mxu0 0.0
        %1135 = vmatprep.subr.mxu0 0.0
        %1136 = vmatpush1.xpose.msra.mxu0 0.0
        %1137 = vmatprep.subr.mxu0 0.0
        %1138 = vmatpush1.xpose.msra.mxu0 0.0
        %1139 = vmatprep.subr.mxu0 0.0
        %1140 = vmatpush1.xpose.msra.mxu0 0.0
        %1141 = vmatprep.subr.mxu0 0.0
        %1142 = vmatpush1.xpose.msra.mxu0 0.0
        %1143 = vmatprep.subr.mxu0 0.0
        %1144 = vmatpush1.xpose.msra.mxu0 0.0
        %1145 = vmatprep.subr.mxu0 0.0
        %1146 = vmatpush1.xpose.msra.mxu0 0.0
        %1147 = vmatprep.subr.mxu0 0.0
        %1148 = vmatpush1.xpose.msra.mxu0 0.0
        %1149 = vmatprep.subr.mxu0 0.0
        %1150 = vmatpush1.xpose.msra.mxu0 %v1117
        %1151 = vmatprep.subr.mxu0 0.0
        %1152 = vmatpush2.xpose.msra.mxu0 0.0
        %1153 = vmatprep.subr.mxu0 0.0
        %1154 = vmatpush2.xpose.msra.mxu0 0.0
        %1155 = vmatprep.subr.mxu0 0.0
        %1156 = vmatpush2.xpose.msra.mxu0 0.0
        %1157 = vmatprep.subr.mxu0 0.0
        %1158 = vmatpush2.xpose.msra.mxu0 0.0
        %1159 = vmatprep.subr.mxu0 0.0
        %1160 = vmatpush2.xpose.msra.mxu0 0.0
        %1161 = vmatprep.subr.mxu0 0.0
        %1162 = vmatpush2.xpose.msra.mxu0 0.0
        %1163 = vmatprep.subr.mxu0 0.0
        %1164 = vmatpush2.xpose.msra.mxu0 0.0
        %1165 = vmatprep.subr.mxu0 0.0
        %1166 = vmatpush2.xpose.msra.mxu0 0.0
        %1167 = vmatprep.subr.mxu0 0.0
        %1168 = vmatpush2.xpose.msra.mxu0 0.0
        %1169 = vmatprep.subr.mxu0 0.0
        %1170 = vmatpush2.xpose.msra.mxu0 0.0
        %1171 = vmatprep.subr.mxu0 0.0
        %1172 = vmatpush2.xpose.msra.mxu0 0.0
        %1173 = vmatprep.subr.mxu0 0.0
        %1174 = vmatpush2.xpose.msra.mxu0 0.0
        %1175 = vmatprep.subr.mxu0 0.0
        %1176 = vmatpush2.xpose.msra.mxu0 0.0
        %1177 = vmatprep.subr.mxu0 0.0
        %1178 = vmatpush2.xpose.msra.mxu0 0.0
        %1179 = vmatprep.subr.mxu0 0.0
        %1180 = vmatpush2.xpose.msra.mxu0 0.0
        %1181 = vmatprep.subr.mxu0 0.0
        %1182 = vmatpush2.xpose.msra.mxu0 0.0
        %1183 = vmatprep.mubr.f32.mxu0 0.0
        %1184 = vmatmul.mubr.f32.gmra.mxu0 %v1114
        %v1185 = vpop.f32.mrf.mxu0
        %v1186 = vadd.f32 0.0, %v1185
        %v1187 = vpop.f32.mrf.mxu0
        %1188 = vdwg.mxu0
        %v1190 = vsel %vm960, %v663, 0
        %v1193 = vsel %vm960, %v811, 0
        %1195 = vmatprep.subr.mxu0 0.0
        %1196 = vmatpush1.xpose.msra.mxu0 0.0
        %1197 = vmatprep.subr.mxu0 0.0
        %1198 = vmatpush1.xpose.msra.mxu0 0.0
        %1199 = vmatprep.subr.mxu0 0.0
        %1200 = vmatpush1.xpose.msra.mxu0 0.0
        %1201 = vmatprep.subr.mxu0 0.0
        %1202 = vmatpush1.xpose.msra.mxu0 0.0
        %1203 = vmatprep.subr.mxu0 0.0
        %1204 = vmatpush1.xpose.msra.mxu0 0.0
        %1205 = vmatprep.subr.mxu0 0.0
        %1206 = vmatpush1.xpose.msra.mxu0 0.0
        %1207 = vmatprep.subr.mxu0 0.0
        %1208 = vmatpush1.xpose.msra.mxu0 0.0
        %1209 = vmatprep.subr.mxu0 0.0
        %1210 = vmatpush1.xpose.msra.mxu0 0.0
        %1211 = vmatprep.subr.mxu0 0.0
        %1212 = vmatpush1.xpose.msra.mxu0 0.0
        %1213 = vmatprep.subr.mxu0 0.0
        %1214 = vmatpush1.xpose.msra.mxu0 0.0
        %1215 = vmatprep.subr.mxu0 0.0
        %1216 = vmatpush1.xpose.msra.mxu0 0.0
        %1217 = vmatprep.subr.mxu0 0.0
        %1218 = vmatpush1.xpose.msra.mxu0 0.0
        %1219 = vmatprep.subr.mxu0 0.0
        %1220 = vmatpush1.xpose.msra.mxu0 0.0
        %1221 = vmatprep.subr.mxu0 0.0
        %1222 = vmatpush1.xpose.msra.mxu0 0.0
        %1223 = vmatprep.subr.mxu0 0.0
        %1224 = vmatpush1.xpose.msra.mxu0 0.0
        %1225 = vmatprep.subr.mxu0 0.0
        %1226 = vmatpush1.xpose.msra.mxu0 %v1193
        %1227 = vmatprep.subr.mxu0 0.0
        %1228 = vmatpush2.xpose.msra.mxu0 0.0
        %1229 = vmatprep.subr.mxu0 0.0
        %1230 = vmatpush2.xpose.msra.mxu0 0.0
        %1231 = vmatprep.subr.mxu0 0.0
        %1232 = vmatpush2.xpose.msra.mxu0 0.0
        %1233 = vmatprep.subr.mxu0 0.0
        %1234 = vmatpush2.xpose.msra.mxu0 0.0
        %1235 = vmatprep.subr.mxu0 0.0
        %1236 = vmatpush2.xpose.msra.mxu0 0.0
        %1237 = vmatprep.subr.mxu0 0.0
        %1238 = vmatpush2.xpose.msra.mxu0 0.0
        %1239 = vmatprep.subr.mxu0 0.0
        %1240 = vmatpush2.xpose.msra.mxu0 0.0
        %1241 = vmatprep.subr.mxu0 0.0
        %1242 = vmatpush2.xpose.msra.mxu0 0.0
        %1243 = vmatprep.subr.mxu0 0.0
        %1244 = vmatpush2.xpose.msra.mxu0 0.0
        %1245 = vmatprep.subr.mxu0 0.0
        %1246 = vmatpush2.xpose.msra.mxu0 0.0
        %1247 = vmatprep.subr.mxu0 0.0
        %1248 = vmatpush2.xpose.msra.mxu0 0.0
        %1249 = vmatprep.subr.mxu0 0.0
        %1250 = vmatpush2.xpose.msra.mxu0 0.0
        %1251 = vmatprep.subr.mxu0 0.0
        %1252 = vmatpush2.xpose.msra.mxu0 0.0
        %1253 = vmatprep.subr.mxu0 0.0
        %1254 = vmatpush2.xpose.msra.mxu0 0.0
        %1255 = vmatprep.subr.mxu0 0.0
        %1256 = vmatpush2.xpose.msra.mxu0 0.0
        %1257 = vmatprep.subr.mxu0 0.0
        %1258 = vmatpush2.xpose.msra.mxu0 0.0
        %1259 = vmatprep.mubr.f32.mxu0 0.0
        %1260 = vmatmul.mubr.f32.gmra.mxu0 %v1190
        %v1261 = vpop.f32.mrf.mxu0
        %v1262 = vadd.f32 0.0, %v1261
        %v1263 = vpop.f32.mrf.mxu0
        %1264 = vdwg.mxu0
        %v1265 = vsel %vm960, %v1034, -inf
        %1266 = vmax.xlane.f32.xlu0 %v1265
        %v1267 = vpop.xlane.xlu0 %1266
        %v1268 = vsel %vm960, %v1110, -inf
        %1269 = vmax.xlane.f32.xlu0 %v1268
        %v1270 = vpop.xlane.xlu0 %1269
        %v1271 = vsel %vm960, %v1186, -inf
        %1272 = vmax.xlane.f32.xlu0 %v1271
        %v1273 = vpop.xlane.xlu0 %1272
        %v1274 = vsel %vm960, %v1262, -inf
        %1275 = vmax.xlane.f32.xlu0 %v1274
        %v1276 = vpop.xlane.xlu0 %1275
        %v1277 = vsub.f32 %v1034, %v1267
        %v1278 = vsub.f32 %v1110, %v1270
        %v1279 = vsub.f32 %v1186, %v1273
        %v1280 = vsub.f32 %v1262, %v1276
        %v1281 = vmul.f32 %v1277, 1.442695
        %v1282 = vpow.pop %v1281
        %v1283 = vmul.f32 %v1278, 1.442695
        %v1284 = vpow.pop %v1283
        %v1285 = vmul.f32 %v1279, 1.442695
        %v1286 = vpow.pop %v1285
        %v1287 = vmul.f32 %v1280, 1.442695
        %v1288 = vpow.pop %v1287
        %v1289 = vsel %vm960, %v1282, 0.0
        %1290 = vadd.xlane.f32.xlu0 %v1289
        %v1291 = vpop.xlane.xlu0 %1290
        %v1292 = vsel %vm960, %v1284, 0.0
        %1293 = vadd.xlane.f32.xlu0 %v1292
        %v1294 = vpop.xlane.xlu0 %1293
        %v1295 = vsel %vm960, %v1286, 0.0
        %1296 = vadd.xlane.f32.xlu0 %v1295
        %v1297 = vpop.xlane.xlu0 %1296
        %v1298 = vsel %vm960, %v1288, 0.0
        %1299 = vadd.xlane.f32.xlu0 %v1298
        %v1300 = vpop.xlane.xlu0 %1299
        %v1301 = vrcp.pop %v1291
        %v1302 = vrcp.pop %v1294
        %v1303 = vrcp.pop %v1297
        %v1304 = vrcp.pop %v1300
        %v1305 = vmul.f32 %v1282, %v1301
        %v1306 = vmul.f32 %v1284, %v1302
        %v1307 = vmul.f32 %v1286, %v1303
        %v1308 = vmul.f32 %v1288, %v1304
        %v1310 = vsel %vm960, %v1305, 0
        %1312 = vmatprep.subr.mxu0 0.0
        %1313 = vmatpush1.msra.mxu0 0.0
        %1314 = vmatprep.subr.mxu0 0.0
        %1315 = vmatpush1.msra.mxu0 0.0
        %1316 = vmatprep.subr.mxu0 0.0
        %1317 = vmatpush1.msra.mxu0 0.0
        %1318 = vmatprep.subr.mxu0 0.0
        %1319 = vmatpush1.msra.mxu0 0.0
        %1320 = vmatprep.subr.mxu0 0.0
        %1321 = vmatpush1.msra.mxu0 0.0
        %1322 = vmatprep.subr.mxu0 0.0
        %1323 = vmatpush1.msra.mxu0 0.0
        %1324 = vmatprep.subr.mxu0 0.0
        %1325 = vmatpush1.msra.mxu0 0.0
        %1326 = vmatprep.subr.mxu0 0.0
        %1327 = vmatpush1.msra.mxu0 0.0
        %1328 = vmatprep.subr.mxu0 0.0
        %1329 = vmatpush1.msra.mxu0 0.0
        %1330 = vmatprep.subr.mxu0 0.0
        %1331 = vmatpush1.msra.mxu0 0.0
        %1332 = vmatprep.subr.mxu0 0.0
        %1333 = vmatpush1.msra.mxu0 0.0
        %1334 = vmatprep.subr.mxu0 0.0
        %1335 = vmatpush1.msra.mxu0 0.0
        %1336 = vmatprep.subr.mxu0 0.0
        %1337 = vmatpush1.msra.mxu0 0.0
        %1338 = vmatprep.subr.mxu0 0.0
        %1339 = vmatpush1.msra.mxu0 0.0
        %1340 = vmatprep.subr.mxu0 0.0
        %1341 = vmatpush1.msra.mxu0 0.0
        %1342 = vmatprep.subr.mxu0 0.0
        %1343 = vmatpush1.msra.mxu0 %v956
        %1344 = vmatprep.subr.mxu0 0.0
        %1345 = vmatpush2.msra.mxu0 0.0
        %1346 = vmatprep.subr.mxu0 0.0
        %1347 = vmatpush2.msra.mxu0 0.0
        %1348 = vmatprep.subr.mxu0 0.0
        %1349 = vmatpush2.msra.mxu0 0.0
        %1350 = vmatprep.subr.mxu0 0.0
        %1351 = vmatpush2.msra.mxu0 0.0
        %1352 = vmatprep.subr.mxu0 0.0
        %1353 = vmatpush2.msra.mxu0 0.0
        %1354 = vmatprep.subr.mxu0 0.0
        %1355 = vmatpush2.msra.mxu0 0.0
        %1356 = vmatprep.subr.mxu0 0.0
        %1357 = vmatpush2.msra.mxu0 0.0
        %1358 = vmatprep.subr.mxu0 0.0
        %1359 = vmatpush2.msra.mxu0 0.0
        %1360 = vmatprep.subr.mxu0 0.0
        %1361 = vmatpush2.msra.mxu0 0.0
        %1362 = vmatprep.subr.mxu0 0.0
        %1363 = vmatpush2.msra.mxu0 0.0
        %1364 = vmatprep.subr.mxu0 0.0
        %1365 = vmatpush2.msra.mxu0 0.0
        %1366 = vmatprep.subr.mxu0 0.0
        %1367 = vmatpush2.msra.mxu0 0.0
        %1368 = vmatprep.subr.mxu0 0.0
        %1369 = vmatpush2.msra.mxu0 0.0
        %1370 = vmatprep.subr.mxu0 0.0
        %1371 = vmatpush2.msra.mxu0 0.0
        %1372 = vmatprep.subr.mxu0 0.0
        %1373 = vmatpush2.msra.mxu0 0.0
        %1374 = vmatprep.subr.mxu0 0.0
        %1375 = vmatpush2.msra.mxu0 0.0
        %1376 = vmatprep.mubr.f32.mxu0 0.0
        %1377 = vmatmul.mubr.f32.gmra.mxu0 %v1310
        %v1378 = vpop.f32.mrf.mxu0
        %v1379 = vadd.f32 0.0, %v1378
        %v1380 = vpop.f32.mrf.mxu0
        %1381 = vdwg.mxu0
        %v1383 = vsel %vm960, %v1306, 0
        %1385 = vmatprep.subr.mxu0 0.0
        %1386 = vmatpush1.msra.mxu0 0.0
        %1387 = vmatprep.subr.mxu0 0.0
        %1388 = vmatpush1.msra.mxu0 0.0
        %1389 = vmatprep.subr.mxu0 0.0
        %1390 = vmatpush1.msra.mxu0 0.0
        %1391 = vmatprep.subr.mxu0 0.0
        %1392 = vmatpush1.msra.mxu0 0.0
        %1393 = vmatprep.subr.mxu0 0.0
        %1394 = vmatpush1.msra.mxu0 0.0
        %1395 = vmatprep.subr.mxu0 0.0
        %1396 = vmatpush1.msra.mxu0 0.0
        %1397 = vmatprep.subr.mxu0 0.0
        %1398 = vmatpush1.msra.mxu0 0.0
        %1399 = vmatprep.subr.mxu0 0.0
        %1400 = vmatpush1.msra.mxu0 0.0
        %1401 = vmatprep.subr.mxu0 0.0
        %1402 = vmatpush1.msra.mxu0 0.0
        %1403 = vmatprep.subr.mxu0 0.0
        %1404 = vmatpush1.msra.mxu0 0.0
        %1405 = vmatprep.subr.mxu0 0.0
        %1406 = vmatpush1.msra.mxu0 0.0
        %1407 = vmatprep.subr.mxu0 0.0
        %1408 = vmatpush1.msra.mxu0 0.0
        %1409 = vmatprep.subr.mxu0 0.0
        %1410 = vmatpush1.msra.mxu0 0.0
        %1411 = vmatprep.subr.mxu0 0.0
        %1412 = vmatpush1.msra.mxu0 0.0
        %1413 = vmatprep.subr.mxu0 0.0
        %1414 = vmatpush1.msra.mxu0 0.0
        %1415 = vmatprep.subr.mxu0 0.0
        %1416 = vmatpush1.msra.mxu0 %v957
        %1417 = vmatprep.subr.mxu0 0.0
        %1418 = vmatpush2.msra.mxu0 0.0
        %1419 = vmatprep.subr.mxu0 0.0
        %1420 = vmatpush2.msra.mxu0 0.0
        %1421 = vmatprep.subr.mxu0 0.0
        %1422 = vmatpush2.msra.mxu0 0.0
        %1423 = vmatprep.subr.mxu0 0.0
        %1424 = vmatpush2.msra.mxu0 0.0
        %1425 = vmatprep.subr.mxu0 0.0
        %1426 = vmatpush2.msra.mxu0 0.0
        %1427 = vmatprep.subr.mxu0 0.0
        %1428 = vmatpush2.msra.mxu0 0.0
        %1429 = vmatprep.subr.mxu0 0.0
        %1430 = vmatpush2.msra.mxu0 0.0
        %1431 = vmatprep.subr.mxu0 0.0
        %1432 = vmatpush2.msra.mxu0 0.0
        %1433 = vmatprep.subr.mxu0 0.0
        %1434 = vmatpush2.msra.mxu0 0.0
        %1435 = vmatprep.subr.mxu0 0.0
        %1436 = vmatpush2.msra.mxu0 0.0
        %1437 = vmatprep.subr.mxu0 0.0
        %1438 = vmatpush2.msra.mxu0 0.0
        %1439 = vmatprep.subr.mxu0 0.0
        %1440 = vmatpush2.msra.mxu0 0.0
        %1441 = vmatprep.subr.mxu0 0.0
        %1442 = vmatpush2.msra.mxu0 0.0
        %1443 = vmatprep.subr.mxu0 0.0
        %1444 = vmatpush2.msra.mxu0 0.0
        %1445 = vmatprep.subr.mxu0 0.0
        %1446 = vmatpush2.msra.mxu0 0.0
        %1447 = vmatprep.subr.mxu0 0.0
        %1448 = vmatpush2.msra.mxu0 0.0
        %1449 = vmatprep.mubr.f32.mxu0 0.0
        %1450 = vmatmul.mubr.f32.gmra.mxu0 %v1383
        %v1451 = vpop.f32.mrf.mxu0
        %v1452 = vadd.f32 0.0, %v1451
        %v1453 = vpop.f32.mrf.mxu0
        %1454 = vdwg.mxu0
        %v1456 = vsel %vm960, %v1307, 0
        %1458 = vmatprep.subr.mxu0 0.0
        %1459 = vmatpush1.msra.mxu0 0.0
        %1460 = vmatprep.subr.mxu0 0.0
        %1461 = vmatpush1.msra.mxu0 0.0
        %1462 = vmatprep.subr.mxu0 0.0
        %1463 = vmatpush1.msra.mxu0 0.0
        %1464 = vmatprep.subr.mxu0 0.0
        %1465 = vmatpush1.msra.mxu0 0.0
        %1466 = vmatprep.subr.mxu0 0.0
        %1467 = vmatpush1.msra.mxu0 0.0
        %1468 = vmatprep.subr.mxu0 0.0
        %1469 = vmatpush1.msra.mxu0 0.0
        %1470 = vmatprep.subr.mxu0 0.0
        %1471 = vmatpush1.msra.mxu0 0.0
        %1472 = vmatprep.subr.mxu0 0.0
        %1473 = vmatpush1.msra.mxu0 0.0
        %1474 = vmatprep.subr.mxu0 0.0
        %1475 = vmatpush1.msra.mxu0 0.0
        %1476 = vmatprep.subr.mxu0 0.0
        %1477 = vmatpush1.msra.mxu0 0.0
        %1478 = vmatprep.subr.mxu0 0.0
        %1479 = vmatpush1.msra.mxu0 0.0
        %1480 = vmatprep.subr.mxu0 0.0
        %1481 = vmatpush1.msra.mxu0 0.0
        %1482 = vmatprep.subr.mxu0 0.0
        %1483 = vmatpush1.msra.mxu0 0.0
        %1484 = vmatprep.subr.mxu0 0.0
        %1485 = vmatpush1.msra.mxu0 0.0
        %1486 = vmatprep.subr.mxu0 0.0
        %1487 = vmatpush1.msra.mxu0 0.0
        %1488 = vmatprep.subr.mxu0 0.0
        %1489 = vmatpush1.msra.mxu0 %v958
        %1490 = vmatprep.subr.mxu0 0.0
        %1491 = vmatpush2.msra.mxu0 0.0
        %1492 = vmatprep.subr.mxu0 0.0
        %1493 = vmatpush2.msra.mxu0 0.0
        %1494 = vmatprep.subr.mxu0 0.0
        %1495 = vmatpush2.msra.mxu0 0.0
        %1496 = vmatprep.subr.mxu0 0.0
        %1497 = vmatpush2.msra.mxu0 0.0
        %1498 = vmatprep.subr.mxu0 0.0
        %1499 = vmatpush2.msra.mxu0 0.0
        %1500 = vmatprep.subr.mxu0 0.0
        %1501 = vmatpush2.msra.mxu0 0.0
        %1502 = vmatprep.subr.mxu0 0.0
        %1503 = vmatpush2.msra.mxu0 0.0
        %1504 = vmatprep.subr.mxu0 0.0
        %1505 = vmatpush2.msra.mxu0 0.0
        %1506 = vmatprep.subr.mxu0 0.0
        %1507 = vmatpush2.msra.mxu0 0.0
        %1508 = vmatprep.subr.mxu0 0.0
        %1509 = vmatpush2.msra.mxu0 0.0
        %1510 = vmatprep.subr.mxu0 0.0
        %1511 = vmatpush2.msra.mxu0 0.0
        %1512 = vmatprep.subr.mxu0 0.0
        %1513 = vmatpush2.msra.mxu0 0.0
        %1514 = vmatprep.subr.mxu0 0.0
        %1515 = vmatpush2.msra.mxu0 0.0
        %1516 = vmatprep.subr.mxu0 0.0
        %1517 = vmatpush2.msra.mxu0 0.0
        %1518 = vmatprep.subr.mxu0 0.0
        %1519 = vmatpush2.msra.mxu0 0.0
        %1520 = vmatprep.subr.mxu0 0.0
        %1521 = vmatpush2.msra.mxu0 0.0
        %1522 = vmatprep.mubr.f32.mxu0 0.0
        %1523 = vmatmul.mubr.f32.gmra.mxu0 %v1456
        %v1524 = vpop.f32.mrf.mxu0
        %v1525 = vadd.f32 0.0, %v1524
        %v1526 = vpop.f32.mrf.mxu0
        %1527 = vdwg.mxu0
        %v1529 = vsel %vm960, %v1308, 0
        %1531 = vmatprep.subr.mxu0 0.0
        %1532 = vmatpush1.msra.mxu0 0.0
        %1533 = vmatprep.subr.mxu0 0.0
        %1534 = vmatpush1.msra.mxu0 0.0
        %1535 = vmatprep.subr.mxu0 0.0
        %1536 = vmatpush1.msra.mxu0 0.0
        %1537 = vmatprep.subr.mxu0 0.0
        %1538 = vmatpush1.msra.mxu0 0.0
        %1539 = vmatprep.subr.mxu0 0.0
        %1540 = vmatpush1.msra.mxu0 0.0
        %1541 = vmatprep.subr.mxu0 0.0
        %1542 = vmatpush1.msra.mxu0 0.0
        %1543 = vmatprep.subr.mxu0 0.0
        %1544 = vmatpush1.msra.mxu0 0.0
        %1545 = vmatprep.subr.mxu0 0.0
        %1546 = vmatpush1.msra.mxu0 0.0
        %1547 = vmatprep.subr.mxu0 0.0
        %1548 = vmatpush1.msra.mxu0 0.0
        %1549 = vmatprep.subr.mxu0 0.0
        %1550 = vmatpush1.msra.mxu0 0.0
        %1551 = vmatprep.subr.mxu0 0.0
        %1552 = vmatpush1.msra.mxu0 0.0
        %1553 = vmatprep.subr.mxu0 0.0
        %1554 = vmatpush1.msra.mxu0 0.0
        %1555 = vmatprep.subr.mxu0 0.0
        %1556 = vmatpush1.msra.mxu0 0.0
        %1557 = vmatprep.subr.mxu0 0.0
        %1558 = vmatpush1.msra.mxu0 0.0
        %1559 = vmatprep.subr.mxu0 0.0
        %1560 = vmatpush1.msra.mxu0 0.0
        %1561 = vmatprep.subr.mxu0 0.0
        %1562 = vmatpush1.msra.mxu0 %v959
        %1563 = vmatprep.subr.mxu0 0.0
        %1564 = vmatpush2.msra.mxu0 0.0
        %1565 = vmatprep.subr.mxu0 0.0
        %1566 = vmatpush2.msra.mxu0 0.0
        %1567 = vmatprep.subr.mxu0 0.0
        %1568 = vmatpush2.msra.mxu0 0.0
        %1569 = vmatprep.subr.mxu0 0.0
        %1570 = vmatpush2.msra.mxu0 0.0
        %1571 = vmatprep.subr.mxu0 0.0
        %1572 = vmatpush2.msra.mxu0 0.0
        %1573 = vmatprep.subr.mxu0 0.0
        %1574 = vmatpush2.msra.mxu0 0.0
        %1575 = vmatprep.subr.mxu0 0.0
        %1576 = vmatpush2.msra.mxu0 0.0
        %1577 = vmatprep.subr.mxu0 0.0
        %1578 = vmatpush2.msra.mxu0 0.0
        %1579 = vmatprep.subr.mxu0 0.0
        %1580 = vmatpush2.msra.mxu0 0.0
        %1581 = vmatprep.subr.mxu0 0.0
        %1582 = vmatpush2.msra.mxu0 0.0
        %1583 = vmatprep.subr.mxu0 0.0
        %1584 = vmatpush2.msra.mxu0 0.0
        %1585 = vmatprep.subr.mxu0 0.0
        %1586 = vmatpush2.msra.mxu0 0.0
        %1587 = vmatprep.subr.mxu0 0.0
        %1588 = vmatpush2.msra.mxu0 0.0
        %1589 = vmatprep.subr.mxu0 0.0
        %1590 = vmatpush2.msra.mxu0 0.0
        %1591 = vmatprep.subr.mxu0 0.0
        %1592 = vmatpush2.msra.mxu0 0.0
        %1593 = vmatprep.subr.mxu0 0.0
        %1594 = vmatpush2.msra.mxu0 0.0
        %1595 = vmatprep.mubr.f32.mxu0 0.0
        %1596 = vmatmul.mubr.f32.gmra.mxu0 %v1529
        %v1597 = vpop.f32.mrf.mxu0
        %v1598 = vadd.f32 0.0, %v1597
        %v1599 = vpop.f32.mrf.mxu0
        %1600 = vdwg.mxu0
        %v1601 = vcombine.low %v1379, %v1525
        %v1602 = vcombine.high %v1379, %v1525
        %v1604 = vunpack.c.l.s4 1983009808
        %v1605 = vunpack.c.0.s8 %v1604
        %v1606 = vlaneseq
        %v1607 = vshrl.u32 %v1606, 7
        %v1608 = vsub.s32 %v1605, %v1607
        %v1609 = vrot.slane %v1601, %v1608
        %v1611 = vunpack.c.l.s4 1983009808
        %v1612 = vunpack.c.0.s8 %v1611
        %v1613 = vlaneseq
        %v1614 = vshrl.u32 %v1613, 7
        %v1615 = vsub.s32 %v1612, %v1614
        %v1616 = vrot.slane %v1602, %v1615
        %v1617 = vcombine.low %v1452, %v1598
        %v1618 = vcombine.high %v1452, %v1598
        %v1620 = vunpack.c.l.s4 1983009808
        %v1621 = vunpack.c.0.s8 %v1620
        %v1622 = vlaneseq
        %v1623 = vshrl.u32 %v1622, 7
        %v1624 = vsub.s32 %v1621, %v1623
        %v1625 = vrot.slane %v1617, %v1624
        %v1627 = vunpack.c.l.s4 1983009808
        %v1628 = vunpack.c.0.s8 %v1627
        %v1629 = vlaneseq
        %v1630 = vshrl.u32 %v1629, 7
        %v1631 = vsub.s32 %v1628, %v1630
        %v1632 = vrot.slane %v1618, %v1631
        %v1633 = vcombine.low %v1609, %v1625
        %v1634 = vcombine.high %v1609, %v1625
        %v1636 = vunpack.c.l.s4 1934713408
        %v1637 = vunpack.c.0.s8 %v1636
        %v1638 = vlaneseq
        %v1639 = vshrl.u32 %v1638, 7
        %v1640 = vsub.s32 %v1637, %v1639
        %v1641 = vrot.slane %v1633, %v1640
        %v1643 = vunpack.c.l.s4 1934713408
        %v1644 = vunpack.c.0.s8 %v1643
        %v1645 = vlaneseq
        %v1646 = vshrl.u32 %v1645, 7
        %v1647 = vsub.s32 %v1644, %v1646
        %v1648 = vrot.slane %v1634, %v1647
        %v1649 = vcombine.low %v1616, %v1632
        %v1650 = vcombine.high %v1616, %v1632
        %v1652 = vunpack.c.l.s4 1934713408
        %v1653 = vunpack.c.0.s8 %v1652
        %v1654 = vlaneseq
        %v1655 = vshrl.u32 %v1654, 7
        %v1656 = vsub.s32 %v1653, %v1655
        %v1657 = vrot.slane %v1649, %v1656
        %v1659 = vunpack.c.l.s4 1934713408
        %v1660 = vunpack.c.0.s8 %v1659
        %v1661 = vlaneseq
        %v1662 = vshrl.u32 %v1661, 7
        %v1663 = vsub.s32 %v1660, %v1662
        %v1664 = vrot.slane %v1650, %v1663
        %v1665 = vcombine.high %v1641, 0.0
        %v1666 = vcombine.high %v1648, 0.0
        %v1667 = vcombine.high %v1657, 0.0
        %v1668 = vcombine.high %v1664, 0.0
        %v1669 = vcombine.low %v1641, %v1648
        %v1671 = vunpack.c.l.s4 1983009808
        %v1672 = vunpack.c.0.s8 %v1671
        %v1673 = vlaneseq
        %v1674 = vshrl.u32 %v1673, 7
        %v1675 = vsub.s32 %v1672, %v1674
        %v1676 = vrot.slane %v1669, %v1675
        %v1677 = vcombine.low %v1665, %v1666
        %v1679 = vunpack.c.l.s4 1983009808
        %v1680 = vunpack.c.0.s8 %v1679
        %v1681 = vlaneseq
        %v1682 = vshrl.u32 %v1681, 7
        %v1683 = vsub.s32 %v1680, %v1682
        %v1684 = vrot.slane %v1677, %v1683
        %v1685 = vcombine.low %v1657, %v1664
        %v1687 = vunpack.c.l.s4 1983009808
        %v1688 = vunpack.c.0.s8 %v1687
        %v1689 = vlaneseq
        %v1690 = vshrl.u32 %v1689, 7
        %v1691 = vsub.s32 %v1688, %v1690
        %v1692 = vrot.slane %v1685, %v1691
        %v1693 = vcombine.low %v1667, %v1668
        %v1695 = vunpack.c.l.s4 1983009808
        %v1696 = vunpack.c.0.s8 %v1695
        %v1697 = vlaneseq
        %v1698 = vshrl.u32 %v1697, 7
        %v1699 = vsub.s32 %v1696, %v1698
        %v1700 = vrot.slane %v1693, %v1699
        %v1701 = vcombine.low %v1676, %v1684
        %v1702 = vcombine.high %v1676, %v1684
        %v1704 = vunpack.c.l.s4 1934713408
        %v1705 = vunpack.c.0.s8 %v1704
        %v1706 = vlaneseq
        %v1707 = vshrl.u32 %v1706, 7
        %v1708 = vsub.s32 %v1705, %v1707
        %v1709 = vrot.slane %v1701, %v1708
        %v1711 = vunpack.c.l.s4 1934713408
        %v1712 = vunpack.c.0.s8 %v1711
        %v1713 = vlaneseq
        %v1714 = vshrl.u32 %v1713, 7
        %v1715 = vsub.s32 %v1712, %v1714
        %v1716 = vrot.slane %v1702, %v1715
        %v1717 = vcombine.low %v1692, %v1700
        %v1718 = vcombine.high %v1692, %v1700
        %v1720 = vunpack.c.l.s4 1934713408
        %v1721 = vunpack.c.0.s8 %v1720
        %v1722 = vlaneseq
        %v1723 = vshrl.u32 %v1722, 7
        %v1724 = vsub.s32 %v1721, %v1723
        %v1725 = vrot.slane %v1717, %v1724
        %v1727 = vunpack.c.l.s4 1934713408
        %v1728 = vunpack.c.0.s8 %v1727
        %v1729 = vlaneseq
        %v1730 = vshrl.u32 %v1729, 7
        %v1731 = vsub.s32 %v1728, %v1730
        %v1732 = vrot.slane %v1718, %v1731
        %v1733 = vcombine.low %v1709, %v1725
        %v1734 = vcombine.high %v1709, %v1725
        %v1735 = vcombine.low %v1716, %v1732
        %v1736 = vcombine.high %v1716, %v1732
        %1738 = vrot.lane.b32.xlu0 %v1734, 8
        %v1739 = vpop.permute.xlu0 %1738
        %1742 = vrot.lane.b32.xlu0 %v1735, 16
        %v1743 = vpop.permute.xlu0 %1742
        %1746 = vrot.lane.b32.xlu0 %v1736, 24
        %v1747 = vpop.permute.xlu0 %1746
        %v1749 = vsel %vm960, %v1733, %v1739
        %vm1750 = vcmask 130048
        %v1751 = vsel %vm1750, %v1749, %v1743
        %vm1752 = vcmask 195584
        %v1753 = vsel %vm1752, %v1751, %v1747
        %v1754 = vld [vmem:[%s6] sm:$0x1]
        %v1756 = vlaneseq
        %v1757 = vshrl.u32 %v1756, 7
        %v1758 = vsub.s32 0, %v1757
        %v1759 = vrot.slane %v1754, %v1758
        %v1761 = vadd.f32 %v402, %v1759
        %v1762 = vld [vmem:[%s5] sm:$0xff]
        %v1763 = vld [vmem:[%s5 + $0x8] sm:$0xff]
        %v1764 = vld [vmem:[%s5 + $0x10] sm:$0xff]
        %v1765 = vld [vmem:[%s5 + $0x18] sm:$0xff]
        %v1767 = vsel %vm403, %v1753, 0
        %1769 = vmatprep.subr.mxu0 0.0
        %1770 = vmatpush1.msra.mxu0 0.0
        %1771 = vmatprep.subr.mxu0 0.0
        %1772 = vmatpush1.msra.mxu0 0.0
        %1773 = vmatprep.subr.mxu0 0.0
        %1774 = vmatpush1.msra.mxu0 0.0
        %1775 = vmatprep.subr.mxu0 0.0
        %1776 = vmatpush1.msra.mxu0 0.0
        %1777 = vmatprep.subr.mxu0 0.0
        %1778 = vmatpush1.msra.mxu0 0.0
        %1779 = vmatprep.subr.mxu0 0.0
        %1780 = vmatpush1.msra.mxu0 0.0
        %1781 = vmatprep.subr.mxu0 0.0
        %1782 = vmatpush1.msra.mxu0 0.0
        %1783 = vmatprep.subr.mxu0 0.0
        %1784 = vmatpush1.msra.mxu0 0.0
        %1785 = vmatprep.subr.mxu0 0.0
        %1786 = vmatpush1.msra.mxu0 0.0
        %1787 = vmatprep.subr.mxu0 0.0
        %1788 = vmatpush1.msra.mxu0 0.0
        %1789 = vmatprep.subr.mxu0 0.0
        %1790 = vmatpush1.msra.mxu0 0.0
        %1791 = vmatprep.subr.mxu0 0.0
        %1792 = vmatpush1.msra.mxu0 0.0
        %1793 = vmatprep.subr.mxu0 0.0
        %1794 = vmatpush1.msra.mxu0 %v1765
        %1795 = vmatprep.subr.mxu0 0.0
        %1796 = vmatpush1.msra.mxu0 %v1764
        %1797 = vmatprep.subr.mxu0 0.0
        %1798 = vmatpush1.msra.mxu0 %v1763
        %1799 = vmatprep.subr.mxu0 0.0
        %1800 = vmatpush1.msra.mxu0 %v1762
        %1801 = vmatprep.subr.mxu0 0.0
        %1802 = vmatpush2.msra.mxu0 0.0
        %1803 = vmatprep.subr.mxu0 0.0
        %1804 = vmatpush2.msra.mxu0 0.0
        %1805 = vmatprep.subr.mxu0 0.0
        %1806 = vmatpush2.msra.mxu0 0.0
        %1807 = vmatprep.subr.mxu0 0.0
        %1808 = vmatpush2.msra.mxu0 0.0
        %1809 = vmatprep.subr.mxu0 0.0
        %1810 = vmatpush2.msra.mxu0 0.0
        %1811 = vmatprep.subr.mxu0 0.0
        %1812 = vmatpush2.msra.mxu0 0.0
        %1813 = vmatprep.subr.mxu0 0.0
        %1814 = vmatpush2.msra.mxu0 0.0
        %1815 = vmatprep.subr.mxu0 0.0
        %1816 = vmatpush2.msra.mxu0 0.0
        %1817 = vmatprep.subr.mxu0 0.0
        %1818 = vmatpush2.msra.mxu0 0.0
        %1819 = vmatprep.subr.mxu0 0.0
        %1820 = vmatpush2.msra.mxu0 0.0
        %1821 = vmatprep.subr.mxu0 0.0
        %1822 = vmatpush2.msra.mxu0 0.0
        %1823 = vmatprep.subr.mxu0 0.0
        %1824 = vmatpush2.msra.mxu0 0.0
        %1825 = vmatprep.subr.mxu0 0.0
        %1826 = vmatpush2.msra.mxu0 0.0
        %1827 = vmatprep.subr.mxu0 0.0
        %1828 = vmatpush2.msra.mxu0 0.0
        %1829 = vmatprep.subr.mxu0 0.0
        %1830 = vmatpush2.msra.mxu0 0.0
        %1831 = vmatprep.subr.mxu0 0.0
        %1832 = vmatpush2.msra.mxu0 0.0
        %1833 = vmatprep.mubr.f32.mxu0 0.0
        %1834 = vmatmul.mubr.f32.gmra.mxu0 %v1767
        %v1835 = vpop.f32.mrf.mxu0
        %v1836 = vadd.f32 0.0, %v1835
        %v1837 = vpop.f32.mrf.mxu0
        %1838 = vdwg.mxu0
        %v1839 = vadd.f32 %v1761, %v1836
        %v1840 = vld [vmem:[%s10] sm:$0x1]
        %v1842 = vlaneseq
        %v1843 = vshrl.u32 %v1842, 7
        %v1844 = vsub.s32 0, %v1843
        %v1845 = vrot.slane %v1840, %v1844
        %v1847 = vadd.f32 %v1839, %v1845
        %v1848 = vld [vmem:[%s7] sm:$0xff]
        %v1849 = vld [vmem:[%s7 + $0x8] sm:$0xff]
        %v1850 = vld [vmem:[%s7 + $0x10] sm:$0xff]
        %v1851 = vld [vmem:[%s7 + $0x18] sm:$0xff]
        %v1852 = vld [vmem:[%s8] sm:$0x1]
        %v1854 = vlaneseq
        %v1855 = vshrl.u32 %v1854, 7
        %v1856 = vsub.s32 0, %v1855
        %v1857 = vrot.slane %v1852, %v1856
        %v1860 = vsel %vm403, %v1839, 0
        %1862 = vmatprep.subr.mxu0 0.0
        %1863 = vmatpush1.msra.mxu0 0.0
        %1864 = vmatprep.subr.mxu0 0.0
        %1865 = vmatpush1.msra.mxu0 0.0
        %1866 = vmatprep.subr.mxu0 0.0
        %1867 = vmatpush1.msra.mxu0 0.0
        %1868 = vmatprep.subr.mxu0 0.0
        %1869 = vmatpush1.msra.mxu0 0.0
        %1870 = vmatprep.subr.mxu0 0.0
        %1871 = vmatpush1.msra.mxu0 0.0
        %1872 = vmatprep.subr.mxu0 0.0
        %1873 = vmatpush1.msra.mxu0 0.0
        %1874 = vmatprep.subr.mxu0 0.0
        %1875 = vmatpush1.msra.mxu0 0.0
        %1876 = vmatprep.subr.mxu0 0.0
        %1877 = vmatpush1.msra.mxu0 0.0
        %1878 = vmatprep.subr.mxu0 0.0
        %1879 = vmatpush1.msra.mxu0 0.0
        %1880 = vmatprep.subr.mxu0 0.0
        %1881 = vmatpush1.msra.mxu0 0.0
        %1882 = vmatprep.subr.mxu0 0.0
        %1883 = vmatpush1.msra.mxu0 0.0
        %1884 = vmatprep.subr.mxu0 0.0
        %1885 = vmatpush1.msra.mxu0 0.0
        %1886 = vmatprep.subr.mxu0 0.0
        %1887 = vmatpush1.msra.mxu0 %v1851
        %1888 = vmatprep.subr.mxu0 0.0
        %1889 = vmatpush1.msra.mxu0 %v1850
        %1890 = vmatprep.subr.mxu0 0.0
        %1891 = vmatpush1.msra.mxu0 %v1849
        %1892 = vmatprep.subr.mxu0 0.0
        %1893 = vmatpush1.msra.mxu0 %v1848
        %1894 = vmatprep.subr.mxu0 0.0
        %1895 = vmatpush2.msra.mxu0 0.0
        %1896 = vmatprep.subr.mxu0 0.0
        %1897 = vmatpush2.msra.mxu0 0.0
        %1898 = vmatprep.subr.mxu0 0.0
        %1899 = vmatpush2.msra.mxu0 0.0
        %1900 = vmatprep.subr.mxu0 0.0
        %1901 = vmatpush2.msra.mxu0 0.0
        %1902 = vmatprep.subr.mxu0 0.0
        %1903 = vmatpush2.msra.mxu0 0.0
        %1904 = vmatprep.subr.mxu0 0.0
        %1905 = vmatpush2.msra.mxu0 0.0
        %1906 = vmatprep.subr.mxu0 0.0
        %1907 = vmatpush2.msra.mxu0 0.0
        %1908 = vmatprep.subr.mxu0 0.0
        %1909 = vmatpush2.msra.mxu0 0.0
        %1910 = vmatprep.subr.mxu0 0.0
        %1911 = vmatpush2.msra.mxu0 0.0
        %1912 = vmatprep.subr.mxu0 0.0
        %1913 = vmatpush2.msra.mxu0 0.0
        %1914 = vmatprep.subr.mxu0 0.0
        %1915 = vmatpush2.msra.mxu0 0.0
        %1916 = vmatprep.subr.mxu0 0.0
        %1917 = vmatpush2.msra.mxu0 0.0
        %1918 = vmatprep.subr.mxu0 0.0
        %1919 = vmatpush2.msra.mxu0 0.0
        %1920 = vmatprep.subr.mxu0 0.0
        %1921 = vmatpush2.msra.mxu0 0.0
        %1922 = vmatprep.subr.mxu0 0.0
        %1923 = vmatpush2.msra.mxu0 0.0
        %1924 = vmatprep.subr.mxu0 0.0
        %1925 = vmatpush2.msra.mxu0 0.0
        %1926 = vmatprep.mubr.f32.mxu0 0.0
        %1927 = vmatmul.mubr.f32.gmra.mxu0 %v1860
        %v1928 = vpop.f32.mrf.mxu0
        %v1929 = vadd.f32 %v1857, %v1928
        %v1930 = vpop.f32.mrf.mxu0
        %1931 = vdwg.mxu0
        %v1932 = vmax.f32 %v1929, 0.0
        %v1933 = vld [vmem:[%s9] sm:$0xff]
        %v1934 = vld [vmem:[%s9 + $0x8] sm:$0xff]
        %v1935 = vld [vmem:[%s9 + $0x10] sm:$0xff]
        %v1936 = vld [vmem:[%s9 + $0x18] sm:$0xff]
        %v1937 = vld [vmem:[%s9 + $0x20] sm:$0xff]
        %v1938 = vld [vmem:[%s9 + $0x28] sm:$0xff]
        %v1939 = vld [vmem:[%s9 + $0x30] sm:$0xff]
        %v1940 = vld [vmem:[%s9 + $0x38] sm:$0xff]
        %vm1941 = vcmask 523264
        %v1943 = vsel %vm1941, %v1932, 0
        %1945 = vmatprep.subr.mxu0 0.0
        %1946 = vmatpush1.msra.mxu0 0.0
        %1947 = vmatprep.subr.mxu0 0.0
        %1948 = vmatpush1.msra.mxu0 0.0
        %1949 = vmatprep.subr.mxu0 0.0
        %1950 = vmatpush1.msra.mxu0 0.0
        %1951 = vmatprep.subr.mxu0 0.0
        %1952 = vmatpush1.msra.mxu0 0.0
        %1953 = vmatprep.subr.mxu0 0.0
        %1954 = vmatpush1.msra.mxu0 0.0
        %1955 = vmatprep.subr.mxu0 0.0
        %1956 = vmatpush1.msra.mxu0 0.0
        %1957 = vmatprep.subr.mxu0 0.0
        %1958 = vmatpush1.msra.mxu0 0.0
        %1959 = vmatprep.subr.mxu0 0.0
        %1960 = vmatpush1.msra.mxu0 0.0
        %1961 = vmatprep.subr.mxu0 0.0
        %1962 = vmatpush1.msra.mxu0 %v1940
        %1963 = vmatprep.subr.mxu0 0.0
        %1964 = vmatpush1.msra.mxu0 %v1939
        %1965 = vmatprep.subr.mxu0 0.0
        %1966 = vmatpush1.msra.mxu0 %v1938
        %1967 = vmatprep.subr.mxu0 0.0
        %1968 = vmatpush1.msra.mxu0 %v1937
        %1969 = vmatprep.subr.mxu0 0.0
        %1970 = vmatpush1.msra.mxu0 %v1936
        %1971 = vmatprep.subr.mxu0 0.0
        %1972 = vmatpush1.msra.mxu0 %v1935
        %1973 = vmatprep.subr.mxu0 0.0
        %1974 = vmatpush1.msra.mxu0 %v1934
        %1975 = vmatprep.subr.mxu0 0.0
        %1976 = vmatpush1.msra.mxu0 %v1933
        %1977 = vmatprep.subr.mxu0 0.0
        %1978 = vmatpush2.msra.mxu0 0.0
        %1979 = vmatprep.subr.mxu0 0.0
        %1980 = vmatpush2.msra.mxu0 0.0
        %1981 = vmatprep.subr.mxu0 0.0
        %1982 = vmatpush2.msra.mxu0 0.0
        %1983 = vmatprep.subr.mxu0 0.0
        %1984 = vmatpush2.msra.mxu0 0.0
        %1985 = vmatprep.subr.mxu0 0.0
        %1986 = vmatpush2.msra.mxu0 0.0
        %1987 = vmatprep.subr.mxu0 0.0
        %1988 = vmatpush2.msra.mxu0 0.0
        %1989 = vmatprep.subr.mxu0 0.0
        %1990 = vmatpush2.msra.mxu0 0.0
        %1991 = vmatprep.subr.mxu0 0.0
        %1992 = vmatpush2.msra.mxu0 0.0
        %1993 = vmatprep.subr.mxu0 0.0
        %1994 = vmatpush2.msra.mxu0 0.0
        %1995 = vmatprep.subr.mxu0 0.0
        %1996 = vmatpush2.msra.mxu0 0.0
        %1997 = vmatprep.subr.mxu0 0.0
        %1998 = vmatpush2.msra.mxu0 0.0
        %1999 = vmatprep.subr.mxu0 0.0
        %2000 = vmatpush2.msra.mxu0 0.0
        %2001 = vmatprep.subr.mxu0 0.0
        %2002 = vmatpush2.msra.mxu0 0.0
        %2003 = vmatprep.subr.mxu0 0.0
        %2004 = vmatpush2.msra.mxu0 0.0
        %2005 = vmatprep.subr.mxu0 0.0
        %2006 = vmatpush2.msra.mxu0 0.0
        %2007 = vmatprep.subr.mxu0 0.0
        %2008 = vmatpush2.msra.mxu0 0.0
        %2009 = vmatprep.mubr.f32.mxu0 0.0
        %2010 = vmatmul.mubr.f32.gmra.mxu0 %v1943
        %v2011 = vpop.f32.mrf.mxu0
        %v2012 = vadd.f32 0.0, %v2011
        %v2013 = vpop.f32.mrf.mxu0
        %2014 = vdwg.mxu0
        %v2015 = vadd.f32 %v1847, %v2012
        %2016 = vst.msk [vmem:[%s401] sm:$0xff] %vm403, %v2015
        %s2017 = sand.u32 %s272, 1
        %s2018 = scalar_lea.sflag [#allocation4], %s2017
        %s2019 = sand.u32 %s272, 1
        %s2020 = smul.addr %s2019, 8
        %s2021 = scalar_lea.vmem [#allocation5], %s2020
        // Predicated region
        $region69: #{tpu_custom_call.1} parent=63 // pred_check
          %p2022 = pneg %p282
        $region70: #{tpu_custom_call.1} parent=63 // pred_check_branch
          %2024 = sbr.rel (%p2022) target = $region72
        $region71: #{tpu_custom_call.1} parent=63 // pred_region
          %s2026 = ssub.s32 128, 128
          %2027 = vsyncadd %s2018, %s2026
          %s2028 = smul.addr %s28, 128
          %s2029 = scalar_lea.hbm %s11, %s2028
          %s2031 = sshll.u32 %s2021, 4
          %s2032 = int_to_ptr.vmem [resolvable:$true] %s2031
          %2034 = dma.vmem_to_hbm [thread:$0]  %s2032, 128, %s2029, %s2018
        $region72: #{tpu_custom_call.1} parent=63 // pred_fallthru
          _
      $region64: #{tpu_custom_call.1} parent=5 // pred_fallthru
        _
      %p2035 = scmp.le.s32.totalorder 2, %s23
      // Predicated region
      $region73: #{tpu_custom_call.1} parent=5 // pred_check
        %p2036 = pneg %p2035
      $region74: #{tpu_custom_call.1} parent=5 // pred_check_branch
        %2038 = sbr.rel (%p2036) target = $region76
      $region75: #{tpu_custom_call.1} parent=5 // pred_region
        %s2039 = ssub.s32 %s23, 2
        // Predicated region
        $region77: #{tpu_custom_call.1} parent=75 // pred_check
          %p2040 = pneg %p288
        $region78: #{tpu_custom_call.1} parent=75 // pred_check_branch
          %2042 = sbr.rel (%p2040) target = $region80
        $region79: #{tpu_custom_call.1} parent=75 // pred_region
          %s2043 = sand.u32 %s273, 1
          %s2044 = scalar_lea.sflag [#allocation4], %s2043
          %s2045 = sand.u32 %s273, 1
          %s2046 = smul.addr %s2045, 8
          %s2047 = scalar_lea.vmem [#allocation5], %s2046
          %2048 = dma.done %s2044, 128
        $region80: #{tpu_custom_call.1} parent=75 // pred_fallthru
          _
      $region76: #{tpu_custom_call.1} parent=5 // pred_fallthru
        _
    $region6: #{tpu_custom_call.1} parent=1 // loop_footer
      %s27 = sadd.s32 1, %s23
    $region7: #{tpu_custom_call.1} parent=1 // loop_footer_branch
      %22 = sbr.rel target = $region3
    $region8: #{tpu_custom_call.1} parent=1 // loop_exit
      _
    %2049 = vsyncpa [#allocation3], 1
    %s2050 = scalar_lea.sflag [#allocation3], 1
    %2051 = vsyncpa %s2050, 1
    %2052 = vsyncpa [#allocation4], 1
    %s2053 = scalar_lea.sflag [#allocation4], 1
    %2054 = vsyncpa %s2053, 1

</llo_original>
